<compile_context>
chip_gen: v6e
topology: v6e:2x2x1
jax: 0.10.0
libtpu: 0.0.40
codegen_flags: <defaults>
</compile_context>

<pallas_src>
import numpy as np
import jax
import jax.numpy as jnp
from jax import lax
from jax.experimental import pallas as pl
from jax.experimental.pallas import tpu as pltpu


def mnist_kernel(x_ref, t1e_ref, t1o_ref, b1_ref, t2e_ref, t2o_ref, b2_ref,
                 wf_ref, bf_ref, wc_ref, bc_ref, out_ref):
    x = x_ref[...]                                   # (Bb, 28, 28) f32, W on lanes
    Bb = x.shape[0]

    def banded(slices, t_ref):
        # sum_ki slices[ki] @ T_ki  (each an MXU matmul; f32 accumulation on VPU)
        acc = jnp.dot(slices[0], t_ref[0], preferred_element_type=jnp.float32)
        for ki in range(1, 5):
            acc = acc + jnp.dot(slices[ki], t_ref[ki],
                                preferred_element_type=jnp.float32)
        return acc

    # ---- conv1 (1 -> 10, k=5, valid) as 5 banded matmuls, even/odd output cols ----
    xs = [x[:, ki:ki + 24, :].reshape(Bb * 24, 28) for ki in range(5)]
    a1e = banded(xs, t1e_ref)                        # (Bb*24, 120)  cols wo=0,2,..,22
    a1o = banded(xs, t1o_ref)                        # (Bb*24, 120)  cols wo=1,3,..,23
    wp1 = jnp.maximum(a1e, a1o)                      # 2x W-pool: pure VPU max
    wp1 = wp1.reshape(Bb, 12, 2, 120)                # pair consecutive output rows
    hp1 = jnp.maximum(wp1[:, :, 0], wp1[:, :, 1])    # 2x H-pool -> (Bb, 12, 120)
    h1 = jnp.maximum(hp1 + b1_ref[...], 0.0)         # bias + relu (commute with max)

    # ---- conv2 (10 -> 20, k=5, valid) on the (w,c)-packed lanes, same trick ----
    hs = [h1[:, ki:ki + 8, :].reshape(Bb * 8, 120) for ki in range(5)]
    a2e = banded(hs, t2e_ref)                        # (Bb*8, 80)   cols wo=0,2,4,6
    a2o = banded(hs, t2o_ref)                        # (Bb*8, 80)   cols wo=1,3,5,7
    wp2 = jnp.maximum(a2e, a2o)
    wp2 = wp2.reshape(Bb, 4, 2, 80)
    hp2 = jnp.maximum(wp2[:, :, 0], wp2[:, :, 1])    # (Bb, 4, 80)
    h2 = jnp.maximum(hp2 + b2_ref[...], 0.0)

    # ---- fc1: (Bb, 320) @ (320, 50), relu ----
    hidden = jnp.dot(h2.reshape(Bb, 320), wf_ref[...],
                     preferred_element_type=jnp.float32) + bf_ref[...]
    hidden = jnp.maximum(hidden, 0.0)

    # ---- classifier + log_softmax over the lane-padded class dim ----
    logits = jnp.dot(hidden, wc_ref[...],
                     preferred_element_type=jnp.float32) + bc_ref[...]
    m = jnp.max(logits, axis=-1, keepdims=True)
    s = logits - m
    lse = jnp.log(jnp.sum(jnp.exp(s), axis=-1, keepdims=True))
    out_ref[...] = s - lse


def _toeplitz_selector(w_in, w_out, k):
    """S[wi, wo, kj] = 1 iff wi == wo + kj (valid conv band)."""
    s = np.zeros((w_in, w_out, k), np.float32)
    for wo in range(w_out):
        for kj in range(k):
            s[wo + kj, wo, kj] = 1.0
    return jnp.asarray(s)


def mnist_net_pallas(x_nchw, params, block_b=None):
    (cw1, cb1, cw2, cb2, fw1, fb1, clw, clb) = params
    B = x_nchw.shape[0]
    num_classes = clw.shape[0]
    c_pad = ((num_classes + 127) // 128) * 128       # lane-dense output width

    # ---- trace-time weight preprocessing (glue only, tiny tensors) ----
    # Input: squeeze the C=1 channel so W=28 lands on lanes.
    x2d = x_nchw[:, 0, :, :].astype(jnp.float32)                         # (B, 28, 28)

    # conv1 Toeplitz-banded weights, split into even/odd output columns.
    s1 = _toeplitz_selector(28, 24, 5)                                   # (28, 24, 5)
    w1k = jnp.transpose(cw1[:, 0, :, :], (1, 2, 0))                      # (ki, kj, co)
    t1 = jnp.einsum('wok,qkc->qwoc', s1, w1k)                            # (5, 28, 24, 10)
    t1e = t1[:, :, 0::2, :].reshape(5, 28, 120)
    t1o = t1[:, :, 1::2, :].reshape(5, 28, 120)

    # conv2 Toeplitz-banded weights on the (w, c)-packed lane layout.
    s2 = _toeplitz_selector(12, 8, 5)                                    # (12, 8, 5)
    w2k = jnp.transpose(cw2, (2, 3, 1, 0))                               # (ki, kj, ci, co)
    t2 = jnp.einsum('wok,qkic->qwioc', s2, w2k)                          # (5, 12, 10, 8, 20)
    t2e = t2[:, :, :, 0::2, :].reshape(5, 120, 80)
    t2o = t2[:, :, :, 1::2, :].reshape(5, 120, 80)

    # Biases tiled to the packed (w, c) lane layout.
    b1 = jnp.tile(cb1, 12).reshape(1, 120)
    b2 = jnp.tile(cb2, 4).reshape(1, 80)

    # fc1: PyTorch flattens (C,H,W); kernel flattens (h, w, c) -> permute rows.
    wf = jnp.transpose(fw1.reshape(50, 20, 4, 4), (2, 3, 1, 0)).reshape(320, 50)
    bf = fb1.reshape(1, 50)

    # classifier, lane-padded; padded class lanes get -1e30 bias (masked for softmax).
    wc = jnp.zeros((50, c_pad), jnp.float32).at[:, :num_classes].set(clw.T)
    bc = jnp.full((1, c_pad), -1e30, jnp.float32).at[0, :num_classes].set(clb)

    # ---- batch tiling ----
    # 32 comfortably fits every generation after the layout fixes (per-block live set
    # is ~2-3 MB).  On v5e/v6e you may raise to 64; on v7x keep >=2 grid steps so the
    # "parallel" batch axis feeds both TensorCores.
    if block_b is None:
        block_b = min(B, 32)
    nb = pl.cdiv(B, block_b)
    bp = nb * block_b
    if bp != B:
        x2d = jnp.pad(x2d, ((0, bp - B), (0, 0), (0, 0)))

    def const_spec(a):
        # Full-array block, constant block index -> stays VMEM-resident, no re-DMA.
        return pl.BlockSpec(a.shape, lambda i, _nd=a.ndim: (0,) * _nd)

    out = pl.pallas_call(
        mnist_kernel,
        out_shape=jax.ShapeDtypeStruct((bp, c_pad), jnp.float32),
        grid=(nb,),
        in_specs=[
            pl.BlockSpec((block_b, 28, 28), lambda i: (i, 0, 0)),
            const_spec(t1e), const_spec(t1o), const_spec(b1),
            const_spec(t2e), const_spec(t2o), const_spec(b2),
            const_spec(wf), const_spec(bf),
            const_spec(wc), const_spec(bc),
        ],
        out_specs=pl.BlockSpec((block_b, c_pad), lambda i: (i, 0)),
        compiler_params=pltpu.CompilerParams(
            dimension_semantics=("parallel",),
            vmem_limit_bytes=40 * 1024 * 1024,
        ),
    )(x2d, t1e, t1o, b1, t2e, t2o, b2, wf, bf, wc, bc)
    return out[:B, :num_classes]


def reference_forward(x, params):
    """Pure-JAX replica of the PyTorch forward (NCHW), for verification."""
    cw1, cb1, cw2, cb2, fw1, fb1, clw, clb = params
    dn = ('NCHW', 'OIHW', 'NCHW')
    y = lax.conv_general_dilated(x, cw1, (1, 1), 'VALID', dimension_numbers=dn)
    y = y + cb1[None, :, None, None]
    y = lax.reduce_window(y, -jnp.inf, lax.max, (1, 1, 2, 2), (1, 1, 2, 2), 'VALID')
    y = jnp.maximum(y, 0.0)
    y = lax.conv_general_dilated(y, cw2, (1, 1), 'VALID', dimension_numbers=dn)
    y = y + cb2[None, :, None, None]
    y = lax.reduce_window(y, -jnp.inf, lax.max, (1, 1, 2, 2), (1, 1, 2, 2), 'VALID')
    y = jnp.maximum(y, 0.0)
    y = y.reshape(-1, 320)
    y = jnp.maximum(y @ fw1.T + fb1, 0.0)
    y = y @ clw.T + clb
    return jax.nn.log_softmax(y, axis=-1)


if __name__ == "__main__":
    key = jax.random.PRNGKey(0)
    num_classes = 10
    B = 2
    ks = jax.random.split(key, 9)

    def u(k, shape, fan_in):
        bound = 1.0 / (fan_in ** 0.5)
        return jax.random.uniform(k, shape, jnp.float32, -bound, bound)

    # Parameter shapes from MnistNet.__init__ (PyTorch conventions), deterministic init.
    cw1 = u(ks[0], (10, 1, 5, 5), 25)        # conv1.weight
    cb1 = u(ks[1], (10,), 25)                # conv1.bias
    cw2 = u(ks[2], (20, 10, 5, 5), 250)      # conv2.weight
    cb2 = u(ks[3], (20,), 250)               # conv2.bias
    fw1 = u(ks[4], (50, 320), 320)           # fc1.weight
    fb1 = u(ks[5], (50,), 320)               # fc1.bias
    clw = u(ks[6], (num_classes, 50), 50)    # classifier.weight
    clb = u(ks[7], (num_classes,), 50)       # classifier.bias
    params = (cw1, cb1, cw2, cb2, fw1, fb1, clw, clb)

    # MNIST input: (B, 1, 28, 28) NCHW, as the 320-wide flatten implies.
    x = jax.random.normal(ks[8], (B, 1, 28, 28), jnp.float32)

    out = mnist_net_pallas(x, params)
    out = jax.block_until_ready(out)

    ref = reference_forward(x, params)
    assert out.shape == (B, num_classes)
    if not bool(jnp.allclose(out, ref, atol=2e-3, rtol=2e-3)):
        raise AssertionError("Pallas kernel output does not match JAX reference")
    print("KERNEL_OK")
</pallas_src>

<mosaic_0001>
module attributes {stable_mosaic.version = 11 : i64} {
  func.func @mnist_kernel(%arg0: i32, %arg1: memref<2x28x28xf32, #tpu.memory_space<vmem>>, %arg2: memref<5x28x120xf32, #tpu.memory_space<vmem>>, %arg3: memref<5x28x120xf32, #tpu.memory_space<vmem>>, %arg4: memref<1x120xf32, #tpu.memory_space<vmem>>, %arg5: memref<5x120x80xf32, #tpu.memory_space<vmem>>, %arg6: memref<5x120x80xf32, #tpu.memory_space<vmem>>, %arg7: memref<1x80xf32, #tpu.memory_space<vmem>>, %arg8: memref<320x50xf32, #tpu.memory_space<vmem>>, %arg9: memref<1x50xf32, #tpu.memory_space<vmem>>, %arg10: memref<50x128xf32, #tpu.memory_space<vmem>>, %arg11: memref<1x128xf32, #tpu.memory_space<vmem>>, %arg12: memref<2x128xf32, #tpu.memory_space<vmem>>) attributes {dimension_semantics = [#tpu.dimension_semantics<parallel>], iteration_bounds = array<i64: 1>, scalar_prefetch = 0 : i64, scratch_operands = 0 : i64, tpu.core_type = #tpu.core_type<tc>, window_params = [{transform_indices = @transform_0, window_bounds = array<i64: 2, 28, 28>}, {pipeline_mode = #tpu.pipeline_mode<synchronous>, transform_indices = @transform_1, window_bounds = array<i64: 5, 28, 120>}, {pipeline_mode = #tpu.pipeline_mode<synchronous>, transform_indices = @transform_2, window_bounds = array<i64: 5, 28, 120>}, {pipeline_mode = #tpu.pipeline_mode<synchronous>, transform_indices = @transform_3, window_bounds = array<i64: 1, 120>}, {pipeline_mode = #tpu.pipeline_mode<synchronous>, transform_indices = @transform_4, window_bounds = array<i64: 5, 120, 80>}, {pipeline_mode = #tpu.pipeline_mode<synchronous>, transform_indices = @transform_5, window_bounds = array<i64: 5, 120, 80>}, {pipeline_mode = #tpu.pipeline_mode<synchronous>, transform_indices = @transform_6, window_bounds = array<i64: 1, 80>}, {pipeline_mode = #tpu.pipeline_mode<synchronous>, transform_indices = @transform_7, window_bounds = array<i64: 320, 50>}, {pipeline_mode = #tpu.pipeline_mode<synchronous>, transform_indices = @transform_8, window_bounds = array<i64: 1, 50>}, {pipeline_mode = #tpu.pipeline_mode<synchronous>, transform_indices = @transform_9, window_bounds = array<i64: 50, 128>}, {pipeline_mode = #tpu.pipeline_mode<synchronous>, transform_indices = @transform_10, window_bounds = array<i64: 1, 128>}, {transform_indices = @transform_11, window_bounds = array<i64: 2, 128>}]} {
    %c0 = arith.constant 0 : index
    %c0_0 = arith.constant 0 : index
    %c0_1 = arith.constant 0 : index
    %0 = vector.load %arg1[%c0, %c0_0, %c0_1] : memref<2x28x28xf32, #tpu.memory_space<vmem>>, vector<2x28x28xf32>
    %1 = vector.extract_strided_slice %0 {offsets = [0, 0, 0], sizes = [2, 24, 28], strides = [1, 1, 1]} : vector<2x28x28xf32> to vector<2x24x28xf32>
    %2 = vector.shape_cast %1 : vector<2x24x28xf32> to vector<48x28xf32>
    %3 = vector.extract_strided_slice %0 {offsets = [0, 1, 0], sizes = [2, 24, 28], strides = [1, 1, 1]} : vector<2x28x28xf32> to vector<2x24x28xf32>
    %4 = vector.shape_cast %3 : vector<2x24x28xf32> to vector<48x28xf32>
    %5 = vector.extract_strided_slice %0 {offsets = [0, 2, 0], sizes = [2, 24, 28], strides = [1, 1, 1]} : vector<2x28x28xf32> to vector<2x24x28xf32>
    %6 = vector.shape_cast %5 : vector<2x24x28xf32> to vector<48x28xf32>
    %7 = vector.extract_strided_slice %0 {offsets = [0, 3, 0], sizes = [2, 24, 28], strides = [1, 1, 1]} : vector<2x28x28xf32> to vector<2x24x28xf32>
    %8 = vector.shape_cast %7 : vector<2x24x28xf32> to vector<48x28xf32>
    %9 = vector.extract_strided_slice %0 {offsets = [0, 4, 0], sizes = [2, 24, 28], strides = [1, 1, 1]} : vector<2x28x28xf32> to vector<2x24x28xf32>
    %10 = vector.shape_cast %9 : vector<2x24x28xf32> to vector<48x28xf32>
    %c0_2 = arith.constant 0 : index
    %c0_3 = arith.constant 0 : index
    %c0_4 = arith.constant 0 : index
    %11 = vector.load %arg2[%c0_2, %c0_3, %c0_4] : memref<5x28x120xf32, #tpu.memory_space<vmem>>, vector<1x28x120xf32>
    %12 = vector.shape_cast %11 : vector<1x28x120xf32> to vector<28x120xf32>
    %cst = arith.constant dense<0.000000e+00> : vector<48x120xf32>
    %13 = tpu.matmul %2, %12, %cst {dimension_numbers = #tpu.dot_dimension_numbers<[1], [0], [0], [1], [0, 0, 1, 1], [], []>} : vector<48x28xf32>, vector<28x120xf32>, vector<48x120xf32> -> vector<48x120xf32>
    %c1 = arith.constant 1 : index
    %c0_5 = arith.constant 0 : index
    %c0_6 = arith.constant 0 : index
    %14 = vector.load %arg2[%c1, %c0_5, %c0_6] : memref<5x28x120xf32, #tpu.memory_space<vmem>>, vector<1x28x120xf32>
    %15 = vector.shape_cast %14 : vector<1x28x120xf32> to vector<28x120xf32>
    %cst_7 = arith.constant dense<0.000000e+00> : vector<48x120xf32>
    %16 = tpu.matmul %4, %15, %cst_7 {dimension_numbers = #tpu.dot_dimension_numbers<[1], [0], [0], [1], [0, 0, 1, 1], [], []>} : vector<48x28xf32>, vector<28x120xf32>, vector<48x120xf32> -> vector<48x120xf32>
    %17 = arith.addf %13, %16 : vector<48x120xf32>
    %c2 = arith.constant 2 : index
    %c0_8 = arith.constant 0 : index
    %c0_9 = arith.constant 0 : index
    %18 = vector.load %arg2[%c2, %c0_8, %c0_9] : memref<5x28x120xf32, #tpu.memory_space<vmem>>, vector<1x28x120xf32>
    %19 = vector.shape_cast %18 : vector<1x28x120xf32> to vector<28x120xf32>
    %cst_10 = arith.constant dense<0.000000e+00> : vector<48x120xf32>
    %20 = tpu.matmul %6, %19, %cst_10 {dimension_numbers = #tpu.dot_dimension_numbers<[1], [0], [0], [1], [0, 0, 1, 1], [], []>} : vector<48x28xf32>, vector<28x120xf32>, vector<48x120xf32> -> vector<48x120xf32>
    %21 = arith.addf %17, %20 : vector<48x120xf32>
    %c3 = arith.constant 3 : index
    %c0_11 = arith.constant 0 : index
    %c0_12 = arith.constant 0 : index
    %22 = vector.load %arg2[%c3, %c0_11, %c0_12] : memref<5x28x120xf32, #tpu.memory_space<vmem>>, vector<1x28x120xf32>
    %23 = vector.shape_cast %22 : vector<1x28x120xf32> to vector<28x120xf32>
    %cst_13 = arith.constant dense<0.000000e+00> : vector<48x120xf32>
    %24 = tpu.matmul %8, %23, %cst_13 {dimension_numbers = #tpu.dot_dimension_numbers<[1], [0], [0], [1], [0, 0, 1, 1], [], []>} : vector<48x28xf32>, vector<28x120xf32>, vector<48x120xf32> -> vector<48x120xf32>
    %25 = arith.addf %21, %24 : vector<48x120xf32>
    %c4 = arith.constant 4 : index
    %c0_14 = arith.constant 0 : index
    %c0_15 = arith.constant 0 : index
    %26 = vector.load %arg2[%c4, %c0_14, %c0_15] : memref<5x28x120xf32, #tpu.memory_space<vmem>>, vector<1x28x120xf32>
    %27 = vector.shape_cast %26 : vector<1x28x120xf32> to vector<28x120xf32>
    %cst_16 = arith.constant dense<0.000000e+00> : vector<48x120xf32>
    %28 = tpu.matmul %10, %27, %cst_16 {dimension_numbers = #tpu.dot_dimension_numbers<[1], [0], [0], [1], [0, 0, 1, 1], [], []>} : vector<48x28xf32>, vector<28x120xf32>, vector<48x120xf32> -> vector<48x120xf32>
    %29 = arith.addf %25, %28 : vector<48x120xf32>
    %c0_17 = arith.constant 0 : index
    %c0_18 = arith.constant 0 : index
    %c0_19 = arith.constant 0 : index
    %30 = vector.load %arg3[%c0_17, %c0_18, %c0_19] : memref<5x28x120xf32, #tpu.memory_space<vmem>>, vector<1x28x120xf32>
    %31 = vector.shape_cast %30 : vector<1x28x120xf32> to vector<28x120xf32>
    %cst_20 = arith.constant dense<0.000000e+00> : vector<48x120xf32>
    %32 = tpu.matmul %2, %31, %cst_20 {dimension_numbers = #tpu.dot_dimension_numbers<[1], [0], [0], [1], [0, 0, 1, 1], [], []>} : vector<48x28xf32>, vector<28x120xf32>, vector<48x120xf32> -> vector<48x120xf32>
    %c1_21 = arith.constant 1 : index
    %c0_22 = arith.constant 0 : index
    %c0_23 = arith.constant 0 : index
    %33 = vector.load %arg3[%c1_21, %c0_22, %c0_23] : memref<5x28x120xf32, #tpu.memory_space<vmem>>, vector<1x28x120xf32>
    %34 = vector.shape_cast %33 : vector<1x28x120xf32> to vector<28x120xf32>
    %cst_24 = arith.constant dense<0.000000e+00> : vector<48x120xf32>
    %35 = tpu.matmul %4, %34, %cst_24 {dimension_numbers = #tpu.dot_dimension_numbers<[1], [0], [0], [1], [0, 0, 1, 1], [], []>} : vector<48x28xf32>, vector<28x120xf32>, vector<48x120xf32> -> vector<48x120xf32>
    %36 = arith.addf %32, %35 : vector<48x120xf32>
    %c2_25 = arith.constant 2 : index
    %c0_26 = arith.constant 0 : index
    %c0_27 = arith.constant 0 : index
    %37 = vector.load %arg3[%c2_25, %c0_26, %c0_27] : memref<5x28x120xf32, #tpu.memory_space<vmem>>, vector<1x28x120xf32>
    %38 = vector.shape_cast %37 : vector<1x28x120xf32> to vector<28x120xf32>
    %cst_28 = arith.constant dense<0.000000e+00> : vector<48x120xf32>
    %39 = tpu.matmul %6, %38, %cst_28 {dimension_numbers = #tpu.dot_dimension_numbers<[1], [0], [0], [1], [0, 0, 1, 1], [], []>} : vector<48x28xf32>, vector<28x120xf32>, vector<48x120xf32> -> vector<48x120xf32>
    %40 = arith.addf %36, %39 : vector<48x120xf32>
    %c3_29 = arith.constant 3 : index
    %c0_30 = arith.constant 0 : index
    %c0_31 = arith.constant 0 : index
    %41 = vector.load %arg3[%c3_29, %c0_30, %c0_31] : memref<5x28x120xf32, #tpu.memory_space<vmem>>, vector<1x28x120xf32>
    %42 = vector.shape_cast %41 : vector<1x28x120xf32> to vector<28x120xf32>
    %cst_32 = arith.constant dense<0.000000e+00> : vector<48x120xf32>
    %43 = tpu.matmul %8, %42, %cst_32 {dimension_numbers = #tpu.dot_dimension_numbers<[1], [0], [0], [1], [0, 0, 1, 1], [], []>} : vector<48x28xf32>, vector<28x120xf32>, vector<48x120xf32> -> vector<48x120xf32>
    %44 = arith.addf %40, %43 : vector<48x120xf32>
    %c4_33 = arith.constant 4 : index
    %c0_34 = arith.constant 0 : index
    %c0_35 = arith.constant 0 : index
    %45 = vector.load %arg3[%c4_33, %c0_34, %c0_35] : memref<5x28x120xf32, #tpu.memory_space<vmem>>, vector<1x28x120xf32>
    %46 = vector.shape_cast %45 : vector<1x28x120xf32> to vector<28x120xf32>
    %cst_36 = arith.constant dense<0.000000e+00> : vector<48x120xf32>
    %47 = tpu.matmul %10, %46, %cst_36 {dimension_numbers = #tpu.dot_dimension_numbers<[1], [0], [0], [1], [0, 0, 1, 1], [], []>} : vector<48x28xf32>, vector<28x120xf32>, vector<48x120xf32> -> vector<48x120xf32>
    %48 = arith.addf %44, %47 : vector<48x120xf32>
    %49 = arith.maximumf %29, %48 : vector<48x120xf32>
    %50 = vector.shape_cast %49 : vector<48x120xf32> to vector<2x12x2x120xf32>
    %51 = vector.extract_strided_slice %50 {offsets = [0, 0, 0, 0], sizes = [2, 12, 1, 120], strides = [1, 1, 1, 1]} : vector<2x12x2x120xf32> to vector<2x12x1x120xf32>
    %52 = vector.shape_cast %51 : vector<2x12x1x120xf32> to vector<2x12x120xf32>
    %53 = vector.extract_strided_slice %50 {offsets = [0, 0, 1, 0], sizes = [2, 12, 1, 120], strides = [1, 1, 1, 1]} : vector<2x12x2x120xf32> to vector<2x12x1x120xf32>
    %54 = vector.shape_cast %53 : vector<2x12x1x120xf32> to vector<2x12x120xf32>
    %55 = arith.maximumf %52, %54 : vector<2x12x120xf32>
    %c0_37 = arith.constant 0 : index
    %c0_38 = arith.constant 0 : index
    %56 = vector.load %arg4[%c0_37, %c0_38] : memref<1x120xf32, #tpu.memory_space<vmem>>, vector<1x120xf32>
    %57 = vector.shape_cast %56 : vector<1x120xf32> to vector<1x1x120xf32>
    %58 = vector.broadcast %57 : vector<1x1x120xf32> to vector<2x12x120xf32>
    %59 = arith.addf %55, %58 : vector<2x12x120xf32>
    %cst_39 = arith.constant 0.000000e+00 : f32
    %60 = vector.broadcast %cst_39 : f32 to vector<2x12x120xf32>
    %61 = arith.maximumf %59, %60 : vector<2x12x120xf32>
    %62 = vector.extract_strided_slice %61 {offsets = [0, 0, 0], sizes = [2, 8, 120], strides = [1, 1, 1]} : vector<2x12x120xf32> to vector<2x8x120xf32>
    %63 = vector.shape_cast %62 : vector<2x8x120xf32> to vector<16x120xf32>
    %64 = vector.extract_strided_slice %61 {offsets = [0, 1, 0], sizes = [2, 8, 120], strides = [1, 1, 1]} : vector<2x12x120xf32> to vector<2x8x120xf32>
    %65 = vector.shape_cast %64 : vector<2x8x120xf32> to vector<16x120xf32>
    %66 = vector.extract_strided_slice %61 {offsets = [0, 2, 0], sizes = [2, 8, 120], strides = [1, 1, 1]} : vector<2x12x120xf32> to vector<2x8x120xf32>
    %67 = vector.shape_cast %66 : vector<2x8x120xf32> to vector<16x120xf32>
    %68 = vector.extract_strided_slice %61 {offsets = [0, 3, 0], sizes = [2, 8, 120], strides = [1, 1, 1]} : vector<2x12x120xf32> to vector<2x8x120xf32>
    %69 = vector.shape_cast %68 : vector<2x8x120xf32> to vector<16x120xf32>
    %70 = vector.extract_strided_slice %61 {offsets = [0, 4, 0], sizes = [2, 8, 120], strides = [1, 1, 1]} : vector<2x12x120xf32> to vector<2x8x120xf32>
    %71 = vector.shape_cast %70 : vector<2x8x120xf32> to vector<16x120xf32>
    %c0_40 = arith.constant 0 : index
    %c0_41 = arith.constant 0 : index
    %c0_42 = arith.constant 0 : index
    %72 = vector.load %arg5[%c0_40, %c0_41, %c0_42] : memref<5x120x80xf32, #tpu.memory_space<vmem>>, vector<1x120x80xf32>
    %73 = vector.shape_cast %72 : vector<1x120x80xf32> to vector<120x80xf32>
    %cst_43 = arith.constant dense<0.000000e+00> : vector<16x80xf32>
    %74 = tpu.matmul %63, %73, %cst_43 {dimension_numbers = #tpu.dot_dimension_numbers<[1], [0], [0], [1], [0, 0, 1, 1], [], []>} : vector<16x120xf32>, vector<120x80xf32>, vector<16x80xf32> -> vector<16x80xf32>
    %c1_44 = arith.constant 1 : index
    %c0_45 = arith.constant 0 : index
    %c0_46 = arith.constant 0 : index
    %75 = vector.load %arg5[%c1_44, %c0_45, %c0_46] : memref<5x120x80xf32, #tpu.memory_space<vmem>>, vector<1x120x80xf32>
    %76 = vector.shape_cast %75 : vector<1x120x80xf32> to vector<120x80xf32>
    %cst_47 = arith.constant dense<0.000000e+00> : vector<16x80xf32>
    %77 = tpu.matmul %65, %76, %cst_47 {dimension_numbers = #tpu.dot_dimension_numbers<[1], [0], [0], [1], [0, 0, 1, 1], [], []>} : vector<16x120xf32>, vector<120x80xf32>, vector<16x80xf32> -> vector<16x80xf32>
    %78 = arith.addf %74, %77 : vector<16x80xf32>
    %c2_48 = arith.constant 2 : index
    %c0_49 = arith.constant 0 : index
    %c0_50 = arith.constant 0 : index
    %79 = vector.load %arg5[%c2_48, %c0_49, %c0_50] : memref<5x120x80xf32, #tpu.memory_space<vmem>>, vector<1x120x80xf32>
    %80 = vector.shape_cast %79 : vector<1x120x80xf32> to vector<120x80xf32>
    %cst_51 = arith.constant dense<0.000000e+00> : vector<16x80xf32>
    %81 = tpu.matmul %67, %80, %cst_51 {dimension_numbers = #tpu.dot_dimension_numbers<[1], [0], [0], [1], [0, 0, 1, 1], [], []>} : vector<16x120xf32>, vector<120x80xf32>, vector<16x80xf32> -> vector<16x80xf32>
    %82 = arith.addf %78, %81 : vector<16x80xf32>
    %c3_52 = arith.constant 3 : index
    %c0_53 = arith.constant 0 : index
    %c0_54 = arith.constant 0 : index
    %83 = vector.load %arg5[%c3_52, %c0_53, %c0_54] : memref<5x120x80xf32, #tpu.memory_space<vmem>>, vector<1x120x80xf32>
    %84 = vector.shape_cast %83 : vector<1x120x80xf32> to vector<120x80xf32>
    %cst_55 = arith.constant dense<0.000000e+00> : vector<16x80xf32>
    %85 = tpu.matmul %69, %84, %cst_55 {dimension_numbers = #tpu.dot_dimension_numbers<[1], [0], [0], [1], [0, 0, 1, 1], [], []>} : vector<16x120xf32>, vector<120x80xf32>, vector<16x80xf32> -> vector<16x80xf32>
    %86 = arith.addf %82, %85 : vector<16x80xf32>
    %c4_56 = arith.constant 4 : index
    %c0_57 = arith.constant 0 : index
    %c0_58 = arith.constant 0 : index
    %87 = vector.load %arg5[%c4_56, %c0_57, %c0_58] : memref<5x120x80xf32, #tpu.memory_space<vmem>>, vector<1x120x80xf32>
    %88 = vector.shape_cast %87 : vector<1x120x80xf32> to vector<120x80xf32>
    %cst_59 = arith.constant dense<0.000000e+00> : vector<16x80xf32>
    %89 = tpu.matmul %71, %88, %cst_59 {dimension_numbers = #tpu.dot_dimension_numbers<[1], [0], [0], [1], [0, 0, 1, 1], [], []>} : vector<16x120xf32>, vector<120x80xf32>, vector<16x80xf32> -> vector<16x80xf32>
    %90 = arith.addf %86, %89 : vector<16x80xf32>
    %c0_60 = arith.constant 0 : index
    %c0_61 = arith.constant 0 : index
    %c0_62 = arith.constant 0 : index
    %91 = vector.load %arg6[%c0_60, %c0_61, %c0_62] : memref<5x120x80xf32, #tpu.memory_space<vmem>>, vector<1x120x80xf32>
    %92 = vector.shape_cast %91 : vector<1x120x80xf32> to vector<120x80xf32>
    %cst_63 = arith.constant dense<0.000000e+00> : vector<16x80xf32>
    %93 = tpu.matmul %63, %92, %cst_63 {dimension_numbers = #tpu.dot_dimension_numbers<[1], [0], [0], [1], [0, 0, 1, 1], [], []>} : vector<16x120xf32>, vector<120x80xf32>, vector<16x80xf32> -> vector<16x80xf32>
    %c1_64 = arith.constant 1 : index
    %c0_65 = arith.constant 0 : index
    %c0_66 = arith.constant 0 : index
    %94 = vector.load %arg6[%c1_64, %c0_65, %c0_66] : memref<5x120x80xf32, #tpu.memory_space<vmem>>, vector<1x120x80xf32>
    %95 = vector.shape_cast %94 : vector<1x120x80xf32> to vector<120x80xf32>
    %cst_67 = arith.constant dense<0.000000e+00> : vector<16x80xf32>
    %96 = tpu.matmul %65, %95, %cst_67 {dimension_numbers = #tpu.dot_dimension_numbers<[1], [0], [0], [1], [0, 0, 1, 1], [], []>} : vector<16x120xf32>, vector<120x80xf32>, vector<16x80xf32> -> vector<16x80xf32>
    %97 = arith.addf %93, %96 : vector<16x80xf32>
    %c2_68 = arith.constant 2 : index
    %c0_69 = arith.constant 0 : index
    %c0_70 = arith.constant 0 : index
    %98 = vector.load %arg6[%c2_68, %c0_69, %c0_70] : memref<5x120x80xf32, #tpu.memory_space<vmem>>, vector<1x120x80xf32>
    %99 = vector.shape_cast %98 : vector<1x120x80xf32> to vector<120x80xf32>
    %cst_71 = arith.constant dense<0.000000e+00> : vector<16x80xf32>
    %100 = tpu.matmul %67, %99, %cst_71 {dimension_numbers = #tpu.dot_dimension_numbers<[1], [0], [0], [1], [0, 0, 1, 1], [], []>} : vector<16x120xf32>, vector<120x80xf32>, vector<16x80xf32> -> vector<16x80xf32>
    %101 = arith.addf %97, %100 : vector<16x80xf32>
    %c3_72 = arith.constant 3 : index
    %c0_73 = arith.constant 0 : index
    %c0_74 = arith.constant 0 : index
    %102 = vector.load %arg6[%c3_72, %c0_73, %c0_74] : memref<5x120x80xf32, #tpu.memory_space<vmem>>, vector<1x120x80xf32>
    %103 = vector.shape_cast %102 : vector<1x120x80xf32> to vector<120x80xf32>
    %cst_75 = arith.constant dense<0.000000e+00> : vector<16x80xf32>
    %104 = tpu.matmul %69, %103, %cst_75 {dimension_numbers = #tpu.dot_dimension_numbers<[1], [0], [0], [1], [0, 0, 1, 1], [], []>} : vector<16x120xf32>, vector<120x80xf32>, vector<16x80xf32> -> vector<16x80xf32>
    %105 = arith.addf %101, %104 : vector<16x80xf32>
    %c4_76 = arith.constant 4 : index
    %c0_77 = arith.constant 0 : index
    %c0_78 = arith.constant 0 : index
    %106 = vector.load %arg6[%c4_76, %c0_77, %c0_78] : memref<5x120x80xf32, #tpu.memory_space<vmem>>, vector<1x120x80xf32>
    %107 = vector.shape_cast %106 : vector<1x120x80xf32> to vector<120x80xf32>
    %cst_79 = arith.constant dense<0.000000e+00> : vector<16x80xf32>
    %108 = tpu.matmul %71, %107, %cst_79 {dimension_numbers = #tpu.dot_dimension_numbers<[1], [0], [0], [1], [0, 0, 1, 1], [], []>} : vector<16x120xf32>, vector<120x80xf32>, vector<16x80xf32> -> vector<16x80xf32>
    %109 = arith.addf %105, %108 : vector<16x80xf32>
    %110 = arith.maximumf %90, %109 : vector<16x80xf32>
    %111 = vector.shape_cast %110 : vector<16x80xf32> to vector<2x4x2x80xf32>
    %112 = vector.extract_strided_slice %111 {offsets = [0, 0, 0, 0], sizes = [2, 4, 1, 80], strides = [1, 1, 1, 1]} : vector<2x4x2x80xf32> to vector<2x4x1x80xf32>
    %113 = vector.shape_cast %112 : vector<2x4x1x80xf32> to vector<2x4x80xf32>
    %114 = vector.extract_strided_slice %111 {offsets = [0, 0, 1, 0], sizes = [2, 4, 1, 80], strides = [1, 1, 1, 1]} : vector<2x4x2x80xf32> to vector<2x4x1x80xf32>
    %115 = vector.shape_cast %114 : vector<2x4x1x80xf32> to vector<2x4x80xf32>
    %116 = arith.maximumf %113, %115 : vector<2x4x80xf32>
    %c0_80 = arith.constant 0 : index
    %c0_81 = arith.constant 0 : index
    %117 = vector.load %arg7[%c0_80, %c0_81] : memref<1x80xf32, #tpu.memory_space<vmem>>, vector<1x80xf32>
    %118 = vector.shape_cast %117 : vector<1x80xf32> to vector<1x1x80xf32>
    %119 = vector.broadcast %118 : vector<1x1x80xf32> to vector<2x4x80xf32>
    %120 = arith.addf %116, %119 : vector<2x4x80xf32>
    %cst_82 = arith.constant 0.000000e+00 : f32
    %121 = vector.broadcast %cst_82 : f32 to vector<2x4x80xf32>
    %122 = arith.maximumf %120, %121 : vector<2x4x80xf32>
    %123 = vector.shape_cast %122 : vector<2x4x80xf32> to vector<2x320xf32>
    %c0_83 = arith.constant 0 : index
    %c0_84 = arith.constant 0 : index
    %124 = vector.load %arg8[%c0_83, %c0_84] : memref<320x50xf32, #tpu.memory_space<vmem>>, vector<320x50xf32>
    %cst_85 = arith.constant dense<0.000000e+00> : vector<2x50xf32>
    %125 = tpu.matmul %123, %124, %cst_85 {dimension_numbers = #tpu.dot_dimension_numbers<[1], [0], [0], [1], [0, 0, 1, 1], [], []>} : vector<2x320xf32>, vector<320x50xf32>, vector<2x50xf32> -> vector<2x50xf32>
    %c0_86 = arith.constant 0 : index
    %c0_87 = arith.constant 0 : index
    %126 = vector.load %arg9[%c0_86, %c0_87] : memref<1x50xf32, #tpu.memory_space<vmem>>, vector<1x50xf32>
    %127 = vector.broadcast %126 : vector<1x50xf32> to vector<2x50xf32>
    %128 = arith.addf %125, %127 : vector<2x50xf32>
    %cst_88 = arith.constant 0.000000e+00 : f32
    %129 = vector.broadcast %cst_88 : f32 to vector<2x50xf32>
    %130 = arith.maximumf %128, %129 : vector<2x50xf32>
    %c0_89 = arith.constant 0 : index
    %c0_90 = arith.constant 0 : index
    %131 = vector.load %arg10[%c0_89, %c0_90] : memref<50x128xf32, #tpu.memory_space<vmem>>, vector<50x128xf32>
    %cst_91 = arith.constant dense<0.000000e+00> : vector<2x128xf32>
    %132 = tpu.matmul %130, %131, %cst_91 {dimension_numbers = #tpu.dot_dimension_numbers<[1], [0], [0], [1], [0, 0, 1, 1], [], []>} : vector<2x50xf32>, vector<50x128xf32>, vector<2x128xf32> -> vector<2x128xf32>
    %c0_92 = arith.constant 0 : index
    %c0_93 = arith.constant 0 : index
    %133 = vector.load %arg11[%c0_92, %c0_93] : memref<1x128xf32, #tpu.memory_space<vmem>>, vector<1x128xf32>
    %134 = vector.broadcast %133 : vector<1x128xf32> to vector<2x128xf32>
    %135 = arith.addf %132, %134 : vector<2x128xf32>
    %cst_94 = arith.constant dense<0xFF800000> : vector<2xf32>
    %136 = vector.multi_reduction <maximumf>, %135, %cst_94 [1] : vector<2x128xf32> to vector<2xf32>
    %137 = vector.shape_cast %136 : vector<2xf32> to vector<2x1xf32>
    %138 = vector.broadcast %137 : vector<2x1xf32> to vector<2x128xf32>
    %139 = arith.subf %135, %138 : vector<2x128xf32>
    %140 = math.exp %139 : vector<2x128xf32>
    %cst_95 = arith.constant dense<0.000000e+00> : vector<2xf32>
    %141 = vector.multi_reduction <add>, %140, %cst_95 [1] : vector<2x128xf32> to vector<2xf32>
    %142 = vector.shape_cast %141 : vector<2xf32> to vector<2x1xf32>
    %143 = math.log %142 : vector<2x1xf32>
    %144 = vector.broadcast %143 : vector<2x1xf32> to vector<2x128xf32>
    %145 = arith.subf %139, %144 : vector<2x128xf32>
    %c0_96 = arith.constant 0 : index
    %c0_97 = arith.constant 0 : index
    %146 = vector.load %arg12[%c0_96, %c0_97] : memref<2x128xf32, #tpu.memory_space<vmem>>, vector<2x128xf32>
    tpu.vector_store %arg12[%c0_96, %c0_97], %145 {strides = array<i32>} : memref<2x128xf32, #tpu.memory_space<vmem>>, vector<2x128xf32>,
    return
  }
  func.func @transform_0(%arg0: i32) -> (i32, i32, i32) {
    %c0_i32 = arith.constant 0 : i32
    %c0_i32_0 = arith.constant 0 : i32
    %c0_i32_1 = arith.constant 0 : i32
    return %arg0, %c0_i32, %c0_i32_0 : i32, i32, i32
  }
  func.func @transform_1(%arg0: i32) -> (i32, i32, i32) {
    %c0_i32 = arith.constant 0 : i32
    %c0_i32_0 = arith.constant 0 : i32
    %c0_i32_1 = arith.constant 0 : i32
    %c0_i32_2 = arith.constant 0 : i32
    return %c0_i32, %c0_i32_0, %c0_i32_1 : i32, i32, i32
  }
  func.func @transform_2(%arg0: i32) -> (i32, i32, i32) {
    %c0_i32 = arith.constant 0 : i32
    %c0_i32_0 = arith.constant 0 : i32
    %c0_i32_1 = arith.constant 0 : i32
    %c0_i32_2 = arith.constant 0 : i32
    return %c0_i32, %c0_i32_0, %c0_i32_1 : i32, i32, i32
  }
  func.func @transform_3(%arg0: i32) -> (i32, i32) {
    %c0_i32 = arith.constant 0 : i32
    %c0_i32_0 = arith.constant 0 : i32
    %c0_i32_1 = arith.constant 0 : i32
    return %c0_i32, %c0_i32_0 : i32, i32
  }
  func.func @transform_4(%arg0: i32) -> (i32, i32, i32) {
    %c0_i32 = arith.constant 0 : i32
    %c0_i32_0 = arith.constant 0 : i32
    %c0_i32_1 = arith.constant 0 : i32
    %c0_i32_2 = arith.constant 0 : i32
    return %c0_i32, %c0_i32_0, %c0_i32_1 : i32, i32, i32
  }
  func.func @transform_5(%arg0: i32) -> (i32, i32, i32) {
    %c0_i32 = arith.constant 0 : i32
    %c0_i32_0 = arith.constant 0 : i32
    %c0_i32_1 = arith.constant 0 : i32
    %c0_i32_2 = arith.constant 0 : i32
    return %c0_i32, %c0_i32_0, %c0_i32_1 : i32, i32, i32
  }
  func.func @transform_6(%arg0: i32) -> (i32, i32) {
    %c0_i32 = arith.constant 0 : i32
    %c0_i32_0 = arith.constant 0 : i32
    %c0_i32_1 = arith.constant 0 : i32
    return %c0_i32, %c0_i32_0 : i32, i32
  }
  func.func @transform_7(%arg0: i32) -> (i32, i32) {
    %c0_i32 = arith.constant 0 : i32
    %c0_i32_0 = arith.constant 0 : i32
    %c0_i32_1 = arith.constant 0 : i32
    return %c0_i32, %c0_i32_0 : i32, i32
  }
  func.func @transform_8(%arg0: i32) -> (i32, i32) {
    %c0_i32 = arith.constant 0 : i32
    %c0_i32_0 = arith.constant 0 : i32
    %c0_i32_1 = arith.constant 0 : i32
    return %c0_i32, %c0_i32_0 : i32, i32
  }
  func.func @transform_9(%arg0: i32) -> (i32, i32) {
    %c0_i32 = arith.constant 0 : i32
    %c0_i32_0 = arith.constant 0 : i32
    %c0_i32_1 = arith.constant 0 : i32
    return %c0_i32, %c0_i32_0 : i32, i32
  }
  func.func @transform_10(%arg0: i32) -> (i32, i32) {
    %c0_i32 = arith.constant 0 : i32
    %c0_i32_0 = arith.constant 0 : i32
    %c0_i32_1 = arith.constant 0 : i32
    return %c0_i32, %c0_i32_0 : i32, i32
  }
  func.func @transform_11(%arg0: i32) -> (i32, i32) {
    %c0_i32 = arith.constant 0 : i32
    %c0_i32_0 = arith.constant 0 : i32
    return %arg0, %c0_i32 : i32, i32
  }
}

</mosaic_0001>

<llo_original>
// kernel: tpu_custom_call.1
$region0: #{tpu_custom_call.1}
  #allocation0 [shape = 'u32[]', space=smem, size = 0x4, offset = 0x4, fixed_abs, tag = 'smem constant byte address 0x4 - core index']
  #allocation1 [shape = 'u32[144,128]{1,0:T(1,128)}', space=vmem, size = 0x12000, scoped, tag = 'internal scratch']
  %s0 = inlined_call_operand.vmem [shape: f32[2,28,28], index: 0, kind: input, shape index: {}]
  %s1 = inlined_call_operand.vmem [shape: f32[5,28,120], index: 1, kind: input, shape index: {}]
  %s2 = inlined_call_operand.vmem [shape: f32[5,28,120], index: 2, kind: input, shape index: {}]
  %s3 = inlined_call_operand.vmem [shape: f32[1,120], index: 3, kind: input, shape index: {}]
  %s4 = inlined_call_operand.vmem [shape: f32[5,120,80], index: 4, kind: input, shape index: {}]
  %s5 = inlined_call_operand.vmem [shape: f32[5,120,80], index: 5, kind: input, shape index: {}]
  %s6 = inlined_call_operand.vmem [shape: f32[1,80], index: 6, kind: input, shape index: {}]
  %s7 = inlined_call_operand.vmem [shape: f32[320,50], index: 7, kind: input, shape index: {}]
  %s8 = inlined_call_operand.vmem [shape: f32[1,50], index: 8, kind: input, shape index: {}]
  %s9 = inlined_call_operand.vmem [shape: f32[50,128], index: 9, kind: input, shape index: {}]
  %s10 = inlined_call_operand.vmem [shape: f32[1,128], index: 10, kind: input, shape index: {}]
  %s11 = inlined_call_operand.hbm [shape: f32[2,128], index: 11, kind: output, shape index: {}]
  %s12 = sld [smem:[#allocation0]]
  $region54: #{tpu_custom_call.1} parent=0
    _
  %s14 = ssub.s32 1, %s12
  %s15 = scalar_select 0, %s14, %s12
  $region1: #{tpu_custom_call.1} parent=0
    #allocation2 [shape = 'u8[1024]{0}', space=vmem, size = 0x400, scoped, tag = 'output window, operand 0, single buffered']
    #allocation3 [shape = 's32[1]{0}', space=sflag, size = 0x4, scoped, tag = 'scoped memory for tpu_custom_call.1']
    %16 = vsyncpa [#allocation3], 0
    // Predicated region
    $region2: #{tpu_custom_call.1} parent=1 // pred_check
      _
    $region3: #{tpu_custom_call.1} parent=1 // pred_check_branch
      %18 = sbr.rel (0) target = $region5
    $region4: #{tpu_custom_call.1} parent=1 // pred_region
      _
    $region5: #{tpu_custom_call.1} parent=1 // pred_fallthru
      _
    // Predicated region
    $region6: #{tpu_custom_call.1} parent=1 // pred_check
      _
    $region7: #{tpu_custom_call.1} parent=1 // pred_check_branch
      %20 = sbr.rel (0) target = $region9
    $region8: #{tpu_custom_call.1} parent=1 // pred_region
      _
    $region9: #{tpu_custom_call.1} parent=1 // pred_fallthru
      _
    // Predicated region
    $region10: #{tpu_custom_call.1} parent=1 // pred_check
      _
    $region11: #{tpu_custom_call.1} parent=1 // pred_check_branch
      %22 = sbr.rel (0) target = $region13
    $region12: #{tpu_custom_call.1} parent=1 // pred_region
      _
    $region13: #{tpu_custom_call.1} parent=1 // pred_fallthru
      _
    // Predicated region
    $region14: #{tpu_custom_call.1} parent=1 // pred_check
      _
    $region15: #{tpu_custom_call.1} parent=1 // pred_check_branch
      %24 = sbr.rel (0) target = $region17
    $region16: #{tpu_custom_call.1} parent=1 // pred_region
      _
    $region17: #{tpu_custom_call.1} parent=1 // pred_fallthru
      _
    // Predicated region
    $region18: #{tpu_custom_call.1} parent=1 // pred_check
      _
    $region19: #{tpu_custom_call.1} parent=1 // pred_check_branch
      %26 = sbr.rel (0) target = $region21
    $region20: #{tpu_custom_call.1} parent=1 // pred_region
      _
    $region21: #{tpu_custom_call.1} parent=1 // pred_fallthru
      _
    // Predicated region
    $region22: #{tpu_custom_call.1} parent=1 // pred_check
      _
    $region23: #{tpu_custom_call.1} parent=1 // pred_check_branch
      %28 = sbr.rel (0) target = $region25
    $region24: #{tpu_custom_call.1} parent=1 // pred_region
      _
    $region25: #{tpu_custom_call.1} parent=1 // pred_fallthru
      _
    // Predicated region
    $region26: #{tpu_custom_call.1} parent=1 // pred_check
      _
    $region27: #{tpu_custom_call.1} parent=1 // pred_check_branch
      %30 = sbr.rel (0) target = $region29
    $region28: #{tpu_custom_call.1} parent=1 // pred_region
      _
    $region29: #{tpu_custom_call.1} parent=1 // pred_fallthru
      _
    // Predicated region
    $region30: #{tpu_custom_call.1} parent=1 // pred_check
      _
    $region31: #{tpu_custom_call.1} parent=1 // pred_check_branch
      %32 = sbr.rel (0) target = $region33
    $region32: #{tpu_custom_call.1} parent=1 // pred_region
      _
    $region33: #{tpu_custom_call.1} parent=1 // pred_fallthru
      _
    // Predicated region
    $region34: #{tpu_custom_call.1} parent=1 // pred_check
      _
    $region35: #{tpu_custom_call.1} parent=1 // pred_check_branch
      %34 = sbr.rel (0) target = $region37
    $region36: #{tpu_custom_call.1} parent=1 // pred_region
      _
    $region37: #{tpu_custom_call.1} parent=1 // pred_fallthru
      _
    // Predicated region
    $region38: #{tpu_custom_call.1} parent=1 // pred_check
      _
    $region39: #{tpu_custom_call.1} parent=1 // pred_check_branch
      %36 = sbr.rel (0) target = $region41
    $region40: #{tpu_custom_call.1} parent=1 // pred_region
      _
    $region41: #{tpu_custom_call.1} parent=1 // pred_fallthru
      _
    // Predicated region
    $region42: #{tpu_custom_call.1} parent=1 // pred_check
      _
    $region43: #{tpu_custom_call.1} parent=1 // pred_check_branch
      %38 = sbr.rel (0) target = $region45
    $region44: #{tpu_custom_call.1} parent=1 // pred_region
      _
    $region45: #{tpu_custom_call.1} parent=1 // pred_fallthru
      _
    %v39 = vld [vmem:[%s0] sm:$0xff]
    %v40 = vld [vmem:[%s0 + $0x8] sm:$0xff]
    %v41 = vld [vmem:[%s0 + $0x10] sm:$0xff]
    %v42 = vld [vmem:[%s0 + $0x18] sm:$0xf]
    %v43 = vld [vmem:[%s0 + $0x20] sm:$0xff]
    %v44 = vld [vmem:[%s0 + $0x28] sm:$0xff]
    %v45 = vld [vmem:[%s0 + $0x30] sm:$0xff]
    %v46 = vld [vmem:[%s0 + $0x38] sm:$0xf]
    %vm55 = vcmask 1046528
    %v56 = vrot.slane %v39, 1
    %v57 = vrot.slane %v40, 1
    %v58 = vsel %vm55, %v56, %v57
    %v59 = vrot.slane %v41, 1
    %v60 = vsel %vm55, %v57, %v59
    %v61 = vrot.slane %v42, 1
    %v62 = vsel %vm55, %v59, %v61
    %v63 = vrot.slane %v43, 1
    %v64 = vrot.slane %v44, 1
    %v65 = vsel %vm55, %v63, %v64
    %v66 = vrot.slane %v45, 1
    %v67 = vsel %vm55, %v64, %v66
    %v68 = vrot.slane %v46, 1
    %v69 = vsel %vm55, %v66, %v68
    %vm70 = vcmask 1045504
    %v71 = vrot.slane %v39, 2
    %v72 = vrot.slane %v40, 2
    %v73 = vsel %vm70, %v71, %v72
    %v74 = vrot.slane %v41, 2
    %v75 = vsel %vm70, %v72, %v74
    %v76 = vrot.slane %v42, 2
    %v77 = vsel %vm70, %v74, %v76
    %v78 = vrot.slane %v43, 2
    %v79 = vrot.slane %v44, 2
    %v80 = vsel %vm70, %v78, %v79
    %v81 = vrot.slane %v45, 2
    %v82 = vsel %vm70, %v79, %v81
    %v83 = vrot.slane %v46, 2
    %v84 = vsel %vm70, %v81, %v83
    %vm85 = vcmask 1044480
    %v86 = vrot.slane %v39, 3
    %v87 = vrot.slane %v40, 3
    %v88 = vsel %vm85, %v86, %v87
    %v89 = vrot.slane %v41, 3
    %v90 = vsel %vm85, %v87, %v89
    %v91 = vrot.slane %v42, 3
    %v92 = vsel %vm85, %v89, %v91
    %v93 = vrot.slane %v43, 3
    %v94 = vrot.slane %v44, 3
    %v95 = vsel %vm85, %v93, %v94
    %v96 = vrot.slane %v45, 3
    %v97 = vsel %vm85, %v94, %v96
    %v98 = vrot.slane %v46, 3
    %v99 = vsel %vm85, %v96, %v98
    %vm100 = vcmask 1043456
    %v101 = vrot.slane %v39, 4
    %v102 = vrot.slane %v40, 4
    %v103 = vsel %vm100, %v101, %v102
    %v104 = vrot.slane %v41, 4
    %v105 = vsel %vm100, %v102, %v104
    %v106 = vrot.slane %v42, 4
    %v107 = vsel %vm100, %v104, %v106
    %v108 = vrot.slane %v43, 4
    %v109 = vrot.slane %v44, 4
    %v110 = vsel %vm100, %v108, %v109
    %v111 = vrot.slane %v45, 4
    %v112 = vsel %vm100, %v109, %v111
    %v113 = vrot.slane %v46, 4
    %v114 = vsel %vm100, %v111, %v113
    %v115 = vld [vmem:[%s1] sm:$0xff]
    %v116 = vld [vmem:[%s1 + $0x8] sm:$0xff]
    %v117 = vld [vmem:[%s1 + $0x10] sm:$0xff]
    %v118 = vld [vmem:[%s1 + $0x18] sm:$0xf]
    %s119 = scalar_lea.vmem %s1, 32
    %v120 = vld [vmem:[%s119] sm:$0xff]
    %v121 = vld [vmem:[%s119 + $0x8] sm:$0xff]
    %v122 = vld [vmem:[%s119 + $0x10] sm:$0xff]
    %v123 = vld [vmem:[%s119 + $0x18] sm:$0xf]
    %vm124 = vcmask 228352
    %v125 = vsel %vm124, %v58, 0
    %v127 = vsel %vm124, %v60, 0
    %v129 = vsel %vm124, %v62, 0
    %v131 = vsel %vm124, %v65, 0
    %v133 = vsel %vm124, %v67, 0
    %v135 = vsel %vm124, %v69, 0
    %v138 = vsel %vm100, %v123, 0
    %140 = vmatprep.subr.mxu0 0.0
    %141 = vmatpush1.msra.mxu0 0.0
    %142 = vmatprep.subr.mxu0 0.0
    %143 = vmatpush1.msra.mxu0 0.0
    %144 = vmatprep.subr.mxu0 0.0
    %145 = vmatpush1.msra.mxu0 0.0
    %146 = vmatprep.subr.mxu0 0.0
    %147 = vmatpush1.msra.mxu0 0.0
    %148 = vmatprep.subr.mxu0 0.0
    %149 = vmatpush1.msra.mxu0 0.0
    %150 = vmatprep.subr.mxu0 0.0
    %151 = vmatpush1.msra.mxu0 0.0
    %152 = vmatprep.subr.mxu0 0.0
    %153 = vmatpush1.msra.mxu0 0.0
    %154 = vmatprep.subr.mxu0 0.0
    %155 = vmatpush1.msra.mxu0 0.0
    %156 = vmatprep.subr.mxu0 0.0
    %157 = vmatpush1.msra.mxu0 0.0
    %158 = vmatprep.subr.mxu0 0.0
    %159 = vmatpush1.msra.mxu0 0.0
    %160 = vmatprep.subr.mxu0 0.0
    %161 = vmatpush1.msra.mxu0 0.0
    %162 = vmatprep.subr.mxu0 0.0
    %163 = vmatpush1.msra.mxu0 0.0
    %164 = vmatprep.subr.mxu0 0.0
    %165 = vmatpush1.msra.mxu0 %v138
    %166 = vmatprep.subr.mxu0 0.0
    %167 = vmatpush1.msra.mxu0 %v122
    %168 = vmatprep.subr.mxu0 0.0
    %169 = vmatpush1.msra.mxu0 %v121
    %170 = vmatprep.subr.mxu0 0.0
    %171 = vmatpush1.msra.mxu0 %v120
    %172 = vmatprep.subr.mxu0 0.0
    %173 = vmatpush2.msra.mxu0 0.0
    %174 = vmatprep.subr.mxu0 0.0
    %175 = vmatpush2.msra.mxu0 0.0
    %176 = vmatprep.subr.mxu0 0.0
    %177 = vmatpush2.msra.mxu0 0.0
    %178 = vmatprep.subr.mxu0 0.0
    %179 = vmatpush2.msra.mxu0 0.0
    %180 = vmatprep.subr.mxu0 0.0
    %181 = vmatpush2.msra.mxu0 0.0
    %182 = vmatprep.subr.mxu0 0.0
    %183 = vmatpush2.msra.mxu0 0.0
    %184 = vmatprep.subr.mxu0 0.0
    %185 = vmatpush2.msra.mxu0 0.0
    %186 = vmatprep.subr.mxu0 0.0
    %187 = vmatpush2.msra.mxu0 0.0
    %188 = vmatprep.subr.mxu0 0.0
    %189 = vmatpush2.msra.mxu0 0.0
    %190 = vmatprep.subr.mxu0 0.0
    %191 = vmatpush2.msra.mxu0 0.0
    %192 = vmatprep.subr.mxu0 0.0
    %193 = vmatpush2.msra.mxu0 0.0
    %194 = vmatprep.subr.mxu0 0.0
    %195 = vmatpush2.msra.mxu0 0.0
    %196 = vmatprep.subr.mxu0 0.0
    %197 = vmatpush2.msra.mxu0 0.0
    %198 = vmatprep.subr.mxu0 0.0
    %199 = vmatpush2.msra.mxu0 0.0
    %200 = vmatprep.subr.mxu0 0.0
    %201 = vmatpush2.msra.mxu0 0.0
    %202 = vmatprep.subr.mxu0 0.0
    %203 = vmatpush2.msra.mxu0 0.0
    %204 = vmatprep.mubr.f32.mxu0 0.0
    %205 = vmatmul.mubr.f32.gmra.mxu0 %v125
    %v206 = vpop.f32.mrf.mxu0
    %v207 = vadd.f32 0.0, %v206
    %v208 = vpop.f32.mrf.mxu0
    %209 = vmatprep.mubr.f32.mxu0 0.0
    %210 = vmatmul.mubr.f32.gmra.mxu0 %v127
    %v211 = vpop.f32.mrf.mxu0
    %v212 = vadd.f32 0.0, %v211
    %v213 = vpop.f32.mrf.mxu0
    %214 = vmatprep.mubr.f32.mxu0 0.0
    %215 = vmatmul.mubr.f32.gmra.mxu0 %v129
    %v216 = vpop.f32.mrf.mxu0
    %v217 = vadd.f32 0.0, %v216
    %v218 = vpop.f32.mrf.mxu0
    %219 = vmatprep.mubr.f32.mxu0 0.0
    %220 = vmatmul.mubr.f32.gmra.mxu0 %v131
    %v221 = vpop.f32.mrf.mxu0
    %v222 = vadd.f32 0.0, %v221
    %v223 = vpop.f32.mrf.mxu0
    %224 = vmatprep.mubr.f32.mxu0 0.0
    %225 = vmatmul.mubr.f32.gmra.mxu0 %v133
    %v226 = vpop.f32.mrf.mxu0
    %v227 = vadd.f32 0.0, %v226
    %v228 = vpop.f32.mrf.mxu0
    %229 = vmatprep.mubr.f32.mxu0 0.0
    %230 = vmatmul.mubr.f32.gmra.mxu0 %v135
    %v231 = vpop.f32.mrf.mxu0
    %v232 = vadd.f32 0.0, %v231
    %v233 = vpop.f32.mrf.mxu0
    %234 = vdwg.mxu0
    %v235 = vsel %vm124, %v39, 0
    %v237 = vsel %vm124, %v40, 0
    %v239 = vsel %vm124, %v41, 0
    %v241 = vsel %vm124, %v43, 0
    %v243 = vsel %vm124, %v44, 0
    %v245 = vsel %vm124, %v45, 0
    %v248 = vsel %vm100, %v118, 0
    %250 = vmatprep.subr.mxu0 0.0
    %251 = vmatpush1.msra.mxu0 0.0
    %252 = vmatprep.subr.mxu0 0.0
    %253 = vmatpush1.msra.mxu0 0.0
    %254 = vmatprep.subr.mxu0 0.0
    %255 = vmatpush1.msra.mxu0 0.0
    %256 = vmatprep.subr.mxu0 0.0
    %257 = vmatpush1.msra.mxu0 0.0
    %258 = vmatprep.subr.mxu0 0.0
    %259 = vmatpush1.msra.mxu0 0.0
    %260 = vmatprep.subr.mxu0 0.0
    %261 = vmatpush1.msra.mxu0 0.0
    %262 = vmatprep.subr.mxu0 0.0
    %263 = vmatpush1.msra.mxu0 0.0
    %264 = vmatprep.subr.mxu0 0.0
    %265 = vmatpush1.msra.mxu0 0.0
    %266 = vmatprep.subr.mxu0 0.0
    %267 = vmatpush1.msra.mxu0 0.0
    %268 = vmatprep.subr.mxu0 0.0
    %269 = vmatpush1.msra.mxu0 0.0
    %270 = vmatprep.subr.mxu0 0.0
    %271 = vmatpush1.msra.mxu0 0.0
    %272 = vmatprep.subr.mxu0 0.0
    %273 = vmatpush1.msra.mxu0 0.0
    %274 = vmatprep.subr.mxu0 0.0
    %275 = vmatpush1.msra.mxu0 %v248
    %276 = vmatprep.subr.mxu0 0.0
    %277 = vmatpush1.msra.mxu0 %v117
    %278 = vmatprep.subr.mxu0 0.0
    %279 = vmatpush1.msra.mxu0 %v116
    %280 = vmatprep.subr.mxu0 0.0
    %281 = vmatpush1.msra.mxu0 %v115
    %282 = vmatprep.subr.mxu0 0.0
    %283 = vmatpush2.msra.mxu0 0.0
    %284 = vmatprep.subr.mxu0 0.0
    %285 = vmatpush2.msra.mxu0 0.0
    %286 = vmatprep.subr.mxu0 0.0
    %287 = vmatpush2.msra.mxu0 0.0
    %288 = vmatprep.subr.mxu0 0.0
    %289 = vmatpush2.msra.mxu0 0.0
    %290 = vmatprep.subr.mxu0 0.0
    %291 = vmatpush2.msra.mxu0 0.0
    %292 = vmatprep.subr.mxu0 0.0
    %293 = vmatpush2.msra.mxu0 0.0
    %294 = vmatprep.subr.mxu0 0.0
    %295 = vmatpush2.msra.mxu0 0.0
    %296 = vmatprep.subr.mxu0 0.0
    %297 = vmatpush2.msra.mxu0 0.0
    %298 = vmatprep.subr.mxu0 0.0
    %299 = vmatpush2.msra.mxu0 0.0
    %300 = vmatprep.subr.mxu0 0.0
    %301 = vmatpush2.msra.mxu0 0.0
    %302 = vmatprep.subr.mxu0 0.0
    %303 = vmatpush2.msra.mxu0 0.0
    %304 = vmatprep.subr.mxu0 0.0
    %305 = vmatpush2.msra.mxu0 0.0
    %306 = vmatprep.subr.mxu0 0.0
    %307 = vmatpush2.msra.mxu0 0.0
    %308 = vmatprep.subr.mxu0 0.0
    %309 = vmatpush2.msra.mxu0 0.0
    %310 = vmatprep.subr.mxu0 0.0
    %311 = vmatpush2.msra.mxu0 0.0
    %312 = vmatprep.subr.mxu0 0.0
    %313 = vmatpush2.msra.mxu0 0.0
    %314 = vmatprep.mubr.f32.mxu0 0.0
    %315 = vmatmul.mubr.f32.gmra.mxu0 %v235
    %v316 = vpop.f32.mrf.mxu0
    %v317 = vadd.f32 %v207, %v316
    %v318 = vpop.f32.mrf.mxu0
    %319 = vmatprep.mubr.f32.mxu0 0.0
    %320 = vmatmul.mubr.f32.gmra.mxu0 %v237
    %v321 = vpop.f32.mrf.mxu0
    %v322 = vadd.f32 %v212, %v321
    %v323 = vpop.f32.mrf.mxu0
    %324 = vmatprep.mubr.f32.mxu0 0.0
    %325 = vmatmul.mubr.f32.gmra.mxu0 %v239
    %v326 = vpop.f32.mrf.mxu0
    %v327 = vadd.f32 %v217, %v326
    %v328 = vpop.f32.mrf.mxu0
    %329 = vmatprep.mubr.f32.mxu0 0.0
    %330 = vmatmul.mubr.f32.gmra.mxu0 %v241
    %v331 = vpop.f32.mrf.mxu0
    %v332 = vadd.f32 %v222, %v331
    %v333 = vpop.f32.mrf.mxu0
    %334 = vmatprep.mubr.f32.mxu0 0.0
    %335 = vmatmul.mubr.f32.gmra.mxu0 %v243
    %v336 = vpop.f32.mrf.mxu0
    %v337 = vadd.f32 %v227, %v336
    %v338 = vpop.f32.mrf.mxu0
    %339 = vmatprep.mubr.f32.mxu0 0.0
    %340 = vmatmul.mubr.f32.gmra.mxu0 %v245
    %v341 = vpop.f32.mrf.mxu0
    %v342 = vadd.f32 %v232, %v341
    %v343 = vpop.f32.mrf.mxu0
    %344 = vdwg.mxu0
    %s345 = scalar_lea.vmem %s1, 64
    %v346 = vld [vmem:[%s345] sm:$0xff]
    %v347 = vld [vmem:[%s345 + $0x8] sm:$0xff]
    %v348 = vld [vmem:[%s345 + $0x10] sm:$0xff]
    %v349 = vld [vmem:[%s345 + $0x18] sm:$0xf]
    %v350 = vsel %vm124, %v73, 0
    %v352 = vsel %vm124, %v75, 0
    %v354 = vsel %vm124, %v77, 0
    %v356 = vsel %vm124, %v80, 0
    %v358 = vsel %vm124, %v82, 0
    %v360 = vsel %vm124, %v84, 0
    %v363 = vsel %vm100, %v349, 0
    %365 = vmatprep.subr.mxu0 0.0
    %366 = vmatpush1.msra.mxu0 0.0
    %367 = vmatprep.subr.mxu0 0.0
    %368 = vmatpush1.msra.mxu0 0.0
    %369 = vmatprep.subr.mxu0 0.0
    %370 = vmatpush1.msra.mxu0 0.0
    %371 = vmatprep.subr.mxu0 0.0
    %372 = vmatpush1.msra.mxu0 0.0
    %373 = vmatprep.subr.mxu0 0.0
    %374 = vmatpush1.msra.mxu0 0.0
    %375 = vmatprep.subr.mxu0 0.0
    %376 = vmatpush1.msra.mxu0 0.0
    %377 = vmatprep.subr.mxu0 0.0
    %378 = vmatpush1.msra.mxu0 0.0
    %379 = vmatprep.subr.mxu0 0.0
    %380 = vmatpush1.msra.mxu0 0.0
    %381 = vmatprep.subr.mxu0 0.0
    %382 = vmatpush1.msra.mxu0 0.0
    %383 = vmatprep.subr.mxu0 0.0
    %384 = vmatpush1.msra.mxu0 0.0
    %385 = vmatprep.subr.mxu0 0.0
    %386 = vmatpush1.msra.mxu0 0.0
    %387 = vmatprep.subr.mxu0 0.0
    %388 = vmatpush1.msra.mxu0 0.0
    %389 = vmatprep.subr.mxu0 0.0
    %390 = vmatpush1.msra.mxu0 %v363
    %391 = vmatprep.subr.mxu0 0.0
    %392 = vmatpush1.msra.mxu0 %v348
    %393 = vmatprep.subr.mxu0 0.0
    %394 = vmatpush1.msra.mxu0 %v347
    %395 = vmatprep.subr.mxu0 0.0
    %396 = vmatpush1.msra.mxu0 %v346
    %397 = vmatprep.subr.mxu0 0.0
    %398 = vmatpush2.msra.mxu0 0.0
    %399 = vmatprep.subr.mxu0 0.0
    %400 = vmatpush2.msra.mxu0 0.0
    %401 = vmatprep.subr.mxu0 0.0
    %402 = vmatpush2.msra.mxu0 0.0
    %403 = vmatprep.subr.mxu0 0.0
    %404 = vmatpush2.msra.mxu0 0.0
    %405 = vmatprep.subr.mxu0 0.0
    %406 = vmatpush2.msra.mxu0 0.0
    %407 = vmatprep.subr.mxu0 0.0
    %408 = vmatpush2.msra.mxu0 0.0
    %409 = vmatprep.subr.mxu0 0.0
    %410 = vmatpush2.msra.mxu0 0.0
    %411 = vmatprep.subr.mxu0 0.0
    %412 = vmatpush2.msra.mxu0 0.0
    %413 = vmatprep.subr.mxu0 0.0
    %414 = vmatpush2.msra.mxu0 0.0
    %415 = vmatprep.subr.mxu0 0.0
    %416 = vmatpush2.msra.mxu0 0.0
    %417 = vmatprep.subr.mxu0 0.0
    %418 = vmatpush2.msra.mxu0 0.0
    %419 = vmatprep.subr.mxu0 0.0
    %420 = vmatpush2.msra.mxu0 0.0
    %421 = vmatprep.subr.mxu0 0.0
    %422 = vmatpush2.msra.mxu0 0.0
    %423 = vmatprep.subr.mxu0 0.0
    %424 = vmatpush2.msra.mxu0 0.0
    %425 = vmatprep.subr.mxu0 0.0
    %426 = vmatpush2.msra.mxu0 0.0
    %427 = vmatprep.subr.mxu0 0.0
    %428 = vmatpush2.msra.mxu0 0.0
    %429 = vmatprep.mubr.f32.mxu0 0.0
    %430 = vmatmul.mubr.f32.gmra.mxu0 %v350
    %v431 = vpop.f32.mrf.mxu0
    %v432 = vadd.f32 0.0, %v431
    %v433 = vpop.f32.mrf.mxu0
    %434 = vmatprep.mubr.f32.mxu0 0.0
    %435 = vmatmul.mubr.f32.gmra.mxu0 %v352
    %v436 = vpop.f32.mrf.mxu0
    %v437 = vadd.f32 0.0, %v436
    %v438 = vpop.f32.mrf.mxu0
    %439 = vmatprep.mubr.f32.mxu0 0.0
    %440 = vmatmul.mubr.f32.gmra.mxu0 %v354
    %v441 = vpop.f32.mrf.mxu0
    %v442 = vadd.f32 0.0, %v441
    %v443 = vpop.f32.mrf.mxu0
    %444 = vmatprep.mubr.f32.mxu0 0.0
    %445 = vmatmul.mubr.f32.gmra.mxu0 %v356
    %v446 = vpop.f32.mrf.mxu0
    %v447 = vadd.f32 0.0, %v446
    %v448 = vpop.f32.mrf.mxu0
    %449 = vmatprep.mubr.f32.mxu0 0.0
    %450 = vmatmul.mubr.f32.gmra.mxu0 %v358
    %v451 = vpop.f32.mrf.mxu0
    %v452 = vadd.f32 0.0, %v451
    %v453 = vpop.f32.mrf.mxu0
    %454 = vmatprep.mubr.f32.mxu0 0.0
    %455 = vmatmul.mubr.f32.gmra.mxu0 %v360
    %v456 = vpop.f32.mrf.mxu0
    %v457 = vadd.f32 0.0, %v456
    %v458 = vpop.f32.mrf.mxu0
    %459 = vdwg.mxu0
    %v460 = vadd.f32 %v317, %v432
    %v461 = vadd.f32 %v322, %v437
    %v462 = vadd.f32 %v327, %v442
    %v463 = vadd.f32 %v332, %v447
    %v464 = vadd.f32 %v337, %v452
    %v465 = vadd.f32 %v342, %v457
    %s466 = scalar_lea.vmem %s1, 96
    %v467 = vld [vmem:[%s466] sm:$0xff]
    %v468 = vld [vmem:[%s466 + $0x8] sm:$0xff]
    %v469 = vld [vmem:[%s466 + $0x10] sm:$0xff]
    %v470 = vld [vmem:[%s466 + $0x18] sm:$0xf]
    %v471 = vsel %vm124, %v88, 0
    %v473 = vsel %vm124, %v90, 0
    %v475 = vsel %vm124, %v92, 0
    %v477 = vsel %vm124, %v95, 0
    %v479 = vsel %vm124, %v97, 0
    %v481 = vsel %vm124, %v99, 0
    %v484 = vsel %vm100, %v470, 0
    %486 = vmatprep.subr.mxu0 0.0
    %487 = vmatpush1.msra.mxu0 0.0
    %488 = vmatprep.subr.mxu0 0.0
    %489 = vmatpush1.msra.mxu0 0.0
    %490 = vmatprep.subr.mxu0 0.0
    %491 = vmatpush1.msra.mxu0 0.0
    %492 = vmatprep.subr.mxu0 0.0
    %493 = vmatpush1.msra.mxu0 0.0
    %494 = vmatprep.subr.mxu0 0.0
    %495 = vmatpush1.msra.mxu0 0.0
    %496 = vmatprep.subr.mxu0 0.0
    %497 = vmatpush1.msra.mxu0 0.0
    %498 = vmatprep.subr.mxu0 0.0
    %499 = vmatpush1.msra.mxu0 0.0
    %500 = vmatprep.subr.mxu0 0.0
    %501 = vmatpush1.msra.mxu0 0.0
    %502 = vmatprep.subr.mxu0 0.0
    %503 = vmatpush1.msra.mxu0 0.0
    %504 = vmatprep.subr.mxu0 0.0
    %505 = vmatpush1.msra.mxu0 0.0
    %506 = vmatprep.subr.mxu0 0.0
    %507 = vmatpush1.msra.mxu0 0.0
    %508 = vmatprep.subr.mxu0 0.0
    %509 = vmatpush1.msra.mxu0 0.0
    %510 = vmatprep.subr.mxu0 0.0
    %511 = vmatpush1.msra.mxu0 %v484
    %512 = vmatprep.subr.mxu0 0.0
    %513 = vmatpush1.msra.mxu0 %v469
    %514 = vmatprep.subr.mxu0 0.0
    %515 = vmatpush1.msra.mxu0 %v468
    %516 = vmatprep.subr.mxu0 0.0
    %517 = vmatpush1.msra.mxu0 %v467
    %518 = vmatprep.subr.mxu0 0.0
    %519 = vmatpush2.msra.mxu0 0.0
    %520 = vmatprep.subr.mxu0 0.0
    %521 = vmatpush2.msra.mxu0 0.0
    %522 = vmatprep.subr.mxu0 0.0
    %523 = vmatpush2.msra.mxu0 0.0
    %524 = vmatprep.subr.mxu0 0.0
    %525 = vmatpush2.msra.mxu0 0.0
    %526 = vmatprep.subr.mxu0 0.0
    %527 = vmatpush2.msra.mxu0 0.0
    %528 = vmatprep.subr.mxu0 0.0
    %529 = vmatpush2.msra.mxu0 0.0
    %530 = vmatprep.subr.mxu0 0.0
    %531 = vmatpush2.msra.mxu0 0.0
    %532 = vmatprep.subr.mxu0 0.0
    %533 = vmatpush2.msra.mxu0 0.0
    %534 = vmatprep.subr.mxu0 0.0
    %535 = vmatpush2.msra.mxu0 0.0
    %536 = vmatprep.subr.mxu0 0.0
    %537 = vmatpush2.msra.mxu0 0.0
    %538 = vmatprep.subr.mxu0 0.0
    %539 = vmatpush2.msra.mxu0 0.0
    %540 = vmatprep.subr.mxu0 0.0
    %541 = vmatpush2.msra.mxu0 0.0
    %542 = vmatprep.subr.mxu0 0.0
    %543 = vmatpush2.msra.mxu0 0.0
    %544 = vmatprep.subr.mxu0 0.0
    %545 = vmatpush2.msra.mxu0 0.0
    %546 = vmatprep.subr.mxu0 0.0
    %547 = vmatpush2.msra.mxu0 0.0
    %548 = vmatprep.subr.mxu0 0.0
    %549 = vmatpush2.msra.mxu0 0.0
    %550 = vmatprep.mubr.f32.mxu0 0.0
    %551 = vmatmul.mubr.f32.gmra.mxu0 %v471
    %v552 = vpop.f32.mrf.mxu0
    %v553 = vadd.f32 0.0, %v552
    %v554 = vpop.f32.mrf.mxu0
    %555 = vmatprep.mubr.f32.mxu0 0.0
    %556 = vmatmul.mubr.f32.gmra.mxu0 %v473
    %v557 = vpop.f32.mrf.mxu0
    %v558 = vadd.f32 0.0, %v557
    %v559 = vpop.f32.mrf.mxu0
    %560 = vmatprep.mubr.f32.mxu0 0.0
    %561 = vmatmul.mubr.f32.gmra.mxu0 %v475
    %v562 = vpop.f32.mrf.mxu0
    %v563 = vadd.f32 0.0, %v562
    %v564 = vpop.f32.mrf.mxu0
    %565 = vmatprep.mubr.f32.mxu0 0.0
    %566 = vmatmul.mubr.f32.gmra.mxu0 %v477
    %v567 = vpop.f32.mrf.mxu0
    %v568 = vadd.f32 0.0, %v567
    %v569 = vpop.f32.mrf.mxu0
    %570 = vmatprep.mubr.f32.mxu0 0.0
    %571 = vmatmul.mubr.f32.gmra.mxu0 %v479
    %v572 = vpop.f32.mrf.mxu0
    %v573 = vadd.f32 0.0, %v572
    %v574 = vpop.f32.mrf.mxu0
    %575 = vmatprep.mubr.f32.mxu0 0.0
    %576 = vmatmul.mubr.f32.gmra.mxu0 %v481
    %v577 = vpop.f32.mrf.mxu0
    %v578 = vadd.f32 0.0, %v577
    %v579 = vpop.f32.mrf.mxu0
    %580 = vdwg.mxu0
    %v581 = vadd.f32 %v460, %v553
    %v582 = vadd.f32 %v461, %v558
    %v583 = vadd.f32 %v462, %v563
    %v584 = vadd.f32 %v463, %v568
    %v585 = vadd.f32 %v464, %v573
    %v586 = vadd.f32 %v465, %v578
    %s587 = scalar_lea.vmem %s1, 128
    %v588 = vld [vmem:[%s587] sm:$0xff]
    %v589 = vld [vmem:[%s587 + $0x8] sm:$0xff]
    %v590 = vld [vmem:[%s587 + $0x10] sm:$0xff]
    %v591 = vld [vmem:[%s587 + $0x18] sm:$0xf]
    %v592 = vsel %vm124, %v103, 0
    %v594 = vsel %vm124, %v105, 0
    %v596 = vsel %vm124, %v107, 0
    %v598 = vsel %vm124, %v110, 0
    %v600 = vsel %vm124, %v112, 0
    %v602 = vsel %vm124, %v114, 0
    %v605 = vsel %vm100, %v591, 0
    %607 = vmatprep.subr.mxu0 0.0
    %608 = vmatpush1.msra.mxu0 0.0
    %609 = vmatprep.subr.mxu0 0.0
    %610 = vmatpush1.msra.mxu0 0.0
    %611 = vmatprep.subr.mxu0 0.0
    %612 = vmatpush1.msra.mxu0 0.0
    %613 = vmatprep.subr.mxu0 0.0
    %614 = vmatpush1.msra.mxu0 0.0
    %615 = vmatprep.subr.mxu0 0.0
    %616 = vmatpush1.msra.mxu0 0.0
    %617 = vmatprep.subr.mxu0 0.0
    %618 = vmatpush1.msra.mxu0 0.0
    %619 = vmatprep.subr.mxu0 0.0
    %620 = vmatpush1.msra.mxu0 0.0
    %621 = vmatprep.subr.mxu0 0.0
    %622 = vmatpush1.msra.mxu0 0.0
    %623 = vmatprep.subr.mxu0 0.0
    %624 = vmatpush1.msra.mxu0 0.0
    %625 = vmatprep.subr.mxu0 0.0
    %626 = vmatpush1.msra.mxu0 0.0
    %627 = vmatprep.subr.mxu0 0.0
    %628 = vmatpush1.msra.mxu0 0.0
    %629 = vmatprep.subr.mxu0 0.0
    %630 = vmatpush1.msra.mxu0 0.0
    %631 = vmatprep.subr.mxu0 0.0
    %632 = vmatpush1.msra.mxu0 %v605
    %633 = vmatprep.subr.mxu0 0.0
    %634 = vmatpush1.msra.mxu0 %v590
    %635 = vmatprep.subr.mxu0 0.0
    %636 = vmatpush1.msra.mxu0 %v589
    %637 = vmatprep.subr.mxu0 0.0
    %638 = vmatpush1.msra.mxu0 %v588
    %639 = vmatprep.subr.mxu0 0.0
    %640 = vmatpush2.msra.mxu0 0.0
    %641 = vmatprep.subr.mxu0 0.0
    %642 = vmatpush2.msra.mxu0 0.0
    %643 = vmatprep.subr.mxu0 0.0
    %644 = vmatpush2.msra.mxu0 0.0
    %645 = vmatprep.subr.mxu0 0.0
    %646 = vmatpush2.msra.mxu0 0.0
    %647 = vmatprep.subr.mxu0 0.0
    %648 = vmatpush2.msra.mxu0 0.0
    %649 = vmatprep.subr.mxu0 0.0
    %650 = vmatpush2.msra.mxu0 0.0
    %651 = vmatprep.subr.mxu0 0.0
    %652 = vmatpush2.msra.mxu0 0.0
    %653 = vmatprep.subr.mxu0 0.0
    %654 = vmatpush2.msra.mxu0 0.0
    %655 = vmatprep.subr.mxu0 0.0
    %656 = vmatpush2.msra.mxu0 0.0
    %657 = vmatprep.subr.mxu0 0.0
    %658 = vmatpush2.msra.mxu0 0.0
    %659 = vmatprep.subr.mxu0 0.0
    %660 = vmatpush2.msra.mxu0 0.0
    %661 = vmatprep.subr.mxu0 0.0
    %662 = vmatpush2.msra.mxu0 0.0
    %663 = vmatprep.subr.mxu0 0.0
    %664 = vmatpush2.msra.mxu0 0.0
    %665 = vmatprep.subr.mxu0 0.0
    %666 = vmatpush2.msra.mxu0 0.0
    %667 = vmatprep.subr.mxu0 0.0
    %668 = vmatpush2.msra.mxu0 0.0
    %669 = vmatprep.subr.mxu0 0.0
    %670 = vmatpush2.msra.mxu0 0.0
    %671 = vmatprep.mubr.f32.mxu0 0.0
    %672 = vmatmul.mubr.f32.gmra.mxu0 %v592
    %v673 = vpop.f32.mrf.mxu0
    %v674 = vadd.f32 0.0, %v673
    %v675 = vpop.f32.mrf.mxu0
    %676 = vmatprep.mubr.f32.mxu0 0.0
    %677 = vmatmul.mubr.f32.gmra.mxu0 %v594
    %v678 = vpop.f32.mrf.mxu0
    %v679 = vadd.f32 0.0, %v678
    %v680 = vpop.f32.mrf.mxu0
    %681 = vmatprep.mubr.f32.mxu0 0.0
    %682 = vmatmul.mubr.f32.gmra.mxu0 %v596
    %v683 = vpop.f32.mrf.mxu0
    %v684 = vadd.f32 0.0, %v683
    %v685 = vpop.f32.mrf.mxu0
    %686 = vmatprep.mubr.f32.mxu0 0.0
    %687 = vmatmul.mubr.f32.gmra.mxu0 %v598
    %v688 = vpop.f32.mrf.mxu0
    %v689 = vadd.f32 0.0, %v688
    %v690 = vpop.f32.mrf.mxu0
    %691 = vmatprep.mubr.f32.mxu0 0.0
    %692 = vmatmul.mubr.f32.gmra.mxu0 %v600
    %v693 = vpop.f32.mrf.mxu0
    %v694 = vadd.f32 0.0, %v693
    %v695 = vpop.f32.mrf.mxu0
    %696 = vmatprep.mubr.f32.mxu0 0.0
    %697 = vmatmul.mubr.f32.gmra.mxu0 %v602
    %v698 = vpop.f32.mrf.mxu0
    %v699 = vadd.f32 0.0, %v698
    %v700 = vpop.f32.mrf.mxu0
    %701 = vdwg.mxu0
    %v702 = vadd.f32 %v581, %v674
    %v703 = vadd.f32 %v582, %v679
    %v704 = vadd.f32 %v583, %v684
    %v705 = vadd.f32 %v584, %v689
    %v706 = vadd.f32 %v585, %v694
    %v707 = vadd.f32 %v586, %v699
    %v708 = vld [vmem:[%s2] sm:$0xff]
    %v709 = vld [vmem:[%s2 + $0x8] sm:$0xff]
    %v710 = vld [vmem:[%s2 + $0x10] sm:$0xff]
    %v711 = vld [vmem:[%s2 + $0x18] sm:$0xf]
    %s712 = scalar_lea.vmem %s2, 32
    %v713 = vld [vmem:[%s712] sm:$0xff]
    %v714 = vld [vmem:[%s712 + $0x8] sm:$0xff]
    %v715 = vld [vmem:[%s712 + $0x10] sm:$0xff]
    %v716 = vld [vmem:[%s712 + $0x18] sm:$0xf]
    %v718 = vsel %vm100, %v716, 0
    %720 = vmatprep.subr.mxu0 0.0
    %721 = vmatpush1.msra.mxu0 0.0
    %722 = vmatprep.subr.mxu0 0.0
    %723 = vmatpush1.msra.mxu0 0.0
    %724 = vmatprep.subr.mxu0 0.0
    %725 = vmatpush1.msra.mxu0 0.0
    %726 = vmatprep.subr.mxu0 0.0
    %727 = vmatpush1.msra.mxu0 0.0
    %728 = vmatprep.subr.mxu0 0.0
    %729 = vmatpush1.msra.mxu0 0.0
    %730 = vmatprep.subr.mxu0 0.0
    %731 = vmatpush1.msra.mxu0 0.0
    %732 = vmatprep.subr.mxu0 0.0
    %733 = vmatpush1.msra.mxu0 0.0
    %734 = vmatprep.subr.mxu0 0.0
    %735 = vmatpush1.msra.mxu0 0.0
    %736 = vmatprep.subr.mxu0 0.0
    %737 = vmatpush1.msra.mxu0 0.0
    %738 = vmatprep.subr.mxu0 0.0
    %739 = vmatpush1.msra.mxu0 0.0
    %740 = vmatprep.subr.mxu0 0.0
    %741 = vmatpush1.msra.mxu0 0.0
    %742 = vmatprep.subr.mxu0 0.0
    %743 = vmatpush1.msra.mxu0 0.0
    %744 = vmatprep.subr.mxu0 0.0
    %745 = vmatpush1.msra.mxu0 %v718
    %746 = vmatprep.subr.mxu0 0.0
    %747 = vmatpush1.msra.mxu0 %v715
    %748 = vmatprep.subr.mxu0 0.0
    %749 = vmatpush1.msra.mxu0 %v714
    %750 = vmatprep.subr.mxu0 0.0
    %751 = vmatpush1.msra.mxu0 %v713
    %752 = vmatprep.subr.mxu0 0.0
    %753 = vmatpush2.msra.mxu0 0.0
    %754 = vmatprep.subr.mxu0 0.0
    %755 = vmatpush2.msra.mxu0 0.0
    %756 = vmatprep.subr.mxu0 0.0
    %757 = vmatpush2.msra.mxu0 0.0
    %758 = vmatprep.subr.mxu0 0.0
    %759 = vmatpush2.msra.mxu0 0.0
    %760 = vmatprep.subr.mxu0 0.0
    %761 = vmatpush2.msra.mxu0 0.0
    %762 = vmatprep.subr.mxu0 0.0
    %763 = vmatpush2.msra.mxu0 0.0
    %764 = vmatprep.subr.mxu0 0.0
    %765 = vmatpush2.msra.mxu0 0.0
    %766 = vmatprep.subr.mxu0 0.0
    %767 = vmatpush2.msra.mxu0 0.0
    %768 = vmatprep.subr.mxu0 0.0
    %769 = vmatpush2.msra.mxu0 0.0
    %770 = vmatprep.subr.mxu0 0.0
    %771 = vmatpush2.msra.mxu0 0.0
    %772 = vmatprep.subr.mxu0 0.0
    %773 = vmatpush2.msra.mxu0 0.0
    %774 = vmatprep.subr.mxu0 0.0
    %775 = vmatpush2.msra.mxu0 0.0
    %776 = vmatprep.subr.mxu0 0.0
    %777 = vmatpush2.msra.mxu0 0.0
    %778 = vmatprep.subr.mxu0 0.0
    %779 = vmatpush2.msra.mxu0 0.0
    %780 = vmatprep.subr.mxu0 0.0
    %781 = vmatpush2.msra.mxu0 0.0
    %782 = vmatprep.subr.mxu0 0.0
    %783 = vmatpush2.msra.mxu0 0.0
    %784 = vmatprep.mubr.f32.mxu0 0.0
    %785 = vmatmul.mubr.f32.gmra.mxu0 %v125
    %v786 = vpop.f32.mrf.mxu0
    %v787 = vadd.f32 0.0, %v786
    %v788 = vpop.f32.mrf.mxu0
    %789 = vmatprep.mubr.f32.mxu0 0.0
    %790 = vmatmul.mubr.f32.gmra.mxu0 %v127
    %v791 = vpop.f32.mrf.mxu0
    %v792 = vadd.f32 0.0, %v791
    %v793 = vpop.f32.mrf.mxu0
    %794 = vmatprep.mubr.f32.mxu0 0.0
    %795 = vmatmul.mubr.f32.gmra.mxu0 %v129
    %v796 = vpop.f32.mrf.mxu0
    %v797 = vadd.f32 0.0, %v796
    %v798 = vpop.f32.mrf.mxu0
    %799 = vmatprep.mubr.f32.mxu0 0.0
    %800 = vmatmul.mubr.f32.gmra.mxu0 %v131
    %v801 = vpop.f32.mrf.mxu0
    %v802 = vadd.f32 0.0, %v801
    %v803 = vpop.f32.mrf.mxu0
    %804 = vmatprep.mubr.f32.mxu0 0.0
    %805 = vmatmul.mubr.f32.gmra.mxu0 %v133
    %v806 = vpop.f32.mrf.mxu0
    %v807 = vadd.f32 0.0, %v806
    %v808 = vpop.f32.mrf.mxu0
    %809 = vmatprep.mubr.f32.mxu0 0.0
    %810 = vmatmul.mubr.f32.gmra.mxu0 %v135
    %v811 = vpop.f32.mrf.mxu0
    %v812 = vadd.f32 0.0, %v811
    %v813 = vpop.f32.mrf.mxu0
    %814 = vdwg.mxu0
    %v816 = vsel %vm100, %v711, 0
    %818 = vmatprep.subr.mxu0 0.0
    %819 = vmatpush1.msra.mxu0 0.0
    %820 = vmatprep.subr.mxu0 0.0
    %821 = vmatpush1.msra.mxu0 0.0
    %822 = vmatprep.subr.mxu0 0.0
    %823 = vmatpush1.msra.mxu0 0.0
    %824 = vmatprep.subr.mxu0 0.0
    %825 = vmatpush1.msra.mxu0 0.0
    %826 = vmatprep.subr.mxu0 0.0
    %827 = vmatpush1.msra.mxu0 0.0
    %828 = vmatprep.subr.mxu0 0.0
    %829 = vmatpush1.msra.mxu0 0.0
    %830 = vmatprep.subr.mxu0 0.0
    %831 = vmatpush1.msra.mxu0 0.0
    %832 = vmatprep.subr.mxu0 0.0
    %833 = vmatpush1.msra.mxu0 0.0
    %834 = vmatprep.subr.mxu0 0.0
    %835 = vmatpush1.msra.mxu0 0.0
    %836 = vmatprep.subr.mxu0 0.0
    %837 = vmatpush1.msra.mxu0 0.0
    %838 = vmatprep.subr.mxu0 0.0
    %839 = vmatpush1.msra.mxu0 0.0
    %840 = vmatprep.subr.mxu0 0.0
    %841 = vmatpush1.msra.mxu0 0.0
    %842 = vmatprep.subr.mxu0 0.0
    %843 = vmatpush1.msra.mxu0 %v816
    %844 = vmatprep.subr.mxu0 0.0
    %845 = vmatpush1.msra.mxu0 %v710
    %846 = vmatprep.subr.mxu0 0.0
    %847 = vmatpush1.msra.mxu0 %v709
    %848 = vmatprep.subr.mxu0 0.0
    %849 = vmatpush1.msra.mxu0 %v708
    %850 = vmatprep.subr.mxu0 0.0
    %851 = vmatpush2.msra.mxu0 0.0
    %852 = vmatprep.subr.mxu0 0.0
    %853 = vmatpush2.msra.mxu0 0.0
    %854 = vmatprep.subr.mxu0 0.0
    %855 = vmatpush2.msra.mxu0 0.0
    %856 = vmatprep.subr.mxu0 0.0
    %857 = vmatpush2.msra.mxu0 0.0
    %858 = vmatprep.subr.mxu0 0.0
    %859 = vmatpush2.msra.mxu0 0.0
    %860 = vmatprep.subr.mxu0 0.0
    %861 = vmatpush2.msra.mxu0 0.0
    %862 = vmatprep.subr.mxu0 0.0
    %863 = vmatpush2.msra.mxu0 0.0
    %864 = vmatprep.subr.mxu0 0.0
    %865 = vmatpush2.msra.mxu0 0.0
    %866 = vmatprep.subr.mxu0 0.0
    %867 = vmatpush2.msra.mxu0 0.0
    %868 = vmatprep.subr.mxu0 0.0
    %869 = vmatpush2.msra.mxu0 0.0
    %870 = vmatprep.subr.mxu0 0.0
    %871 = vmatpush2.msra.mxu0 0.0
    %872 = vmatprep.subr.mxu0 0.0
    %873 = vmatpush2.msra.mxu0 0.0
    %874 = vmatprep.subr.mxu0 0.0
    %875 = vmatpush2.msra.mxu0 0.0
    %876 = vmatprep.subr.mxu0 0.0
    %877 = vmatpush2.msra.mxu0 0.0
    %878 = vmatprep.subr.mxu0 0.0
    %879 = vmatpush2.msra.mxu0 0.0
    %880 = vmatprep.subr.mxu0 0.0
    %881 = vmatpush2.msra.mxu0 0.0
    %882 = vmatprep.mubr.f32.mxu0 0.0
    %883 = vmatmul.mubr.f32.gmra.mxu0 %v235
    %v884 = vpop.f32.mrf.mxu0
    %v885 = vadd.f32 %v787, %v884
    %v886 = vpop.f32.mrf.mxu0
    %887 = vmatprep.mubr.f32.mxu0 0.0
    %888 = vmatmul.mubr.f32.gmra.mxu0 %v237
    %v889 = vpop.f32.mrf.mxu0
    %v890 = vadd.f32 %v792, %v889
    %v891 = vpop.f32.mrf.mxu0
    %892 = vmatprep.mubr.f32.mxu0 0.0
    %893 = vmatmul.mubr.f32.gmra.mxu0 %v239
    %v894 = vpop.f32.mrf.mxu0
    %v895 = vadd.f32 %v797, %v894
    %v896 = vpop.f32.mrf.mxu0
    %897 = vmatprep.mubr.f32.mxu0 0.0
    %898 = vmatmul.mubr.f32.gmra.mxu0 %v241
    %v899 = vpop.f32.mrf.mxu0
    %v900 = vadd.f32 %v802, %v899
    %v901 = vpop.f32.mrf.mxu0
    %902 = vmatprep.mubr.f32.mxu0 0.0
    %903 = vmatmul.mubr.f32.gmra.mxu0 %v243
    %v904 = vpop.f32.mrf.mxu0
    %v905 = vadd.f32 %v807, %v904
    %v906 = vpop.f32.mrf.mxu0
    %907 = vmatprep.mubr.f32.mxu0 0.0
    %908 = vmatmul.mubr.f32.gmra.mxu0 %v245
    %v909 = vpop.f32.mrf.mxu0
    %v910 = vadd.f32 %v812, %v909
    %v911 = vpop.f32.mrf.mxu0
    %912 = vdwg.mxu0
    %s913 = scalar_lea.vmem %s2, 64
    %v914 = vld [vmem:[%s913] sm:$0xff]
    %v915 = vld [vmem:[%s913 + $0x8] sm:$0xff]
    %v916 = vld [vmem:[%s913 + $0x10] sm:$0xff]
    %v917 = vld [vmem:[%s913 + $0x18] sm:$0xf]
    %v919 = vsel %vm100, %v917, 0
    %921 = vmatprep.subr.mxu0 0.0
    %922 = vmatpush1.msra.mxu0 0.0
    %923 = vmatprep.subr.mxu0 0.0
    %924 = vmatpush1.msra.mxu0 0.0
    %925 = vmatprep.subr.mxu0 0.0
    %926 = vmatpush1.msra.mxu0 0.0
    %927 = vmatprep.subr.mxu0 0.0
    %928 = vmatpush1.msra.mxu0 0.0
    %929 = vmatprep.subr.mxu0 0.0
    %930 = vmatpush1.msra.mxu0 0.0
    %931 = vmatprep.subr.mxu0 0.0
    %932 = vmatpush1.msra.mxu0 0.0
    %933 = vmatprep.subr.mxu0 0.0
    %934 = vmatpush1.msra.mxu0 0.0
    %935 = vmatprep.subr.mxu0 0.0
    %936 = vmatpush1.msra.mxu0 0.0
    %937 = vmatprep.subr.mxu0 0.0
    %938 = vmatpush1.msra.mxu0 0.0
    %939 = vmatprep.subr.mxu0 0.0
    %940 = vmatpush1.msra.mxu0 0.0
    %941 = vmatprep.subr.mxu0 0.0
    %942 = vmatpush1.msra.mxu0 0.0
    %943 = vmatprep.subr.mxu0 0.0
    %944 = vmatpush1.msra.mxu0 0.0
    %945 = vmatprep.subr.mxu0 0.0
    %946 = vmatpush1.msra.mxu0 %v919
    %947 = vmatprep.subr.mxu0 0.0
    %948 = vmatpush1.msra.mxu0 %v916
    %949 = vmatprep.subr.mxu0 0.0
    %950 = vmatpush1.msra.mxu0 %v915
    %951 = vmatprep.subr.mxu0 0.0
    %952 = vmatpush1.msra.mxu0 %v914
    %953 = vmatprep.subr.mxu0 0.0
    %954 = vmatpush2.msra.mxu0 0.0
    %955 = vmatprep.subr.mxu0 0.0
    %956 = vmatpush2.msra.mxu0 0.0
    %957 = vmatprep.subr.mxu0 0.0
    %958 = vmatpush2.msra.mxu0 0.0
    %959 = vmatprep.subr.mxu0 0.0
    %960 = vmatpush2.msra.mxu0 0.0
    %961 = vmatprep.subr.mxu0 0.0
    %962 = vmatpush2.msra.mxu0 0.0
    %963 = vmatprep.subr.mxu0 0.0
    %964 = vmatpush2.msra.mxu0 0.0
    %965 = vmatprep.subr.mxu0 0.0
    %966 = vmatpush2.msra.mxu0 0.0
    %967 = vmatprep.subr.mxu0 0.0
    %968 = vmatpush2.msra.mxu0 0.0
    %969 = vmatprep.subr.mxu0 0.0
    %970 = vmatpush2.msra.mxu0 0.0
    %971 = vmatprep.subr.mxu0 0.0
    %972 = vmatpush2.msra.mxu0 0.0
    %973 = vmatprep.subr.mxu0 0.0
    %974 = vmatpush2.msra.mxu0 0.0
    %975 = vmatprep.subr.mxu0 0.0
    %976 = vmatpush2.msra.mxu0 0.0
    %977 = vmatprep.subr.mxu0 0.0
    %978 = vmatpush2.msra.mxu0 0.0
    %979 = vmatprep.subr.mxu0 0.0
    %980 = vmatpush2.msra.mxu0 0.0
    %981 = vmatprep.subr.mxu0 0.0
    %982 = vmatpush2.msra.mxu0 0.0
    %983 = vmatprep.subr.mxu0 0.0
    %984 = vmatpush2.msra.mxu0 0.0
    %985 = vmatprep.mubr.f32.mxu0 0.0
    %986 = vmatmul.mubr.f32.gmra.mxu0 %v350
    %v987 = vpop.f32.mrf.mxu0
    %v988 = vadd.f32 0.0, %v987
    %v989 = vpop.f32.mrf.mxu0
    %990 = vmatprep.mubr.f32.mxu0 0.0
    %991 = vmatmul.mubr.f32.gmra.mxu0 %v352
    %v992 = vpop.f32.mrf.mxu0
    %v993 = vadd.f32 0.0, %v992
    %v994 = vpop.f32.mrf.mxu0
    %995 = vmatprep.mubr.f32.mxu0 0.0
    %996 = vmatmul.mubr.f32.gmra.mxu0 %v354
    %v997 = vpop.f32.mrf.mxu0
    %v998 = vadd.f32 0.0, %v997
    %v999 = vpop.f32.mrf.mxu0
    %1000 = vmatprep.mubr.f32.mxu0 0.0
    %1001 = vmatmul.mubr.f32.gmra.mxu0 %v356
    %v1002 = vpop.f32.mrf.mxu0
    %v1003 = vadd.f32 0.0, %v1002
    %v1004 = vpop.f32.mrf.mxu0
    %1005 = vmatprep.mubr.f32.mxu0 0.0
    %1006 = vmatmul.mubr.f32.gmra.mxu0 %v358
    %v1007 = vpop.f32.mrf.mxu0
    %v1008 = vadd.f32 0.0, %v1007
    %v1009 = vpop.f32.mrf.mxu0
    %1010 = vmatprep.mubr.f32.mxu0 0.0
    %1011 = vmatmul.mubr.f32.gmra.mxu0 %v360
    %v1012 = vpop.f32.mrf.mxu0
    %v1013 = vadd.f32 0.0, %v1012
    %v1014 = vpop.f32.mrf.mxu0
    %1015 = vdwg.mxu0
    %v1016 = vadd.f32 %v885, %v988
    %v1017 = vadd.f32 %v890, %v993
    %v1018 = vadd.f32 %v895, %v998
    %v1019 = vadd.f32 %v900, %v1003
    %v1020 = vadd.f32 %v905, %v1008
    %v1021 = vadd.f32 %v910, %v1013
    %s1022 = scalar_lea.vmem %s2, 96
    %v1023 = vld [vmem:[%s1022] sm:$0xff]
    %v1024 = vld [vmem:[%s1022 + $0x8] sm:$0xff]
    %v1025 = vld [vmem:[%s1022 + $0x10] sm:$0xff]
    %v1026 = vld [vmem:[%s1022 + $0x18] sm:$0xf]
    %v1028 = vsel %vm100, %v1026, 0
    %1030 = vmatprep.subr.mxu0 0.0
    %1031 = vmatpush1.msra.mxu0 0.0
    %1032 = vmatprep.subr.mxu0 0.0
    %1033 = vmatpush1.msra.mxu0 0.0
    %1034 = vmatprep.subr.mxu0 0.0
    %1035 = vmatpush1.msra.mxu0 0.0
    %1036 = vmatprep.subr.mxu0 0.0
    %1037 = vmatpush1.msra.mxu0 0.0
    %1038 = vmatprep.subr.mxu0 0.0
    %1039 = vmatpush1.msra.mxu0 0.0
    %1040 = vmatprep.subr.mxu0 0.0
    %1041 = vmatpush1.msra.mxu0 0.0
    %1042 = vmatprep.subr.mxu0 0.0
    %1043 = vmatpush1.msra.mxu0 0.0
    %1044 = vmatprep.subr.mxu0 0.0
    %1045 = vmatpush1.msra.mxu0 0.0
    %1046 = vmatprep.subr.mxu0 0.0
    %1047 = vmatpush1.msra.mxu0 0.0
    %1048 = vmatprep.subr.mxu0 0.0
    %1049 = vmatpush1.msra.mxu0 0.0
    %1050 = vmatprep.subr.mxu0 0.0
    %1051 = vmatpush1.msra.mxu0 0.0
    %1052 = vmatprep.subr.mxu0 0.0
    %1053 = vmatpush1.msra.mxu0 0.0
    %1054 = vmatprep.subr.mxu0 0.0
    %1055 = vmatpush1.msra.mxu0 %v1028
    %1056 = vmatprep.subr.mxu0 0.0
    %1057 = vmatpush1.msra.mxu0 %v1025
    %1058 = vmatprep.subr.mxu0 0.0
    %1059 = vmatpush1.msra.mxu0 %v1024
    %1060 = vmatprep.subr.mxu0 0.0
    %1061 = vmatpush1.msra.mxu0 %v1023
    %1062 = vmatprep.subr.mxu0 0.0
    %1063 = vmatpush2.msra.mxu0 0.0
    %1064 = vmatprep.subr.mxu0 0.0
    %1065 = vmatpush2.msra.mxu0 0.0
    %1066 = vmatprep.subr.mxu0 0.0
    %1067 = vmatpush2.msra.mxu0 0.0
    %1068 = vmatprep.subr.mxu0 0.0
    %1069 = vmatpush2.msra.mxu0 0.0
    %1070 = vmatprep.subr.mxu0 0.0
    %1071 = vmatpush2.msra.mxu0 0.0
    %1072 = vmatprep.subr.mxu0 0.0
    %1073 = vmatpush2.msra.mxu0 0.0
    %1074 = vmatprep.subr.mxu0 0.0
    %1075 = vmatpush2.msra.mxu0 0.0
    %1076 = vmatprep.subr.mxu0 0.0
    %1077 = vmatpush2.msra.mxu0 0.0
    %1078 = vmatprep.subr.mxu0 0.0
    %1079 = vmatpush2.msra.mxu0 0.0
    %1080 = vmatprep.subr.mxu0 0.0
    %1081 = vmatpush2.msra.mxu0 0.0
    %1082 = vmatprep.subr.mxu0 0.0
    %1083 = vmatpush2.msra.mxu0 0.0
    %1084 = vmatprep.subr.mxu0 0.0
    %1085 = vmatpush2.msra.mxu0 0.0
    %1086 = vmatprep.subr.mxu0 0.0
    %1087 = vmatpush2.msra.mxu0 0.0
    %1088 = vmatprep.subr.mxu0 0.0
    %1089 = vmatpush2.msra.mxu0 0.0
    %1090 = vmatprep.subr.mxu0 0.0
    %1091 = vmatpush2.msra.mxu0 0.0
    %1092 = vmatprep.subr.mxu0 0.0
    %1093 = vmatpush2.msra.mxu0 0.0
    %1094 = vmatprep.mubr.f32.mxu0 0.0
    %1095 = vmatmul.mubr.f32.gmra.mxu0 %v471
    %v1096 = vpop.f32.mrf.mxu0
    %v1097 = vadd.f32 0.0, %v1096
    %v1098 = vpop.f32.mrf.mxu0
    %1099 = vmatprep.mubr.f32.mxu0 0.0
    %1100 = vmatmul.mubr.f32.gmra.mxu0 %v473
    %v1101 = vpop.f32.mrf.mxu0
    %v1102 = vadd.f32 0.0, %v1101
    %v1103 = vpop.f32.mrf.mxu0
    %1104 = vmatprep.mubr.f32.mxu0 0.0
    %1105 = vmatmul.mubr.f32.gmra.mxu0 %v475
    %v1106 = vpop.f32.mrf.mxu0
    %v1107 = vadd.f32 0.0, %v1106
    %v1108 = vpop.f32.mrf.mxu0
    %1109 = vmatprep.mubr.f32.mxu0 0.0
    %1110 = vmatmul.mubr.f32.gmra.mxu0 %v477
    %v1111 = vpop.f32.mrf.mxu0
    %v1112 = vadd.f32 0.0, %v1111
    %v1113 = vpop.f32.mrf.mxu0
    %1114 = vmatprep.mubr.f32.mxu0 0.0
    %1115 = vmatmul.mubr.f32.gmra.mxu0 %v479
    %v1116 = vpop.f32.mrf.mxu0
    %v1117 = vadd.f32 0.0, %v1116
    %v1118 = vpop.f32.mrf.mxu0
    %1119 = vmatprep.mubr.f32.mxu0 0.0
    %1120 = vmatmul.mubr.f32.gmra.mxu0 %v481
    %v1121 = vpop.f32.mrf.mxu0
    %v1122 = vadd.f32 0.0, %v1121
    %v1123 = vpop.f32.mrf.mxu0
    %1124 = vdwg.mxu0
    %v1125 = vadd.f32 %v1016, %v1097
    %v1126 = vadd.f32 %v1017, %v1102
    %v1127 = vadd.f32 %v1018, %v1107
    %v1128 = vadd.f32 %v1019, %v1112
    %v1129 = vadd.f32 %v1020, %v1117
    %v1130 = vadd.f32 %v1021, %v1122
    %s1131 = scalar_lea.vmem %s2, 128
    %v1132 = vld [vmem:[%s1131] sm:$0xff]
    %v1133 = vld [vmem:[%s1131 + $0x8] sm:$0xff]
    %v1134 = vld [vmem:[%s1131 + $0x10] sm:$0xff]
    %v1135 = vld [vmem:[%s1131 + $0x18] sm:$0xf]
    %v1137 = vsel %vm100, %v1135, 0
    %1139 = vmatprep.subr.mxu0 0.0
    %1140 = vmatpush1.msra.mxu0 0.0
    %1141 = vmatprep.subr.mxu0 0.0
    %1142 = vmatpush1.msra.mxu0 0.0
    %1143 = vmatprep.subr.mxu0 0.0
    %1144 = vmatpush1.msra.mxu0 0.0
    %1145 = vmatprep.subr.mxu0 0.0
    %1146 = vmatpush1.msra.mxu0 0.0
    %1147 = vmatprep.subr.mxu0 0.0
    %1148 = vmatpush1.msra.mxu0 0.0
    %1149 = vmatprep.subr.mxu0 0.0
    %1150 = vmatpush1.msra.mxu0 0.0
    %1151 = vmatprep.subr.mxu0 0.0
    %1152 = vmatpush1.msra.mxu0 0.0
    %1153 = vmatprep.subr.mxu0 0.0
    %1154 = vmatpush1.msra.mxu0 0.0
    %1155 = vmatprep.subr.mxu0 0.0
    %1156 = vmatpush1.msra.mxu0 0.0
    %1157 = vmatprep.subr.mxu0 0.0
    %1158 = vmatpush1.msra.mxu0 0.0
    %1159 = vmatprep.subr.mxu0 0.0
    %1160 = vmatpush1.msra.mxu0 0.0
    %1161 = vmatprep.subr.mxu0 0.0
    %1162 = vmatpush1.msra.mxu0 0.0
    %1163 = vmatprep.subr.mxu0 0.0
    %1164 = vmatpush1.msra.mxu0 %v1137
    %1165 = vmatprep.subr.mxu0 0.0
    %1166 = vmatpush1.msra.mxu0 %v1134
    %1167 = vmatprep.subr.mxu0 0.0
    %1168 = vmatpush1.msra.mxu0 %v1133
    %1169 = vmatprep.subr.mxu0 0.0
    %1170 = vmatpush1.msra.mxu0 %v1132
    %1171 = vmatprep.subr.mxu0 0.0
    %1172 = vmatpush2.msra.mxu0 0.0
    %1173 = vmatprep.subr.mxu0 0.0
    %1174 = vmatpush2.msra.mxu0 0.0
    %1175 = vmatprep.subr.mxu0 0.0
    %1176 = vmatpush2.msra.mxu0 0.0
    %1177 = vmatprep.subr.mxu0 0.0
    %1178 = vmatpush2.msra.mxu0 0.0
    %1179 = vmatprep.subr.mxu0 0.0
    %1180 = vmatpush2.msra.mxu0 0.0
    %1181 = vmatprep.subr.mxu0 0.0
    %1182 = vmatpush2.msra.mxu0 0.0
    %1183 = vmatprep.subr.mxu0 0.0
    %1184 = vmatpush2.msra.mxu0 0.0
    %1185 = vmatprep.subr.mxu0 0.0
    %1186 = vmatpush2.msra.mxu0 0.0
    %1187 = vmatprep.subr.mxu0 0.0
    %1188 = vmatpush2.msra.mxu0 0.0
    %1189 = vmatprep.subr.mxu0 0.0
    %1190 = vmatpush2.msra.mxu0 0.0
    %1191 = vmatprep.subr.mxu0 0.0
    %1192 = vmatpush2.msra.mxu0 0.0
    %1193 = vmatprep.subr.mxu0 0.0
    %1194 = vmatpush2.msra.mxu0 0.0
    %1195 = vmatprep.subr.mxu0 0.0
    %1196 = vmatpush2.msra.mxu0 0.0
    %1197 = vmatprep.subr.mxu0 0.0
    %1198 = vmatpush2.msra.mxu0 0.0
    %1199 = vmatprep.subr.mxu0 0.0
    %1200 = vmatpush2.msra.mxu0 0.0
    %1201 = vmatprep.subr.mxu0 0.0
    %1202 = vmatpush2.msra.mxu0 0.0
    %1203 = vmatprep.mubr.f32.mxu0 0.0
    %1204 = vmatmul.mubr.f32.gmra.mxu0 %v592
    %v1205 = vpop.f32.mrf.mxu0
    %v1206 = vadd.f32 0.0, %v1205
    %v1207 = vpop.f32.mrf.mxu0
    %1208 = vmatprep.mubr.f32.mxu0 0.0
    %1209 = vmatmul.mubr.f32.gmra.mxu0 %v594
    %v1210 = vpop.f32.mrf.mxu0
    %v1211 = vadd.f32 0.0, %v1210
    %v1212 = vpop.f32.mrf.mxu0
    %1213 = vmatprep.mubr.f32.mxu0 0.0
    %1214 = vmatmul.mubr.f32.gmra.mxu0 %v596
    %v1215 = vpop.f32.mrf.mxu0
    %v1216 = vadd.f32 0.0, %v1215
    %v1217 = vpop.f32.mrf.mxu0
    %1218 = vmatprep.mubr.f32.mxu0 0.0
    %1219 = vmatmul.mubr.f32.gmra.mxu0 %v598
    %v1220 = vpop.f32.mrf.mxu0
    %v1221 = vadd.f32 0.0, %v1220
    %v1222 = vpop.f32.mrf.mxu0
    %1223 = vmatprep.mubr.f32.mxu0 0.0
    %1224 = vmatmul.mubr.f32.gmra.mxu0 %v600
    %v1225 = vpop.f32.mrf.mxu0
    %v1226 = vadd.f32 0.0, %v1225
    %v1227 = vpop.f32.mrf.mxu0
    %1228 = vmatprep.mubr.f32.mxu0 0.0
    %1229 = vmatmul.mubr.f32.gmra.mxu0 %v602
    %v1230 = vpop.f32.mrf.mxu0
    %v1231 = vadd.f32 0.0, %v1230
    %v1232 = vpop.f32.mrf.mxu0
    %1233 = vdwg.mxu0
    %v1234 = vadd.f32 %v1125, %v1206
    %v1235 = vadd.f32 %v1126, %v1211
    %v1236 = vadd.f32 %v1127, %v1216
    %v1237 = vadd.f32 %v1128, %v1221
    %v1238 = vadd.f32 %v1129, %v1226
    %v1239 = vadd.f32 %v1130, %v1231
    %v1240 = vmax.f32 %v702, %v1234
    %v1241 = vmax.f32 %v703, %v1235
    %v1242 = vmax.f32 %v704, %v1236
    %v1243 = vmax.f32 %v705, %v1237
    %v1244 = vmax.f32 %v706, %v1238
    %v1245 = vmax.f32 %v707, %v1239
    %v1252 = vcombine.high %v1240, %v1240
    %v1254 = vunpack.c.l.s4 1983009808
    %v1255 = vunpack.c.0.s8 %v1254
    %v1256 = vlaneseq
    %v1257 = vshrl.u32 %v1256, 7
    %v1258 = vsub.s32 %v1255, %v1257
    %v1259 = vrot.slane %v1240, %v1258
    %v1261 = vunpack.c.l.s4 1983009808
    %v1262 = vunpack.c.0.s8 %v1261
    %v1263 = vlaneseq
    %v1264 = vshrl.u32 %v1263, 7
    %v1265 = vsub.s32 %v1262, %v1264
    %v1266 = vrot.slane %v1252, %v1265
    %v1267 = vcombine.high %v1259, %v1259
    %v1268 = vcombine.high %v1266, %v1266
    %v1269 = vcombine.high %v1241, %v1241
    %v1271 = vunpack.c.l.s4 1983009808
    %v1272 = vunpack.c.0.s8 %v1271
    %v1273 = vlaneseq
    %v1274 = vshrl.u32 %v1273, 7
    %v1275 = vsub.s32 %v1272, %v1274
    %v1276 = vrot.slane %v1241, %v1275
    %v1278 = vunpack.c.l.s4 1983009808
    %v1279 = vunpack.c.0.s8 %v1278
    %v1280 = vlaneseq
    %v1281 = vshrl.u32 %v1280, 7
    %v1282 = vsub.s32 %v1279, %v1281
    %v1283 = vrot.slane %v1269, %v1282
    %v1284 = vcombine.high %v1276, %v1276
    %v1285 = vcombine.high %v1283, %v1283
    %v1286 = vcombine.high %v1242, %v1242
    %v1288 = vunpack.c.l.s4 1983009808
    %v1289 = vunpack.c.0.s8 %v1288
    %v1290 = vlaneseq
    %v1291 = vshrl.u32 %v1290, 7
    %v1292 = vsub.s32 %v1289, %v1291
    %v1293 = vrot.slane %v1242, %v1292
    %v1295 = vunpack.c.l.s4 1983009808
    %v1296 = vunpack.c.0.s8 %v1295
    %v1297 = vlaneseq
    %v1298 = vshrl.u32 %v1297, 7
    %v1299 = vsub.s32 %v1296, %v1298
    %v1300 = vrot.slane %v1286, %v1299
    %v1301 = vcombine.high %v1293, %v1293
    %v1302 = vcombine.high %v1300, %v1300
    %v1303 = vcombine.high %v1243, %v1243
    %v1305 = vunpack.c.l.s4 1983009808
    %v1306 = vunpack.c.0.s8 %v1305
    %v1307 = vlaneseq
    %v1308 = vshrl.u32 %v1307, 7
    %v1309 = vsub.s32 %v1306, %v1308
    %v1310 = vrot.slane %v1243, %v1309
    %v1312 = vunpack.c.l.s4 1983009808
    %v1313 = vunpack.c.0.s8 %v1312
    %v1314 = vlaneseq
    %v1315 = vshrl.u32 %v1314, 7
    %v1316 = vsub.s32 %v1313, %v1315
    %v1317 = vrot.slane %v1303, %v1316
    %v1318 = vcombine.high %v1310, %v1310
    %v1319 = vcombine.high %v1317, %v1317
    %v1320 = vcombine.high %v1244, %v1244
    %v1322 = vunpack.c.l.s4 1983009808
    %v1323 = vunpack.c.0.s8 %v1322
    %v1324 = vlaneseq
    %v1325 = vshrl.u32 %v1324, 7
    %v1326 = vsub.s32 %v1323, %v1325
    %v1327 = vrot.slane %v1244, %v1326
    %v1329 = vunpack.c.l.s4 1983009808
    %v1330 = vunpack.c.0.s8 %v1329
    %v1331 = vlaneseq
    %v1332 = vshrl.u32 %v1331, 7
    %v1333 = vsub.s32 %v1330, %v1332
    %v1334 = vrot.slane %v1320, %v1333
    %v1335 = vcombine.high %v1327, %v1327
    %v1336 = vcombine.high %v1334, %v1334
    %v1337 = vcombine.high %v1245, %v1245
    %v1339 = vunpack.c.l.s4 1983009808
    %v1340 = vunpack.c.0.s8 %v1339
    %v1341 = vlaneseq
    %v1342 = vshrl.u32 %v1341, 7
    %v1343 = vsub.s32 %v1340, %v1342
    %v1344 = vrot.slane %v1245, %v1343
    %v1346 = vunpack.c.l.s4 1983009808
    %v1347 = vunpack.c.0.s8 %v1346
    %v1348 = vlaneseq
    %v1349 = vshrl.u32 %v1348, 7
    %v1350 = vsub.s32 %v1347, %v1349
    %v1351 = vrot.slane %v1337, %v1350
    %v1352 = vcombine.high %v1344, %v1344
    %v1353 = vcombine.high %v1351, %v1351
    %v1378 = vrot.slane %v1259, 7
    %v1379 = vrot.slane %v1378, 2
    %v1380 = vrot.slane %v1267, 7
    %v1381 = vrot.slane %v1380, 2
    %v1382 = vrot.slane %v1266, 7
    %v1383 = vrot.slane %v1382, 2
    %v1384 = vrot.slane %v1268, 7
    %v1385 = vrot.slane %v1384, 2
    %v1386 = vrot.slane %v1276, 7
    %v1387 = vrot.slane %v1386, 2
    %v1388 = vrot.slane %v1284, 7
    %v1389 = vrot.slane %v1388, 2
    %v1390 = vrot.slane %v1283, 7
    %v1391 = vrot.slane %v1390, 2
    %v1392 = vrot.slane %v1285, 7
    %v1393 = vrot.slane %v1392, 2
    %v1394 = vrot.slane %v1293, 7
    %v1395 = vrot.slane %v1394, 2
    %v1396 = vrot.slane %v1301, 7
    %v1397 = vrot.slane %v1396, 2
    %v1398 = vrot.slane %v1300, 7
    %v1399 = vrot.slane %v1398, 2
    %v1400 = vrot.slane %v1302, 7
    %v1401 = vrot.slane %v1400, 2
    %v1402 = vrot.slane %v1310, 7
    %v1403 = vrot.slane %v1402, 2
    %v1404 = vrot.slane %v1318, 7
    %v1405 = vrot.slane %v1404, 2
    %v1406 = vrot.slane %v1317, 7
    %v1407 = vrot.slane %v1406, 2
    %v1408 = vrot.slane %v1319, 7
    %v1409 = vrot.slane %v1408, 2
    %v1410 = vrot.slane %v1327, 7
    %v1411 = vrot.slane %v1410, 2
    %v1412 = vrot.slane %v1335, 7
    %v1413 = vrot.slane %v1412, 2
    %v1414 = vrot.slane %v1334, 7
    %v1415 = vrot.slane %v1414, 2
    %v1416 = vrot.slane %v1336, 7
    %v1417 = vrot.slane %v1416, 2
    %v1418 = vrot.slane %v1344, 7
    %v1419 = vrot.slane %v1418, 2
    %v1420 = vrot.slane %v1352, 7
    %v1421 = vrot.slane %v1420, 2
    %v1422 = vrot.slane %v1351, 7
    %v1423 = vrot.slane %v1422, 2
    %v1424 = vrot.slane %v1353, 7
    %v1425 = vrot.slane %v1424, 2
    %v1450 = vmax.f32 %v1259, %v1379
    %v1451 = vmax.f32 %v1267, %v1381
    %v1452 = vmax.f32 %v1266, %v1383
    %v1453 = vmax.f32 %v1268, %v1385
    %v1454 = vmax.f32 %v1276, %v1387
    %v1455 = vmax.f32 %v1284, %v1389
    %v1456 = vmax.f32 %v1283, %v1391
    %v1457 = vmax.f32 %v1285, %v1393
    %v1458 = vmax.f32 %v1293, %v1395
    %v1459 = vmax.f32 %v1301, %v1397
    %v1460 = vmax.f32 %v1300, %v1399
    %v1461 = vmax.f32 %v1302, %v1401
    %v1462 = vmax.f32 %v1310, %v1403
    %v1463 = vmax.f32 %v1318, %v1405
    %v1464 = vmax.f32 %v1317, %v1407
    %v1465 = vmax.f32 %v1319, %v1409
    %v1466 = vmax.f32 %v1327, %v1411
    %v1467 = vmax.f32 %v1335, %v1413
    %v1468 = vmax.f32 %v1334, %v1415
    %v1469 = vmax.f32 %v1336, %v1417
    %v1470 = vmax.f32 %v1344, %v1419
    %v1471 = vmax.f32 %v1352, %v1421
    %v1472 = vmax.f32 %v1351, %v1423
    %v1473 = vmax.f32 %v1353, %v1425
    %v1474 = vld [vmem:[%s3] sm:$0x1]
    %v1476 = vlaneseq
    %v1477 = vshrl.u32 %v1476, 7
    %v1478 = vsub.s32 0, %v1477
    %v1479 = vrot.slane %v1474, %v1478
    %v1480 = vcombine.high %v1479, %v1479
    %v1482 = vunpack.c.l.s4 1983009808
    %v1483 = vunpack.c.0.s8 %v1482
    %v1484 = vlaneseq
    %v1485 = vshrl.u32 %v1484, 7
    %v1486 = vsub.s32 %v1483, %v1485
    %v1487 = vrot.slane %v1479, %v1486
    %v1489 = vunpack.c.l.s4 1983009808
    %v1490 = vunpack.c.0.s8 %v1489
    %v1491 = vlaneseq
    %v1492 = vshrl.u32 %v1491, 7
    %v1493 = vsub.s32 %v1490, %v1492
    %v1494 = vrot.slane %v1480, %v1493
    %v1495 = vcombine.high %v1487, %v1487
    %v1496 = vcombine.high %v1494, %v1494
    %v1497 = vrot.slane %v1487, 1
    %v1498 = vrot.slane %v1495, 1
    %v1499 = vrot.slane %v1494, 1
    %v1500 = vrot.slane %v1496, 1
    %v1509 = vadd.f32 %v1450, %v1487
    %v1510 = vadd.f32 %v1451, %v1497
    %v1511 = vadd.f32 %v1452, %v1495
    %v1512 = vadd.f32 %v1453, %v1498
    %v1513 = vadd.f32 %v1454, %v1494
    %v1514 = vadd.f32 %v1455, %v1499
    %v1515 = vadd.f32 %v1456, %v1496
    %v1516 = vadd.f32 %v1457, %v1500
    %v1517 = vadd.f32 %v1458, %v1487
    %v1518 = vadd.f32 %v1459, %v1497
    %v1519 = vadd.f32 %v1460, %v1495
    %v1520 = vadd.f32 %v1461, %v1498
    %v1521 = vadd.f32 %v1462, %v1487
    %v1522 = vadd.f32 %v1463, %v1497
    %v1523 = vadd.f32 %v1464, %v1495
    %v1524 = vadd.f32 %v1465, %v1498
    %v1525 = vadd.f32 %v1466, %v1494
    %v1526 = vadd.f32 %v1467, %v1499
    %v1527 = vadd.f32 %v1468, %v1496
    %v1528 = vadd.f32 %v1469, %v1500
    %v1529 = vadd.f32 %v1470, %v1487
    %v1530 = vadd.f32 %v1471, %v1497
    %v1531 = vadd.f32 %v1472, %v1495
    %v1532 = vadd.f32 %v1473, %v1498
    %v1533 = vmax.f32 %v1509, 0.0
    %v1534 = vmax.f32 %v1510, 0.0
    %v1535 = vmax.f32 %v1511, 0.0
    %v1536 = vmax.f32 %v1512, 0.0
    %v1537 = vmax.f32 %v1513, 0.0
    %v1538 = vmax.f32 %v1514, 0.0
    %v1539 = vmax.f32 %v1515, 0.0
    %v1540 = vmax.f32 %v1516, 0.0
    %v1541 = vmax.f32 %v1517, 0.0
    %v1542 = vmax.f32 %v1518, 0.0
    %v1543 = vmax.f32 %v1519, 0.0
    %v1544 = vmax.f32 %v1520, 0.0
    %v1545 = vmax.f32 %v1521, 0.0
    %v1546 = vmax.f32 %v1522, 0.0
    %v1547 = vmax.f32 %v1523, 0.0
    %v1548 = vmax.f32 %v1524, 0.0
    %v1549 = vmax.f32 %v1525, 0.0
    %v1550 = vmax.f32 %v1526, 0.0
    %v1551 = vmax.f32 %v1527, 0.0
    %v1552 = vmax.f32 %v1528, 0.0
    %v1553 = vmax.f32 %v1529, 0.0
    %v1554 = vmax.f32 %v1530, 0.0
    %v1555 = vmax.f32 %v1531, 0.0
    %v1556 = vmax.f32 %v1532, 0.0
    %v1557 = vld [vmem:[%s4] sm:$0xff]
    %v1558 = vld [vmem:[%s4 + $0x8] sm:$0xff]
    %v1559 = vld [vmem:[%s4 + $0x10] sm:$0xff]
    %v1560 = vld [vmem:[%s4 + $0x18] sm:$0xff]
    %v1561 = vld [vmem:[%s4 + $0x20] sm:$0xff]
    %v1562 = vld [vmem:[%s4 + $0x28] sm:$0xff]
    %v1563 = vld [vmem:[%s4 + $0x30] sm:$0xff]
    %v1564 = vld [vmem:[%s4 + $0x38] sm:$0xff]
    %v1565 = vld [vmem:[%s4 + $0x40] sm:$0xff]
    %v1566 = vld [vmem:[%s4 + $0x48] sm:$0xff]
    %v1567 = vld [vmem:[%s4 + $0x50] sm:$0xff]
    %v1568 = vld [vmem:[%s4 + $0x58] sm:$0xff]
    %v1569 = vld [vmem:[%s4 + $0x60] sm:$0xff]
    %v1570 = vld [vmem:[%s4 + $0x68] sm:$0xff]
    %v1571 = vld [vmem:[%s4 + $0x70] sm:$0xff]
    %s1572 = scalar_lea.vmem %s4, 120
    %v1573 = vld [vmem:[%s1572] sm:$0xff]
    %v1574 = vld [vmem:[%s1572 + $0x8] sm:$0xff]
    %v1575 = vld [vmem:[%s1572 + $0x10] sm:$0xff]
    %v1576 = vld [vmem:[%s1572 + $0x18] sm:$0xff]
    %v1577 = vld [vmem:[%s1572 + $0x20] sm:$0xff]
    %v1578 = vld [vmem:[%s1572 + $0x28] sm:$0xff]
    %v1579 = vld [vmem:[%s1572 + $0x30] sm:$0xff]
    %v1580 = vld [vmem:[%s1572 + $0x38] sm:$0xff]
    %v1581 = vld [vmem:[%s1572 + $0x40] sm:$0xff]
    %v1582 = vld [vmem:[%s1572 + $0x48] sm:$0xff]
    %v1583 = vld [vmem:[%s1572 + $0x50] sm:$0xff]
    %v1584 = vld [vmem:[%s1572 + $0x58] sm:$0xff]
    %v1585 = vld [vmem:[%s1572 + $0x60] sm:$0xff]
    %v1586 = vld [vmem:[%s1572 + $0x68] sm:$0xff]
    %v1587 = vld [vmem:[%s1572 + $0x70] sm:$0xff]
    %v1604 = vlaneseq
    %v1605 = vshrl.u32 %v1604, 7
    %v1606 = vsub.s32 0, %v1605
    %v1607 = vrot.slane %v1534, %v1606
    %v1608 = vlaneseq
    %v1609 = vshrl.u32 %v1608, 7
    %v1610 = vsub.s32 0, %v1609
    %v1611 = vrot.slane %v1535, %v1610
    %v1612 = vlaneseq
    %v1613 = vshrl.u32 %v1612, 7
    %v1614 = vsub.s32 0, %v1613
    %v1615 = vrot.slane %v1536, %v1614
    %v1616 = vlaneseq
    %v1617 = vshrl.u32 %v1616, 7
    %v1618 = vsub.s32 0, %v1617
    %v1619 = vrot.slane %v1537, %v1618
    %v1620 = vlaneseq
    %v1621 = vshrl.u32 %v1620, 7
    %v1622 = vsub.s32 0, %v1621
    %v1623 = vrot.slane %v1538, %v1622
    %v1624 = vlaneseq
    %v1625 = vshrl.u32 %v1624, 7
    %v1626 = vsub.s32 0, %v1625
    %v1627 = vrot.slane %v1539, %v1626
    %v1628 = vlaneseq
    %v1629 = vshrl.u32 %v1628, 7
    %v1630 = vsub.s32 0, %v1629
    %v1631 = vrot.slane %v1540, %v1630
    %v1632 = vlaneseq
    %v1633 = vshrl.u32 %v1632, 7
    %v1634 = vsub.s32 0, %v1633
    %v1635 = vrot.slane %v1541, %v1634
    %v1636 = vlaneseq
    %v1637 = vshrl.u32 %v1636, 7
    %v1638 = vsub.s32 0, %v1637
    %v1639 = vrot.slane %v1546, %v1638
    %v1640 = vlaneseq
    %v1641 = vshrl.u32 %v1640, 7
    %v1642 = vsub.s32 0, %v1641
    %v1643 = vrot.slane %v1547, %v1642
    %v1644 = vlaneseq
    %v1645 = vshrl.u32 %v1644, 7
    %v1646 = vsub.s32 0, %v1645
    %v1647 = vrot.slane %v1548, %v1646
    %v1648 = vlaneseq
    %v1649 = vshrl.u32 %v1648, 7
    %v1650 = vsub.s32 0, %v1649
    %v1651 = vrot.slane %v1549, %v1650
    %v1652 = vlaneseq
    %v1653 = vshrl.u32 %v1652, 7
    %v1654 = vsub.s32 0, %v1653
    %v1655 = vrot.slane %v1550, %v1654
    %v1656 = vlaneseq
    %v1657 = vshrl.u32 %v1656, 7
    %v1658 = vsub.s32 0, %v1657
    %v1659 = vrot.slane %v1551, %v1658
    %v1660 = vlaneseq
    %v1661 = vshrl.u32 %v1660, 7
    %v1662 = vsub.s32 0, %v1661
    %v1663 = vrot.slane %v1552, %v1662
    %v1664 = vlaneseq
    %v1665 = vshrl.u32 %v1664, 7
    %v1666 = vsub.s32 0, %v1665
    %v1667 = vrot.slane %v1553, %v1666
    %vm1668 = vcmask 1041409
    %v1669 = vsel %vm1668, %v1611, %v1607
    %vm1670 = vcmask 1042434
    %v1671 = vsel %vm1670, %v1615, %v1669
    %vm1672 = vcmask 1043459
    %v1673 = vsel %vm1672, %v1619, %v1671
    %vm1674 = vcmask 1044484
    %v1675 = vsel %vm1674, %v1623, %v1673
    %vm1676 = vcmask 1045509
    %v1677 = vsel %vm1676, %v1627, %v1675
    %vm1678 = vcmask 1046534
    %v1679 = vsel %vm1678, %v1631, %v1677
    %vm1680 = vcmask 1047559
    %v1681 = vsel %vm1680, %v1635, %v1679
    %v1682 = vsel %vm1668, %v1643, %v1639
    %v1683 = vsel %vm1670, %v1647, %v1682
    %v1684 = vsel %vm1672, %v1651, %v1683
    %v1685 = vsel %vm1674, %v1655, %v1684
    %v1686 = vsel %vm1676, %v1659, %v1685
    %v1687 = vsel %vm1678, %v1663, %v1686
    %v1688 = vsel %vm1680, %v1667, %v1687
    %vm1689 = vcmask 982016
    %v1690 = vsel %vm1689, %v1681, 0
    %v1692 = vsel %vm1689, %v1688, 0
    %1694 = vmatprep.subr.mxu0 0.0
    %1695 = vmatpush1.msra.mxu0 0.0
    %1696 = vmatprep.subr.mxu0 0.0
    %1697 = vmatpush1.msra.mxu0 %v1587
    %1698 = vmatprep.subr.mxu0 0.0
    %1699 = vmatpush1.msra.mxu0 %v1586
    %1700 = vmatprep.subr.mxu0 0.0
    %1701 = vmatpush1.msra.mxu0 %v1585
    %1702 = vmatprep.subr.mxu0 0.0
    %1703 = vmatpush1.msra.mxu0 %v1584
    %1704 = vmatprep.subr.mxu0 0.0
    %1705 = vmatpush1.msra.mxu0 %v1583
    %1706 = vmatprep.subr.mxu0 0.0
    %1707 = vmatpush1.msra.mxu0 %v1582
    %1708 = vmatprep.subr.mxu0 0.0
    %1709 = vmatpush1.msra.mxu0 %v1581
    %1710 = vmatprep.subr.mxu0 0.0
    %1711 = vmatpush1.msra.mxu0 %v1580
    %1712 = vmatprep.subr.mxu0 0.0
    %1713 = vmatpush1.msra.mxu0 %v1579
    %1714 = vmatprep.subr.mxu0 0.0
    %1715 = vmatpush1.msra.mxu0 %v1578
    %1716 = vmatprep.subr.mxu0 0.0
    %1717 = vmatpush1.msra.mxu0 %v1577
    %1718 = vmatprep.subr.mxu0 0.0
    %1719 = vmatpush1.msra.mxu0 %v1576
    %1720 = vmatprep.subr.mxu0 0.0
    %1721 = vmatpush1.msra.mxu0 %v1575
    %1722 = vmatprep.subr.mxu0 0.0
    %1723 = vmatpush1.msra.mxu0 %v1574
    %1724 = vmatprep.subr.mxu0 0.0
    %1725 = vmatpush1.msra.mxu0 %v1573
    %1726 = vmatprep.subr.mxu0 0.0
    %1727 = vmatpush2.msra.mxu0 0.0
    %1728 = vmatprep.subr.mxu0 0.0
    %1729 = vmatpush2.msra.mxu0 0.0
    %1730 = vmatprep.subr.mxu0 0.0
    %1731 = vmatpush2.msra.mxu0 0.0
    %1732 = vmatprep.subr.mxu0 0.0
    %1733 = vmatpush2.msra.mxu0 0.0
    %1734 = vmatprep.subr.mxu0 0.0
    %1735 = vmatpush2.msra.mxu0 0.0
    %1736 = vmatprep.subr.mxu0 0.0
    %1737 = vmatpush2.msra.mxu0 0.0
    %1738 = vmatprep.subr.mxu0 0.0
    %1739 = vmatpush2.msra.mxu0 0.0
    %1740 = vmatprep.subr.mxu0 0.0
    %1741 = vmatpush2.msra.mxu0 0.0
    %1742 = vmatprep.subr.mxu0 0.0
    %1743 = vmatpush2.msra.mxu0 0.0
    %1744 = vmatprep.subr.mxu0 0.0
    %1745 = vmatpush2.msra.mxu0 0.0
    %1746 = vmatprep.subr.mxu0 0.0
    %1747 = vmatpush2.msra.mxu0 0.0
    %1748 = vmatprep.subr.mxu0 0.0
    %1749 = vmatpush2.msra.mxu0 0.0
    %1750 = vmatprep.subr.mxu0 0.0
    %1751 = vmatpush2.msra.mxu0 0.0
    %1752 = vmatprep.subr.mxu0 0.0
    %1753 = vmatpush2.msra.mxu0 0.0
    %1754 = vmatprep.subr.mxu0 0.0
    %1755 = vmatpush2.msra.mxu0 0.0
    %1756 = vmatprep.subr.mxu0 0.0
    %1757 = vmatpush2.msra.mxu0 0.0
    %1758 = vmatprep.mubr.f32.mxu0 0.0
    %1759 = vmatmul.mubr.f32.gmra.mxu0 %v1690
    %v1760 = vpop.f32.mrf.mxu0
    %v1761 = vadd.f32 0.0, %v1760
    %v1762 = vpop.f32.mrf.mxu0
    %1763 = vmatprep.mubr.f32.mxu0 0.0
    %1764 = vmatmul.mubr.f32.gmra.mxu0 %v1692
    %v1765 = vpop.f32.mrf.mxu0
    %v1766 = vadd.f32 0.0, %v1765
    %v1767 = vpop.f32.mrf.mxu0
    %1768 = vdwg.mxu0
    %v1771 = vlaneseq
    %v1772 = vshrl.u32 %v1771, 7
    %v1773 = vsub.s32 0, %v1772
    %v1774 = vrot.slane %v1533, %v1773
    %v1775 = vlaneseq
    %v1776 = vshrl.u32 %v1775, 7
    %v1777 = vsub.s32 0, %v1776
    %v1778 = vrot.slane %v1545, %v1777
    %v1779 = vsel %vm1668, %v1607, %v1774
    %v1780 = vsel %vm1670, %v1611, %v1779
    %v1781 = vsel %vm1672, %v1615, %v1780
    %v1782 = vsel %vm1674, %v1619, %v1781
    %v1783 = vsel %vm1676, %v1623, %v1782
    %v1784 = vsel %vm1678, %v1627, %v1783
    %v1785 = vsel %vm1680, %v1631, %v1784
    %v1786 = vsel %vm1668, %v1639, %v1778
    %v1787 = vsel %vm1670, %v1643, %v1786
    %v1788 = vsel %vm1672, %v1647, %v1787
    %v1789 = vsel %vm1674, %v1651, %v1788
    %v1790 = vsel %vm1676, %v1655, %v1789
    %v1791 = vsel %vm1678, %v1659, %v1790
    %v1792 = vsel %vm1680, %v1663, %v1791
    %v1793 = vsel %vm1689, %v1785, 0
    %v1795 = vsel %vm1689, %v1792, 0
    %1797 = vmatprep.subr.mxu0 0.0
    %1798 = vmatpush1.msra.mxu0 0.0
    %1799 = vmatprep.subr.mxu0 0.0
    %1800 = vmatpush1.msra.mxu0 %v1571
    %1801 = vmatprep.subr.mxu0 0.0
    %1802 = vmatpush1.msra.mxu0 %v1570
    %1803 = vmatprep.subr.mxu0 0.0
    %1804 = vmatpush1.msra.mxu0 %v1569
    %1805 = vmatprep.subr.mxu0 0.0
    %1806 = vmatpush1.msra.mxu0 %v1568
    %1807 = vmatprep.subr.mxu0 0.0
    %1808 = vmatpush1.msra.mxu0 %v1567
    %1809 = vmatprep.subr.mxu0 0.0
    %1810 = vmatpush1.msra.mxu0 %v1566
    %1811 = vmatprep.subr.mxu0 0.0
    %1812 = vmatpush1.msra.mxu0 %v1565
    %1813 = vmatprep.subr.mxu0 0.0
    %1814 = vmatpush1.msra.mxu0 %v1564
    %1815 = vmatprep.subr.mxu0 0.0
    %1816 = vmatpush1.msra.mxu0 %v1563
    %1817 = vmatprep.subr.mxu0 0.0
    %1818 = vmatpush1.msra.mxu0 %v1562
    %1819 = vmatprep.subr.mxu0 0.0
    %1820 = vmatpush1.msra.mxu0 %v1561
    %1821 = vmatprep.subr.mxu0 0.0
    %1822 = vmatpush1.msra.mxu0 %v1560
    %1823 = vmatprep.subr.mxu0 0.0
    %1824 = vmatpush1.msra.mxu0 %v1559
    %1825 = vmatprep.subr.mxu0 0.0
    %1826 = vmatpush1.msra.mxu0 %v1558
    %1827 = vmatprep.subr.mxu0 0.0
    %1828 = vmatpush1.msra.mxu0 %v1557
    %1829 = vmatprep.subr.mxu0 0.0
    %1830 = vmatpush2.msra.mxu0 0.0
    %1831 = vmatprep.subr.mxu0 0.0
    %1832 = vmatpush2.msra.mxu0 0.0
    %1833 = vmatprep.subr.mxu0 0.0
    %1834 = vmatpush2.msra.mxu0 0.0
    %1835 = vmatprep.subr.mxu0 0.0
    %1836 = vmatpush2.msra.mxu0 0.0
    %1837 = vmatprep.subr.mxu0 0.0
    %1838 = vmatpush2.msra.mxu0 0.0
    %1839 = vmatprep.subr.mxu0 0.0
    %1840 = vmatpush2.msra.mxu0 0.0
    %1841 = vmatprep.subr.mxu0 0.0
    %1842 = vmatpush2.msra.mxu0 0.0
    %1843 = vmatprep.subr.mxu0 0.0
    %1844 = vmatpush2.msra.mxu0 0.0
    %1845 = vmatprep.subr.mxu0 0.0
    %1846 = vmatpush2.msra.mxu0 0.0
    %1847 = vmatprep.subr.mxu0 0.0
    %1848 = vmatpush2.msra.mxu0 0.0
    %1849 = vmatprep.subr.mxu0 0.0
    %1850 = vmatpush2.msra.mxu0 0.0
    %1851 = vmatprep.subr.mxu0 0.0
    %1852 = vmatpush2.msra.mxu0 0.0
    %1853 = vmatprep.subr.mxu0 0.0
    %1854 = vmatpush2.msra.mxu0 0.0
    %1855 = vmatprep.subr.mxu0 0.0
    %1856 = vmatpush2.msra.mxu0 0.0
    %1857 = vmatprep.subr.mxu0 0.0
    %1858 = vmatpush2.msra.mxu0 0.0
    %1859 = vmatprep.subr.mxu0 0.0
    %1860 = vmatpush2.msra.mxu0 0.0
    %1861 = vmatprep.mubr.f32.mxu0 0.0
    %1862 = vmatmul.mubr.f32.gmra.mxu0 %v1793
    %v1863 = vpop.f32.mrf.mxu0
    %v1864 = vadd.f32 %v1761, %v1863
    %v1865 = vpop.f32.mrf.mxu0
    %1866 = vmatprep.mubr.f32.mxu0 0.0
    %1867 = vmatmul.mubr.f32.gmra.mxu0 %v1795
    %v1868 = vpop.f32.mrf.mxu0
    %v1869 = vadd.f32 %v1766, %v1868
    %v1870 = vpop.f32.mrf.mxu0
    %1871 = vdwg.mxu0
    %s1872 = scalar_lea.vmem %s4, 240
    %v1873 = vld [vmem:[%s1872] sm:$0xff]
    %v1874 = vld [vmem:[%s1872 + $0x8] sm:$0xff]
    %v1875 = vld [vmem:[%s1872 + $0x10] sm:$0xff]
    %v1876 = vld [vmem:[%s1872 + $0x18] sm:$0xff]
    %v1877 = vld [vmem:[%s1872 + $0x20] sm:$0xff]
    %v1878 = vld [vmem:[%s1872 + $0x28] sm:$0xff]
    %v1879 = vld [vmem:[%s1872 + $0x30] sm:$0xff]
    %v1880 = vld [vmem:[%s1872 + $0x38] sm:$0xff]
    %v1881 = vld [vmem:[%s1872 + $0x40] sm:$0xff]
    %v1882 = vld [vmem:[%s1872 + $0x48] sm:$0xff]
    %v1883 = vld [vmem:[%s1872 + $0x50] sm:$0xff]
    %v1884 = vld [vmem:[%s1872 + $0x58] sm:$0xff]
    %v1885 = vld [vmem:[%s1872 + $0x60] sm:$0xff]
    %v1886 = vld [vmem:[%s1872 + $0x68] sm:$0xff]
    %v1887 = vld [vmem:[%s1872 + $0x70] sm:$0xff]
    %v1890 = vlaneseq
    %v1891 = vshrl.u32 %v1890, 7
    %v1892 = vsub.s32 0, %v1891
    %v1893 = vrot.slane %v1542, %v1892
    %v1894 = vlaneseq
    %v1895 = vshrl.u32 %v1894, 7
    %v1896 = vsub.s32 0, %v1895
    %v1897 = vrot.slane %v1554, %v1896
    %v1898 = vsel %vm1668, %v1615, %v1611
    %v1899 = vsel %vm1670, %v1619, %v1898
    %v1900 = vsel %vm1672, %v1623, %v1899
    %v1901 = vsel %vm1674, %v1627, %v1900
    %v1902 = vsel %vm1676, %v1631, %v1901
    %v1903 = vsel %vm1678, %v1635, %v1902
    %v1904 = vsel %vm1680, %v1893, %v1903
    %v1905 = vsel %vm1668, %v1647, %v1643
    %v1906 = vsel %vm1670, %v1651, %v1905
    %v1907 = vsel %vm1672, %v1655, %v1906
    %v1908 = vsel %vm1674, %v1659, %v1907
    %v1909 = vsel %vm1676, %v1663, %v1908
    %v1910 = vsel %vm1678, %v1667, %v1909
    %v1911 = vsel %vm1680, %v1897, %v1910
    %v1912 = vsel %vm1689, %v1904, 0
    %v1914 = vsel %vm1689, %v1911, 0
    %1916 = vmatprep.subr.mxu0 0.0
    %1917 = vmatpush1.msra.mxu0 0.0
    %1918 = vmatprep.subr.mxu0 0.0
    %1919 = vmatpush1.msra.mxu0 %v1887
    %1920 = vmatprep.subr.mxu0 0.0
    %1921 = vmatpush1.msra.mxu0 %v1886
    %1922 = vmatprep.subr.mxu0 0.0
    %1923 = vmatpush1.msra.mxu0 %v1885
    %1924 = vmatprep.subr.mxu0 0.0
    %1925 = vmatpush1.msra.mxu0 %v1884
    %1926 = vmatprep.subr.mxu0 0.0
    %1927 = vmatpush1.msra.mxu0 %v1883
    %1928 = vmatprep.subr.mxu0 0.0
    %1929 = vmatpush1.msra.mxu0 %v1882
    %1930 = vmatprep.subr.mxu0 0.0
    %1931 = vmatpush1.msra.mxu0 %v1881
    %1932 = vmatprep.subr.mxu0 0.0
    %1933 = vmatpush1.msra.mxu0 %v1880
    %1934 = vmatprep.subr.mxu0 0.0
    %1935 = vmatpush1.msra.mxu0 %v1879
    %1936 = vmatprep.subr.mxu0 0.0
    %1937 = vmatpush1.msra.mxu0 %v1878
    %1938 = vmatprep.subr.mxu0 0.0
    %1939 = vmatpush1.msra.mxu0 %v1877
    %1940 = vmatprep.subr.mxu0 0.0
    %1941 = vmatpush1.msra.mxu0 %v1876
    %1942 = vmatprep.subr.mxu0 0.0
    %1943 = vmatpush1.msra.mxu0 %v1875
    %1944 = vmatprep.subr.mxu0 0.0
    %1945 = vmatpush1.msra.mxu0 %v1874
    %1946 = vmatprep.subr.mxu0 0.0
    %1947 = vmatpush1.msra.mxu0 %v1873
    %1948 = vmatprep.subr.mxu0 0.0
    %1949 = vmatpush2.msra.mxu0 0.0
    %1950 = vmatprep.subr.mxu0 0.0
    %1951 = vmatpush2.msra.mxu0 0.0
    %1952 = vmatprep.subr.mxu0 0.0
    %1953 = vmatpush2.msra.mxu0 0.0
    %1954 = vmatprep.subr.mxu0 0.0
    %1955 = vmatpush2.msra.mxu0 0.0
    %1956 = vmatprep.subr.mxu0 0.0
    %1957 = vmatpush2.msra.mxu0 0.0
    %1958 = vmatprep.subr.mxu0 0.0
    %1959 = vmatpush2.msra.mxu0 0.0
    %1960 = vmatprep.subr.mxu0 0.0
    %1961 = vmatpush2.msra.mxu0 0.0
    %1962 = vmatprep.subr.mxu0 0.0
    %1963 = vmatpush2.msra.mxu0 0.0
    %1964 = vmatprep.subr.mxu0 0.0
    %1965 = vmatpush2.msra.mxu0 0.0
    %1966 = vmatprep.subr.mxu0 0.0
    %1967 = vmatpush2.msra.mxu0 0.0
    %1968 = vmatprep.subr.mxu0 0.0
    %1969 = vmatpush2.msra.mxu0 0.0
    %1970 = vmatprep.subr.mxu0 0.0
    %1971 = vmatpush2.msra.mxu0 0.0
    %1972 = vmatprep.subr.mxu0 0.0
    %1973 = vmatpush2.msra.mxu0 0.0
    %1974 = vmatprep.subr.mxu0 0.0
    %1975 = vmatpush2.msra.mxu0 0.0
    %1976 = vmatprep.subr.mxu0 0.0
    %1977 = vmatpush2.msra.mxu0 0.0
    %1978 = vmatprep.subr.mxu0 0.0
    %1979 = vmatpush2.msra.mxu0 0.0
    %1980 = vmatprep.mubr.f32.mxu0 0.0
    %1981 = vmatmul.mubr.f32.gmra.mxu0 %v1912
    %v1982 = vpop.f32.mrf.mxu0
    %v1983 = vadd.f32 0.0, %v1982
    %v1984 = vpop.f32.mrf.mxu0
    %1985 = vmatprep.mubr.f32.mxu0 0.0
    %1986 = vmatmul.mubr.f32.gmra.mxu0 %v1914
    %v1987 = vpop.f32.mrf.mxu0
    %v1988 = vadd.f32 0.0, %v1987
    %v1989 = vpop.f32.mrf.mxu0
    %1990 = vdwg.mxu0
    %v1991 = vadd.f32 %v1864, %v1983
    %v1992 = vadd.f32 %v1869, %v1988
    %s1993 = scalar_lea.vmem %s4, 360
    %v1994 = vld [vmem:[%s1993] sm:$0xff]
    %v1995 = vld [vmem:[%s1993 + $0x8] sm:$0xff]
    %v1996 = vld [vmem:[%s1993 + $0x10] sm:$0xff]
    %v1997 = vld [vmem:[%s1993 + $0x18] sm:$0xff]
    %v1998 = vld [vmem:[%s1993 + $0x20] sm:$0xff]
    %v1999 = vld [vmem:[%s1993 + $0x28] sm:$0xff]
    %v2000 = vld [vmem:[%s1993 + $0x30] sm:$0xff]
    %v2001 = vld [vmem:[%s1993 + $0x38] sm:$0xff]
    %v2002 = vld [vmem:[%s1993 + $0x40] sm:$0xff]
    %v2003 = vld [vmem:[%s1993 + $0x48] sm:$0xff]
    %v2004 = vld [vmem:[%s1993 + $0x50] sm:$0xff]
    %v2005 = vld [vmem:[%s1993 + $0x58] sm:$0xff]
    %v2006 = vld [vmem:[%s1993 + $0x60] sm:$0xff]
    %v2007 = vld [vmem:[%s1993 + $0x68] sm:$0xff]
    %v2008 = vld [vmem:[%s1993 + $0x70] sm:$0xff]
    %v2011 = vlaneseq
    %v2012 = vshrl.u32 %v2011, 7
    %v2013 = vsub.s32 0, %v2012
    %v2014 = vrot.slane %v1543, %v2013
    %v2015 = vlaneseq
    %v2016 = vshrl.u32 %v2015, 7
    %v2017 = vsub.s32 0, %v2016
    %v2018 = vrot.slane %v1555, %v2017
    %v2019 = vsel %vm1668, %v1619, %v1615
    %v2020 = vsel %vm1670, %v1623, %v2019
    %v2021 = vsel %vm1672, %v1627, %v2020
    %v2022 = vsel %vm1674, %v1631, %v2021
    %v2023 = vsel %vm1676, %v1635, %v2022
    %v2024 = vsel %vm1678, %v1893, %v2023
    %v2025 = vsel %vm1680, %v2014, %v2024
    %v2026 = vsel %vm1668, %v1651, %v1647
    %v2027 = vsel %vm1670, %v1655, %v2026
    %v2028 = vsel %vm1672, %v1659, %v2027
    %v2029 = vsel %vm1674, %v1663, %v2028
    %v2030 = vsel %vm1676, %v1667, %v2029
    %v2031 = vsel %vm1678, %v1897, %v2030
    %v2032 = vsel %vm1680, %v2018, %v2031
    %v2033 = vsel %vm1689, %v2025, 0
    %v2035 = vsel %vm1689, %v2032, 0
    %2037 = vmatprep.subr.mxu0 0.0
    %2038 = vmatpush1.msra.mxu0 0.0
    %2039 = vmatprep.subr.mxu0 0.0
    %2040 = vmatpush1.msra.mxu0 %v2008
    %2041 = vmatprep.subr.mxu0 0.0
    %2042 = vmatpush1.msra.mxu0 %v2007
    %2043 = vmatprep.subr.mxu0 0.0
    %2044 = vmatpush1.msra.mxu0 %v2006
    %2045 = vmatprep.subr.mxu0 0.0
    %2046 = vmatpush1.msra.mxu0 %v2005
    %2047 = vmatprep.subr.mxu0 0.0
    %2048 = vmatpush1.msra.mxu0 %v2004
    %2049 = vmatprep.subr.mxu0 0.0
    %2050 = vmatpush1.msra.mxu0 %v2003
    %2051 = vmatprep.subr.mxu0 0.0
    %2052 = vmatpush1.msra.mxu0 %v2002
    %2053 = vmatprep.subr.mxu0 0.0
    %2054 = vmatpush1.msra.mxu0 %v2001
    %2055 = vmatprep.subr.mxu0 0.0
    %2056 = vmatpush1.msra.mxu0 %v2000
    %2057 = vmatprep.subr.mxu0 0.0
    %2058 = vmatpush1.msra.mxu0 %v1999
    %2059 = vmatprep.subr.mxu0 0.0
    %2060 = vmatpush1.msra.mxu0 %v1998
    %2061 = vmatprep.subr.mxu0 0.0
    %2062 = vmatpush1.msra.mxu0 %v1997
    %2063 = vmatprep.subr.mxu0 0.0
    %2064 = vmatpush1.msra.mxu0 %v1996
    %2065 = vmatprep.subr.mxu0 0.0
    %2066 = vmatpush1.msra.mxu0 %v1995
    %2067 = vmatprep.subr.mxu0 0.0
    %2068 = vmatpush1.msra.mxu0 %v1994
    %2069 = vmatprep.subr.mxu0 0.0
    %2070 = vmatpush2.msra.mxu0 0.0
    %2071 = vmatprep.subr.mxu0 0.0
    %2072 = vmatpush2.msra.mxu0 0.0
    %2073 = vmatprep.subr.mxu0 0.0
    %2074 = vmatpush2.msra.mxu0 0.0
    %2075 = vmatprep.subr.mxu0 0.0
    %2076 = vmatpush2.msra.mxu0 0.0
    %2077 = vmatprep.subr.mxu0 0.0
    %2078 = vmatpush2.msra.mxu0 0.0
    %2079 = vmatprep.subr.mxu0 0.0
    %2080 = vmatpush2.msra.mxu0 0.0
    %2081 = vmatprep.subr.mxu0 0.0
    %2082 = vmatpush2.msra.mxu0 0.0
    %2083 = vmatprep.subr.mxu0 0.0
    %2084 = vmatpush2.msra.mxu0 0.0
    %2085 = vmatprep.subr.mxu0 0.0
    %2086 = vmatpush2.msra.mxu0 0.0
    %2087 = vmatprep.subr.mxu0 0.0
    %2088 = vmatpush2.msra.mxu0 0.0
    %2089 = vmatprep.subr.mxu0 0.0
    %2090 = vmatpush2.msra.mxu0 0.0
    %2091 = vmatprep.subr.mxu0 0.0
    %2092 = vmatpush2.msra.mxu0 0.0
    %2093 = vmatprep.subr.mxu0 0.0
    %2094 = vmatpush2.msra.mxu0 0.0
    %2095 = vmatprep.subr.mxu0 0.0
    %2096 = vmatpush2.msra.mxu0 0.0
    %2097 = vmatprep.subr.mxu0 0.0
    %2098 = vmatpush2.msra.mxu0 0.0
    %2099 = vmatprep.subr.mxu0 0.0
    %2100 = vmatpush2.msra.mxu0 0.0
    %2101 = vmatprep.mubr.f32.mxu0 0.0
    %2102 = vmatmul.mubr.f32.gmra.mxu0 %v2033
    %v2103 = vpop.f32.mrf.mxu0
    %v2104 = vadd.f32 0.0, %v2103
    %v2105 = vpop.f32.mrf.mxu0
    %2106 = vmatprep.mubr.f32.mxu0 0.0
    %2107 = vmatmul.mubr.f32.gmra.mxu0 %v2035
    %v2108 = vpop.f32.mrf.mxu0
    %v2109 = vadd.f32 0.0, %v2108
    %v2110 = vpop.f32.mrf.mxu0
    %2111 = vdwg.mxu0
    %v2112 = vadd.f32 %v1991, %v2104
    %v2113 = vadd.f32 %v1992, %v2109
    %s2114 = scalar_lea.vmem %s4, 480
    %v2115 = vld [vmem:[%s2114] sm:$0xff]
    %v2116 = vld [vmem:[%s2114 + $0x8] sm:$0xff]
    %v2117 = vld [vmem:[%s2114 + $0x10] sm:$0xff]
    %v2118 = vld [vmem:[%s2114 + $0x18] sm:$0xff]
    %v2119 = vld [vmem:[%s2114 + $0x20] sm:$0xff]
    %v2120 = vld [vmem:[%s2114 + $0x28] sm:$0xff]
    %v2121 = vld [vmem:[%s2114 + $0x30] sm:$0xff]
    %v2122 = vld [vmem:[%s2114 + $0x38] sm:$0xff]
    %v2123 = vld [vmem:[%s2114 + $0x40] sm:$0xff]
    %v2124 = vld [vmem:[%s2114 + $0x48] sm:$0xff]
    %v2125 = vld [vmem:[%s2114 + $0x50] sm:$0xff]
    %v2126 = vld [vmem:[%s2114 + $0x58] sm:$0xff]
    %v2127 = vld [vmem:[%s2114 + $0x60] sm:$0xff]
    %v2128 = vld [vmem:[%s2114 + $0x68] sm:$0xff]
    %v2129 = vld [vmem:[%s2114 + $0x70] sm:$0xff]
    %v2132 = vlaneseq
    %v2133 = vshrl.u32 %v2132, 7
    %v2134 = vsub.s32 0, %v2133
    %v2135 = vrot.slane %v1544, %v2134
    %v2136 = vlaneseq
    %v2137 = vshrl.u32 %v2136, 7
    %v2138 = vsub.s32 0, %v2137
    %v2139 = vrot.slane %v1556, %v2138
    %v2140 = vsel %vm1668, %v1623, %v1619
    %v2141 = vsel %vm1670, %v1627, %v2140
    %v2142 = vsel %vm1672, %v1631, %v2141
    %v2143 = vsel %vm1674, %v1635, %v2142
    %v2144 = vsel %vm1676, %v1893, %v2143
    %v2145 = vsel %vm1678, %v2014, %v2144
    %v2146 = vsel %vm1680, %v2135, %v2145
    %v2147 = vsel %vm1668, %v1655, %v1651
    %v2148 = vsel %vm1670, %v1659, %v2147
    %v2149 = vsel %vm1672, %v1663, %v2148
    %v2150 = vsel %vm1674, %v1667, %v2149
    %v2151 = vsel %vm1676, %v1897, %v2150
    %v2152 = vsel %vm1678, %v2018, %v2151
    %v2153 = vsel %vm1680, %v2139, %v2152
    %v2154 = vsel %vm1689, %v2146, 0
    %v2156 = vsel %vm1689, %v2153, 0
    %2158 = vmatprep.subr.mxu0 0.0
    %2159 = vmatpush1.msra.mxu0 0.0
    %2160 = vmatprep.subr.mxu0 0.0
    %2161 = vmatpush1.msra.mxu0 %v2129
    %2162 = vmatprep.subr.mxu0 0.0
    %2163 = vmatpush1.msra.mxu0 %v2128
    %2164 = vmatprep.subr.mxu0 0.0
    %2165 = vmatpush1.msra.mxu0 %v2127
    %2166 = vmatprep.subr.mxu0 0.0
    %2167 = vmatpush1.msra.mxu0 %v2126
    %2168 = vmatprep.subr.mxu0 0.0
    %2169 = vmatpush1.msra.mxu0 %v2125
    %2170 = vmatprep.subr.mxu0 0.0
    %2171 = vmatpush1.msra.mxu0 %v2124
    %2172 = vmatprep.subr.mxu0 0.0
    %2173 = vmatpush1.msra.mxu0 %v2123
    %2174 = vmatprep.subr.mxu0 0.0
    %2175 = vmatpush1.msra.mxu0 %v2122
    %2176 = vmatprep.subr.mxu0 0.0
    %2177 = vmatpush1.msra.mxu0 %v2121
    %2178 = vmatprep.subr.mxu0 0.0
    %2179 = vmatpush1.msra.mxu0 %v2120
    %2180 = vmatprep.subr.mxu0 0.0
    %2181 = vmatpush1.msra.mxu0 %v2119
    %2182 = vmatprep.subr.mxu0 0.0
    %2183 = vmatpush1.msra.mxu0 %v2118
    %2184 = vmatprep.subr.mxu0 0.0
    %2185 = vmatpush1.msra.mxu0 %v2117
    %2186 = vmatprep.subr.mxu0 0.0
    %2187 = vmatpush1.msra.mxu0 %v2116
    %2188 = vmatprep.subr.mxu0 0.0
    %2189 = vmatpush1.msra.mxu0 %v2115
    %2190 = vmatprep.subr.mxu0 0.0
    %2191 = vmatpush2.msra.mxu0 0.0
    %2192 = vmatprep.subr.mxu0 0.0
    %2193 = vmatpush2.msra.mxu0 0.0
    %2194 = vmatprep.subr.mxu0 0.0
    %2195 = vmatpush2.msra.mxu0 0.0
    %2196 = vmatprep.subr.mxu0 0.0
    %2197 = vmatpush2.msra.mxu0 0.0
    %2198 = vmatprep.subr.mxu0 0.0
    %2199 = vmatpush2.msra.mxu0 0.0
    %2200 = vmatprep.subr.mxu0 0.0
    %2201 = vmatpush2.msra.mxu0 0.0
    %2202 = vmatprep.subr.mxu0 0.0
    %2203 = vmatpush2.msra.mxu0 0.0
    %2204 = vmatprep.subr.mxu0 0.0
    %2205 = vmatpush2.msra.mxu0 0.0
    %2206 = vmatprep.subr.mxu0 0.0
    %2207 = vmatpush2.msra.mxu0 0.0
    %2208 = vmatprep.subr.mxu0 0.0
    %2209 = vmatpush2.msra.mxu0 0.0
    %2210 = vmatprep.subr.mxu0 0.0
    %2211 = vmatpush2.msra.mxu0 0.0
    %2212 = vmatprep.subr.mxu0 0.0
    %2213 = vmatpush2.msra.mxu0 0.0
    %2214 = vmatprep.subr.mxu0 0.0
    %2215 = vmatpush2.msra.mxu0 0.0
    %2216 = vmatprep.subr.mxu0 0.0
    %2217 = vmatpush2.msra.mxu0 0.0
    %2218 = vmatprep.subr.mxu0 0.0
    %2219 = vmatpush2.msra.mxu0 0.0
    %2220 = vmatprep.subr.mxu0 0.0
    %2221 = vmatpush2.msra.mxu0 0.0
    %2222 = vmatprep.mubr.f32.mxu0 0.0
    %2223 = vmatmul.mubr.f32.gmra.mxu0 %v2154
    %v2224 = vpop.f32.mrf.mxu0
    %v2225 = vadd.f32 0.0, %v2224
    %v2226 = vpop.f32.mrf.mxu0
    %2227 = vmatprep.mubr.f32.mxu0 0.0
    %2228 = vmatmul.mubr.f32.gmra.mxu0 %v2156
    %v2229 = vpop.f32.mrf.mxu0
    %v2230 = vadd.f32 0.0, %v2229
    %v2231 = vpop.f32.mrf.mxu0
    %2232 = vdwg.mxu0
    %v2233 = vadd.f32 %v2112, %v2225
    %v2234 = vadd.f32 %v2113, %v2230
    %v2235 = vld [vmem:[%s5] sm:$0xff]
    %v2236 = vld [vmem:[%s5 + $0x8] sm:$0xff]
    %v2237 = vld [vmem:[%s5 + $0x10] sm:$0xff]
    %v2238 = vld [vmem:[%s5 + $0x18] sm:$0xff]
    %v2239 = vld [vmem:[%s5 + $0x20] sm:$0xff]
    %v2240 = vld [vmem:[%s5 + $0x28] sm:$0xff]
    %v2241 = vld [vmem:[%s5 + $0x30] sm:$0xff]
    %v2242 = vld [vmem:[%s5 + $0x38] sm:$0xff]
    %v2243 = vld [vmem:[%s5 + $0x40] sm:$0xff]
    %v2244 = vld [vmem:[%s5 + $0x48] sm:$0xff]
    %v2245 = vld [vmem:[%s5 + $0x50] sm:$0xff]
    %v2246 = vld [vmem:[%s5 + $0x58] sm:$0xff]
    %v2247 = vld [vmem:[%s5 + $0x60] sm:$0xff]
    %v2248 = vld [vmem:[%s5 + $0x68] sm:$0xff]
    %v2249 = vld [vmem:[%s5 + $0x70] sm:$0xff]
    %s2250 = scalar_lea.vmem %s5, 120
    %v2251 = vld [vmem:[%s2250] sm:$0xff]
    %v2252 = vld [vmem:[%s2250 + $0x8] sm:$0xff]
    %v2253 = vld [vmem:[%s2250 + $0x10] sm:$0xff]
    %v2254 = vld [vmem:[%s2250 + $0x18] sm:$0xff]
    %v2255 = vld [vmem:[%s2250 + $0x20] sm:$0xff]
    %v2256 = vld [vmem:[%s2250 + $0x28] sm:$0xff]
    %v2257 = vld [vmem:[%s2250 + $0x30] sm:$0xff]
    %v2258 = vld [vmem:[%s2250 + $0x38] sm:$0xff]
    %v2259 = vld [vmem:[%s2250 + $0x40] sm:$0xff]
    %v2260 = vld [vmem:[%s2250 + $0x48] sm:$0xff]
    %v2261 = vld [vmem:[%s2250 + $0x50] sm:$0xff]
    %v2262 = vld [vmem:[%s2250 + $0x58] sm:$0xff]
    %v2263 = vld [vmem:[%s2250 + $0x60] sm:$0xff]
    %v2264 = vld [vmem:[%s2250 + $0x68] sm:$0xff]
    %v2265 = vld [vmem:[%s2250 + $0x70] sm:$0xff]
    %2266 = vmatprep.subr.mxu0 0.0
    %2267 = vmatpush1.msra.mxu0 0.0
    %2268 = vmatprep.subr.mxu0 0.0
    %2269 = vmatpush1.msra.mxu0 %v2265
    %2270 = vmatprep.subr.mxu0 0.0
    %2271 = vmatpush1.msra.mxu0 %v2264
    %2272 = vmatprep.subr.mxu0 0.0
    %2273 = vmatpush1.msra.mxu0 %v2263
    %2274 = vmatprep.subr.mxu0 0.0
    %2275 = vmatpush1.msra.mxu0 %v2262
    %2276 = vmatprep.subr.mxu0 0.0
    %2277 = vmatpush1.msra.mxu0 %v2261
    %2278 = vmatprep.subr.mxu0 0.0
    %2279 = vmatpush1.msra.mxu0 %v2260
    %2280 = vmatprep.subr.mxu0 0.0
    %2281 = vmatpush1.msra.mxu0 %v2259
    %2282 = vmatprep.subr.mxu0 0.0
    %2283 = vmatpush1.msra.mxu0 %v2258
    %2284 = vmatprep.subr.mxu0 0.0
    %2285 = vmatpush1.msra.mxu0 %v2257
    %2286 = vmatprep.subr.mxu0 0.0
    %2287 = vmatpush1.msra.mxu0 %v2256
    %2288 = vmatprep.subr.mxu0 0.0
    %2289 = vmatpush1.msra.mxu0 %v2255
    %2290 = vmatprep.subr.mxu0 0.0
    %2291 = vmatpush1.msra.mxu0 %v2254
    %2292 = vmatprep.subr.mxu0 0.0
    %2293 = vmatpush1.msra.mxu0 %v2253
    %2294 = vmatprep.subr.mxu0 0.0
    %2295 = vmatpush1.msra.mxu0 %v2252
    %2296 = vmatprep.subr.mxu0 0.0
    %2297 = vmatpush1.msra.mxu0 %v2251
    %2298 = vmatprep.subr.mxu0 0.0
    %2299 = vmatpush2.msra.mxu0 0.0
    %2300 = vmatprep.subr.mxu0 0.0
    %2301 = vmatpush2.msra.mxu0 0.0
    %2302 = vmatprep.subr.mxu0 0.0
    %2303 = vmatpush2.msra.mxu0 0.0
    %2304 = vmatprep.subr.mxu0 0.0
    %2305 = vmatpush2.msra.mxu0 0.0
    %2306 = vmatprep.subr.mxu0 0.0
    %2307 = vmatpush2.msra.mxu0 0.0
    %2308 = vmatprep.subr.mxu0 0.0
    %2309 = vmatpush2.msra.mxu0 0.0
    %2310 = vmatprep.subr.mxu0 0.0
    %2311 = vmatpush2.msra.mxu0 0.0
    %2312 = vmatprep.subr.mxu0 0.0
    %2313 = vmatpush2.msra.mxu0 0.0
    %2314 = vmatprep.subr.mxu0 0.0
    %2315 = vmatpush2.msra.mxu0 0.0
    %2316 = vmatprep.subr.mxu0 0.0
    %2317 = vmatpush2.msra.mxu0 0.0
    %2318 = vmatprep.subr.mxu0 0.0
    %2319 = vmatpush2.msra.mxu0 0.0
    %2320 = vmatprep.subr.mxu0 0.0
    %2321 = vmatpush2.msra.mxu0 0.0
    %2322 = vmatprep.subr.mxu0 0.0
    %2323 = vmatpush2.msra.mxu0 0.0
    %2324 = vmatprep.subr.mxu0 0.0
    %2325 = vmatpush2.msra.mxu0 0.0
    %2326 = vmatprep.subr.mxu0 0.0
    %2327 = vmatpush2.msra.mxu0 0.0
    %2328 = vmatprep.subr.mxu0 0.0
    %2329 = vmatpush2.msra.mxu0 0.0
    %2330 = vmatprep.mubr.f32.mxu0 0.0
    %2331 = vmatmul.mubr.f32.gmra.mxu0 %v1690
    %v2332 = vpop.f32.mrf.mxu0
    %v2333 = vadd.f32 0.0, %v2332
    %v2334 = vpop.f32.mrf.mxu0
    %2335 = vmatprep.mubr.f32.mxu0 0.0
    %2336 = vmatmul.mubr.f32.gmra.mxu0 %v1692
    %v2337 = vpop.f32.mrf.mxu0
    %v2338 = vadd.f32 0.0, %v2337
    %v2339 = vpop.f32.mrf.mxu0
    %2340 = vdwg.mxu0
    %2341 = vmatprep.subr.mxu0 0.0
    %2342 = vmatpush1.msra.mxu0 0.0
    %2343 = vmatprep.subr.mxu0 0.0
    %2344 = vmatpush1.msra.mxu0 %v2249
    %2345 = vmatprep.subr.mxu0 0.0
    %2346 = vmatpush1.msra.mxu0 %v2248
    %2347 = vmatprep.subr.mxu0 0.0
    %2348 = vmatpush1.msra.mxu0 %v2247
    %2349 = vmatprep.subr.mxu0 0.0
    %2350 = vmatpush1.msra.mxu0 %v2246
    %2351 = vmatprep.subr.mxu0 0.0
    %2352 = vmatpush1.msra.mxu0 %v2245
    %2353 = vmatprep.subr.mxu0 0.0
    %2354 = vmatpush1.msra.mxu0 %v2244
    %2355 = vmatprep.subr.mxu0 0.0
    %2356 = vmatpush1.msra.mxu0 %v2243
    %2357 = vmatprep.subr.mxu0 0.0
    %2358 = vmatpush1.msra.mxu0 %v2242
    %2359 = vmatprep.subr.mxu0 0.0
    %2360 = vmatpush1.msra.mxu0 %v2241
    %2361 = vmatprep.subr.mxu0 0.0
    %2362 = vmatpush1.msra.mxu0 %v2240
    %2363 = vmatprep.subr.mxu0 0.0
    %2364 = vmatpush1.msra.mxu0 %v2239
    %2365 = vmatprep.subr.mxu0 0.0
    %2366 = vmatpush1.msra.mxu0 %v2238
    %2367 = vmatprep.subr.mxu0 0.0
    %2368 = vmatpush1.msra.mxu0 %v2237
    %2369 = vmatprep.subr.mxu0 0.0
    %2370 = vmatpush1.msra.mxu0 %v2236
    %2371 = vmatprep.subr.mxu0 0.0
    %2372 = vmatpush1.msra.mxu0 %v2235
    %2373 = vmatprep.subr.mxu0 0.0
    %2374 = vmatpush2.msra.mxu0 0.0
    %2375 = vmatprep.subr.mxu0 0.0
    %2376 = vmatpush2.msra.mxu0 0.0
    %2377 = vmatprep.subr.mxu0 0.0
    %2378 = vmatpush2.msra.mxu0 0.0
    %2379 = vmatprep.subr.mxu0 0.0
    %2380 = vmatpush2.msra.mxu0 0.0
    %2381 = vmatprep.subr.mxu0 0.0
    %2382 = vmatpush2.msra.mxu0 0.0
    %2383 = vmatprep.subr.mxu0 0.0
    %2384 = vmatpush2.msra.mxu0 0.0
    %2385 = vmatprep.subr.mxu0 0.0
    %2386 = vmatpush2.msra.mxu0 0.0
    %2387 = vmatprep.subr.mxu0 0.0
    %2388 = vmatpush2.msra.mxu0 0.0
    %2389 = vmatprep.subr.mxu0 0.0
    %2390 = vmatpush2.msra.mxu0 0.0
    %2391 = vmatprep.subr.mxu0 0.0
    %2392 = vmatpush2.msra.mxu0 0.0
    %2393 = vmatprep.subr.mxu0 0.0
    %2394 = vmatpush2.msra.mxu0 0.0
    %2395 = vmatprep.subr.mxu0 0.0
    %2396 = vmatpush2.msra.mxu0 0.0
    %2397 = vmatprep.subr.mxu0 0.0
    %2398 = vmatpush2.msra.mxu0 0.0
    %2399 = vmatprep.subr.mxu0 0.0
    %2400 = vmatpush2.msra.mxu0 0.0
    %2401 = vmatprep.subr.mxu0 0.0
    %2402 = vmatpush2.msra.mxu0 0.0
    %2403 = vmatprep.subr.mxu0 0.0
    %2404 = vmatpush2.msra.mxu0 0.0
    %2405 = vmatprep.mubr.f32.mxu0 0.0
    %2406 = vmatmul.mubr.f32.gmra.mxu0 %v1793
    %v2407 = vpop.f32.mrf.mxu0
    %v2408 = vadd.f32 %v2333, %v2407
    %v2409 = vpop.f32.mrf.mxu0
    %2410 = vmatprep.mubr.f32.mxu0 0.0
    %2411 = vmatmul.mubr.f32.gmra.mxu0 %v1795
    %v2412 = vpop.f32.mrf.mxu0
    %v2413 = vadd.f32 %v2338, %v2412
    %v2414 = vpop.f32.mrf.mxu0
    %2415 = vdwg.mxu0
    %s2416 = scalar_lea.vmem %s5, 240
    %v2417 = vld [vmem:[%s2416] sm:$0xff]
    %v2418 = vld [vmem:[%s2416 + $0x8] sm:$0xff]
    %v2419 = vld [vmem:[%s2416 + $0x10] sm:$0xff]
    %v2420 = vld [vmem:[%s2416 + $0x18] sm:$0xff]
    %v2421 = vld [vmem:[%s2416 + $0x20] sm:$0xff]
    %v2422 = vld [vmem:[%s2416 + $0x28] sm:$0xff]
    %v2423 = vld [vmem:[%s2416 + $0x30] sm:$0xff]
    %v2424 = vld [vmem:[%s2416 + $0x38] sm:$0xff]
    %v2425 = vld [vmem:[%s2416 + $0x40] sm:$0xff]
    %v2426 = vld [vmem:[%s2416 + $0x48] sm:$0xff]
    %v2427 = vld [vmem:[%s2416 + $0x50] sm:$0xff]
    %v2428 = vld [vmem:[%s2416 + $0x58] sm:$0xff]
    %v2429 = vld [vmem:[%s2416 + $0x60] sm:$0xff]
    %v2430 = vld [vmem:[%s2416 + $0x68] sm:$0xff]
    %v2431 = vld [vmem:[%s2416 + $0x70] sm:$0xff]
    %2432 = vmatprep.subr.mxu0 0.0
    %2433 = vmatpush1.msra.mxu0 0.0
    %2434 = vmatprep.subr.mxu0 0.0
    %2435 = vmatpush1.msra.mxu0 %v2431
    %2436 = vmatprep.subr.mxu0 0.0
    %2437 = vmatpush1.msra.mxu0 %v2430
    %2438 = vmatprep.subr.mxu0 0.0
    %2439 = vmatpush1.msra.mxu0 %v2429
    %2440 = vmatprep.subr.mxu0 0.0
    %2441 = vmatpush1.msra.mxu0 %v2428
    %2442 = vmatprep.subr.mxu0 0.0
    %2443 = vmatpush1.msra.mxu0 %v2427
    %2444 = vmatprep.subr.mxu0 0.0
    %2445 = vmatpush1.msra.mxu0 %v2426
    %2446 = vmatprep.subr.mxu0 0.0
    %2447 = vmatpush1.msra.mxu0 %v2425
    %2448 = vmatprep.subr.mxu0 0.0
    %2449 = vmatpush1.msra.mxu0 %v2424
    %2450 = vmatprep.subr.mxu0 0.0
    %2451 = vmatpush1.msra.mxu0 %v2423
    %2452 = vmatprep.subr.mxu0 0.0
    %2453 = vmatpush1.msra.mxu0 %v2422
    %2454 = vmatprep.subr.mxu0 0.0
    %2455 = vmatpush1.msra.mxu0 %v2421
    %2456 = vmatprep.subr.mxu0 0.0
    %2457 = vmatpush1.msra.mxu0 %v2420
    %2458 = vmatprep.subr.mxu0 0.0
    %2459 = vmatpush1.msra.mxu0 %v2419
    %2460 = vmatprep.subr.mxu0 0.0
    %2461 = vmatpush1.msra.mxu0 %v2418
    %2462 = vmatprep.subr.mxu0 0.0
    %2463 = vmatpush1.msra.mxu0 %v2417
    %2464 = vmatprep.subr.mxu0 0.0
    %2465 = vmatpush2.msra.mxu0 0.0
    %2466 = vmatprep.subr.mxu0 0.0
    %2467 = vmatpush2.msra.mxu0 0.0
    %2468 = vmatprep.subr.mxu0 0.0
    %2469 = vmatpush2.msra.mxu0 0.0
    %2470 = vmatprep.subr.mxu0 0.0
    %2471 = vmatpush2.msra.mxu0 0.0
    %2472 = vmatprep.subr.mxu0 0.0
    %2473 = vmatpush2.msra.mxu0 0.0
    %2474 = vmatprep.subr.mxu0 0.0
    %2475 = vmatpush2.msra.mxu0 0.0
    %2476 = vmatprep.subr.mxu0 0.0
    %2477 = vmatpush2.msra.mxu0 0.0
    %2478 = vmatprep.subr.mxu0 0.0
    %2479 = vmatpush2.msra.mxu0 0.0
    %2480 = vmatprep.subr.mxu0 0.0
    %2481 = vmatpush2.msra.mxu0 0.0
    %2482 = vmatprep.subr.mxu0 0.0
    %2483 = vmatpush2.msra.mxu0 0.0
    %2484 = vmatprep.subr.mxu0 0.0
    %2485 = vmatpush2.msra.mxu0 0.0
    %2486 = vmatprep.subr.mxu0 0.0
    %2487 = vmatpush2.msra.mxu0 0.0
    %2488 = vmatprep.subr.mxu0 0.0
    %2489 = vmatpush2.msra.mxu0 0.0
    %2490 = vmatprep.subr.mxu0 0.0
    %2491 = vmatpush2.msra.mxu0 0.0
    %2492 = vmatprep.subr.mxu0 0.0
    %2493 = vmatpush2.msra.mxu0 0.0
    %2494 = vmatprep.subr.mxu0 0.0
    %2495 = vmatpush2.msra.mxu0 0.0
    %2496 = vmatprep.mubr.f32.mxu0 0.0
    %2497 = vmatmul.mubr.f32.gmra.mxu0 %v1912
    %v2498 = vpop.f32.mrf.mxu0
    %v2499 = vadd.f32 0.0, %v2498
    %v2500 = vpop.f32.mrf.mxu0
    %2501 = vmatprep.mubr.f32.mxu0 0.0
    %2502 = vmatmul.mubr.f32.gmra.mxu0 %v1914
    %v2503 = vpop.f32.mrf.mxu0
    %v2504 = vadd.f32 0.0, %v2503
    %v2505 = vpop.f32.mrf.mxu0
    %2506 = vdwg.mxu0
    %v2507 = vadd.f32 %v2408, %v2499
    %v2508 = vadd.f32 %v2413, %v2504
    %s2509 = scalar_lea.vmem %s5, 360
    %v2510 = vld [vmem:[%s2509] sm:$0xff]
    %v2511 = vld [vmem:[%s2509 + $0x8] sm:$0xff]
    %v2512 = vld [vmem:[%s2509 + $0x10] sm:$0xff]
    %v2513 = vld [vmem:[%s2509 + $0x18] sm:$0xff]
    %v2514 = vld [vmem:[%s2509 + $0x20] sm:$0xff]
    %v2515 = vld [vmem:[%s2509 + $0x28] sm:$0xff]
    %v2516 = vld [vmem:[%s2509 + $0x30] sm:$0xff]
    %v2517 = vld [vmem:[%s2509 + $0x38] sm:$0xff]
    %v2518 = vld [vmem:[%s2509 + $0x40] sm:$0xff]
    %v2519 = vld [vmem:[%s2509 + $0x48] sm:$0xff]
    %v2520 = vld [vmem:[%s2509 + $0x50] sm:$0xff]
    %v2521 = vld [vmem:[%s2509 + $0x58] sm:$0xff]
    %v2522 = vld [vmem:[%s2509 + $0x60] sm:$0xff]
    %v2523 = vld [vmem:[%s2509 + $0x68] sm:$0xff]
    %v2524 = vld [vmem:[%s2509 + $0x70] sm:$0xff]
    %2525 = vmatprep.subr.mxu0 0.0
    %2526 = vmatpush1.msra.mxu0 0.0
    %2527 = vmatprep.subr.mxu0 0.0
    %2528 = vmatpush1.msra.mxu0 %v2524
    %2529 = vmatprep.subr.mxu0 0.0
    %2530 = vmatpush1.msra.mxu0 %v2523
    %2531 = vmatprep.subr.mxu0 0.0
    %2532 = vmatpush1.msra.mxu0 %v2522
    %2533 = vmatprep.subr.mxu0 0.0
    %2534 = vmatpush1.msra.mxu0 %v2521
    %2535 = vmatprep.subr.mxu0 0.0
    %2536 = vmatpush1.msra.mxu0 %v2520
    %2537 = vmatprep.subr.mxu0 0.0
    %2538 = vmatpush1.msra.mxu0 %v2519
    %2539 = vmatprep.subr.mxu0 0.0
    %2540 = vmatpush1.msra.mxu0 %v2518
    %2541 = vmatprep.subr.mxu0 0.0
    %2542 = vmatpush1.msra.mxu0 %v2517
    %2543 = vmatprep.subr.mxu0 0.0
    %2544 = vmatpush1.msra.mxu0 %v2516
    %2545 = vmatprep.subr.mxu0 0.0
    %2546 = vmatpush1.msra.mxu0 %v2515
    %2547 = vmatprep.subr.mxu0 0.0
    %2548 = vmatpush1.msra.mxu0 %v2514
    %2549 = vmatprep.subr.mxu0 0.0
    %2550 = vmatpush1.msra.mxu0 %v2513
    %2551 = vmatprep.subr.mxu0 0.0
    %2552 = vmatpush1.msra.mxu0 %v2512
    %2553 = vmatprep.subr.mxu0 0.0
    %2554 = vmatpush1.msra.mxu0 %v2511
    %2555 = vmatprep.subr.mxu0 0.0
    %2556 = vmatpush1.msra.mxu0 %v2510
    %2557 = vmatprep.subr.mxu0 0.0
    %2558 = vmatpush2.msra.mxu0 0.0
    %2559 = vmatprep.subr.mxu0 0.0
    %2560 = vmatpush2.msra.mxu0 0.0
    %2561 = vmatprep.subr.mxu0 0.0
    %2562 = vmatpush2.msra.mxu0 0.0
    %2563 = vmatprep.subr.mxu0 0.0
    %2564 = vmatpush2.msra.mxu0 0.0
    %2565 = vmatprep.subr.mxu0 0.0
    %2566 = vmatpush2.msra.mxu0 0.0
    %2567 = vmatprep.subr.mxu0 0.0
    %2568 = vmatpush2.msra.mxu0 0.0
    %2569 = vmatprep.subr.mxu0 0.0
    %2570 = vmatpush2.msra.mxu0 0.0
    %2571 = vmatprep.subr.mxu0 0.0
    %2572 = vmatpush2.msra.mxu0 0.0
    %2573 = vmatprep.subr.mxu0 0.0
    %2574 = vmatpush2.msra.mxu0 0.0
    %2575 = vmatprep.subr.mxu0 0.0
    %2576 = vmatpush2.msra.mxu0 0.0
    %2577 = vmatprep.subr.mxu0 0.0
    %2578 = vmatpush2.msra.mxu0 0.0
    %2579 = vmatprep.subr.mxu0 0.0
    %2580 = vmatpush2.msra.mxu0 0.0
    %2581 = vmatprep.subr.mxu0 0.0
    %2582 = vmatpush2.msra.mxu0 0.0
    %2583 = vmatprep.subr.mxu0 0.0
    %2584 = vmatpush2.msra.mxu0 0.0
    %2585 = vmatprep.subr.mxu0 0.0
    %2586 = vmatpush2.msra.mxu0 0.0
    %2587 = vmatprep.subr.mxu0 0.0
    %2588 = vmatpush2.msra.mxu0 0.0
    %2589 = vmatprep.mubr.f32.mxu0 0.0
    %2590 = vmatmul.mubr.f32.gmra.mxu0 %v2033
    %v2591 = vpop.f32.mrf.mxu0
    %v2592 = vadd.f32 0.0, %v2591
    %v2593 = vpop.f32.mrf.mxu0
    %2594 = vmatprep.mubr.f32.mxu0 0.0
    %2595 = vmatmul.mubr.f32.gmra.mxu0 %v2035
    %v2596 = vpop.f32.mrf.mxu0
    %v2597 = vadd.f32 0.0, %v2596
    %v2598 = vpop.f32.mrf.mxu0
    %2599 = vdwg.mxu0
    %v2600 = vadd.f32 %v2507, %v2592
    %v2601 = vadd.f32 %v2508, %v2597
    %s2602 = scalar_lea.vmem %s5, 480
    %v2603 = vld [vmem:[%s2602] sm:$0xff]
    %v2604 = vld [vmem:[%s2602 + $0x8] sm:$0xff]
    %v2605 = vld [vmem:[%s2602 + $0x10] sm:$0xff]
    %v2606 = vld [vmem:[%s2602 + $0x18] sm:$0xff]
    %v2607 = vld [vmem:[%s2602 + $0x20] sm:$0xff]
    %v2608 = vld [vmem:[%s2602 + $0x28] sm:$0xff]
    %v2609 = vld [vmem:[%s2602 + $0x30] sm:$0xff]
    %v2610 = vld [vmem:[%s2602 + $0x38] sm:$0xff]
    %v2611 = vld [vmem:[%s2602 + $0x40] sm:$0xff]
    %v2612 = vld [vmem:[%s2602 + $0x48] sm:$0xff]
    %v2613 = vld [vmem:[%s2602 + $0x50] sm:$0xff]
    %v2614 = vld [vmem:[%s2602 + $0x58] sm:$0xff]
    %v2615 = vld [vmem:[%s2602 + $0x60] sm:$0xff]
    %v2616 = vld [vmem:[%s2602 + $0x68] sm:$0xff]
    %v2617 = vld [vmem:[%s2602 + $0x70] sm:$0xff]
    %2618 = vmatprep.subr.mxu0 0.0
    %2619 = vmatpush1.msra.mxu0 0.0
    %2620 = vmatprep.subr.mxu0 0.0
    %2621 = vmatpush1.msra.mxu0 %v2617
    %2622 = vmatprep.subr.mxu0 0.0
    %2623 = vmatpush1.msra.mxu0 %v2616
    %2624 = vmatprep.subr.mxu0 0.0
    %2625 = vmatpush1.msra.mxu0 %v2615
    %2626 = vmatprep.subr.mxu0 0.0
    %2627 = vmatpush1.msra.mxu0 %v2614
    %2628 = vmatprep.subr.mxu0 0.0
    %2629 = vmatpush1.msra.mxu0 %v2613
    %2630 = vmatprep.subr.mxu0 0.0
    %2631 = vmatpush1.msra.mxu0 %v2612
    %2632 = vmatprep.subr.mxu0 0.0
    %2633 = vmatpush1.msra.mxu0 %v2611
    %2634 = vmatprep.subr.mxu0 0.0
    %2635 = vmatpush1.msra.mxu0 %v2610
    %2636 = vmatprep.subr.mxu0 0.0
    %2637 = vmatpush1.msra.mxu0 %v2609
    %2638 = vmatprep.subr.mxu0 0.0
    %2639 = vmatpush1.msra.mxu0 %v2608
    %2640 = vmatprep.subr.mxu0 0.0
    %2641 = vmatpush1.msra.mxu0 %v2607
    %2642 = vmatprep.subr.mxu0 0.0
    %2643 = vmatpush1.msra.mxu0 %v2606
    %2644 = vmatprep.subr.mxu0 0.0
    %2645 = vmatpush1.msra.mxu0 %v2605
    %2646 = vmatprep.subr.mxu0 0.0
    %2647 = vmatpush1.msra.mxu0 %v2604
    %2648 = vmatprep.subr.mxu0 0.0
    %2649 = vmatpush1.msra.mxu0 %v2603
    %2650 = vmatprep.subr.mxu0 0.0
    %2651 = vmatpush2.msra.mxu0 0.0
    %2652 = vmatprep.subr.mxu0 0.0
    %2653 = vmatpush2.msra.mxu0 0.0
    %2654 = vmatprep.subr.mxu0 0.0
    %2655 = vmatpush2.msra.mxu0 0.0
    %2656 = vmatprep.subr.mxu0 0.0
    %2657 = vmatpush2.msra.mxu0 0.0
    %2658 = vmatprep.subr.mxu0 0.0
    %2659 = vmatpush2.msra.mxu0 0.0
    %2660 = vmatprep.subr.mxu0 0.0
    %2661 = vmatpush2.msra.mxu0 0.0
    %2662 = vmatprep.subr.mxu0 0.0
    %2663 = vmatpush2.msra.mxu0 0.0
    %2664 = vmatprep.subr.mxu0 0.0
    %2665 = vmatpush2.msra.mxu0 0.0
    %2666 = vmatprep.subr.mxu0 0.0
    %2667 = vmatpush2.msra.mxu0 0.0
    %2668 = vmatprep.subr.mxu0 0.0
    %2669 = vmatpush2.msra.mxu0 0.0
    %2670 = vmatprep.subr.mxu0 0.0
    %2671 = vmatpush2.msra.mxu0 0.0
    %2672 = vmatprep.subr.mxu0 0.0
    %2673 = vmatpush2.msra.mxu0 0.0
    %2674 = vmatprep.subr.mxu0 0.0
    %2675 = vmatpush2.msra.mxu0 0.0
    %2676 = vmatprep.subr.mxu0 0.0
    %2677 = vmatpush2.msra.mxu0 0.0
    %2678 = vmatprep.subr.mxu0 0.0
    %2679 = vmatpush2.msra.mxu0 0.0
    %2680 = vmatprep.subr.mxu0 0.0
    %2681 = vmatpush2.msra.mxu0 0.0
    %2682 = vmatprep.mubr.f32.mxu0 0.0
    %2683 = vmatmul.mubr.f32.gmra.mxu0 %v2154
    %v2684 = vpop.f32.mrf.mxu0
    %v2685 = vadd.f32 0.0, %v2684
    %v2686 = vpop.f32.mrf.mxu0
    %2687 = vmatprep.mubr.f32.mxu0 0.0
    %2688 = vmatmul.mubr.f32.gmra.mxu0 %v2156
    %v2689 = vpop.f32.mrf.mxu0
    %v2690 = vadd.f32 0.0, %v2689
    %v2691 = vpop.f32.mrf.mxu0
    %2692 = vdwg.mxu0
    %v2693 = vadd.f32 %v2600, %v2685
    %v2694 = vadd.f32 %v2601, %v2690
    %v2695 = vmax.f32 %v2233, %v2693
    %v2696 = vmax.f32 %v2234, %v2694
    %v2699 = vcombine.high %v2695, %v2695
    %v2701 = vunpack.c.l.s4 1983009808
    %v2702 = vunpack.c.0.s8 %v2701
    %v2703 = vlaneseq
    %v2704 = vshrl.u32 %v2703, 7
    %v2705 = vsub.s32 %v2702, %v2704
    %v2706 = vrot.slane %v2695, %v2705
    %v2708 = vunpack.c.l.s4 1983009808
    %v2709 = vunpack.c.0.s8 %v2708
    %v2710 = vlaneseq
    %v2711 = vshrl.u32 %v2710, 7
    %v2712 = vsub.s32 %v2709, %v2711
    %v2713 = vrot.slane %v2699, %v2712
    %v2714 = vcombine.high %v2706, %v2706
    %v2715 = vcombine.high %v2713, %v2713
    %v2716 = vcombine.high %v2696, %v2696
    %v2718 = vunpack.c.l.s4 1983009808
    %v2719 = vunpack.c.0.s8 %v2718
    %v2720 = vlaneseq
    %v2721 = vshrl.u32 %v2720, 7
    %v2722 = vsub.s32 %v2719, %v2721
    %v2723 = vrot.slane %v2696, %v2722
    %v2725 = vunpack.c.l.s4 1983009808
    %v2726 = vunpack.c.0.s8 %v2725
    %v2727 = vlaneseq
    %v2728 = vshrl.u32 %v2727, 7
    %v2729 = vsub.s32 %v2726, %v2728
    %v2730 = vrot.slane %v2716, %v2729
    %v2731 = vcombine.high %v2723, %v2723
    %v2732 = vcombine.high %v2730, %v2730
    %v2741 = vrot.slane %v2706, 7
    %v2742 = vrot.slane %v2741, 2
    %v2743 = vrot.slane %v2714, 7
    %v2744 = vrot.slane %v2743, 2
    %v2745 = vrot.slane %v2713, 7
    %v2746 = vrot.slane %v2745, 2
    %v2747 = vrot.slane %v2715, 7
    %v2748 = vrot.slane %v2747, 2
    %v2749 = vrot.slane %v2723, 7
    %v2750 = vrot.slane %v2749, 2
    %v2751 = vrot.slane %v2731, 7
    %v2752 = vrot.slane %v2751, 2
    %v2753 = vrot.slane %v2730, 7
    %v2754 = vrot.slane %v2753, 2
    %v2755 = vrot.slane %v2732, 7
    %v2756 = vrot.slane %v2755, 2
    %v2765 = vmax.f32 %v2706, %v2742
    %v2766 = vmax.f32 %v2714, %v2744
    %v2767 = vmax.f32 %v2713, %v2746
    %v2768 = vmax.f32 %v2715, %v2748
    %v2769 = vmax.f32 %v2723, %v2750
    %v2770 = vmax.f32 %v2731, %v2752
    %v2771 = vmax.f32 %v2730, %v2754
    %v2772 = vmax.f32 %v2732, %v2756
    %v2773 = vld [vmem:[%s6] sm:$0x1]
    %v2775 = vlaneseq
    %v2776 = vshrl.u32 %v2775, 7
    %v2777 = vsub.s32 0, %v2776
    %v2778 = vrot.slane %v2773, %v2777
    %v2780 = vunpack.c.l.s4 1983009808
    %v2781 = vunpack.c.0.s8 %v2780
    %v2782 = vlaneseq
    %v2783 = vshrl.u32 %v2782, 7
    %v2784 = vsub.s32 %v2781, %v2783
    %v2785 = vrot.slane %v2778, %v2784
    %v2786 = vcombine.high %v2785, %v2785
    %v2787 = vrot.slane %v2785, 1
    %v2788 = vrot.slane %v2786, 1
    %v2793 = vadd.f32 %v2765, %v2785
    %v2794 = vadd.f32 %v2766, %v2787
    %v2795 = vadd.f32 %v2767, %v2786
    %v2796 = vadd.f32 %v2768, %v2788
    %v2797 = vadd.f32 %v2769, %v2785
    %v2798 = vadd.f32 %v2770, %v2787
    %v2799 = vadd.f32 %v2771, %v2786
    %v2800 = vadd.f32 %v2772, %v2788
    %v2801 = vmax.f32 %v2793, 0.0
    %v2802 = vmax.f32 %v2794, 0.0
    %v2803 = vmax.f32 %v2795, 0.0
    %v2804 = vmax.f32 %v2796, 0.0
    %v2805 = vmax.f32 %v2797, 0.0
    %v2806 = vmax.f32 %v2798, 0.0
    %v2807 = vmax.f32 %v2799, 0.0
    %v2808 = vmax.f32 %v2800, 0.0
    %v2817 = vsel %vm1674, %v2801, %v2801
    %v2818 = vsel %vm1678, %v2801, %v2817
    %v2819 = vrot.slane %v2802, 7
    %v2820 = vsel %vm1668, %v2819, %v2818
    %v2821 = vsel %vm1672, %v2819, %v2820
    %v2822 = vsel %vm1676, %v2819, %v2821
    %v2823 = vsel %vm1680, %v2819, %v2822
    %v2824 = vsel %vm1674, %v2803, %v2803
    %v2825 = vsel %vm1678, %v2803, %v2824
    %v2826 = vrot.slane %v2804, 7
    %v2827 = vsel %vm1668, %v2826, %v2825
    %v2828 = vsel %vm1672, %v2826, %v2827
    %v2829 = vsel %vm1676, %v2826, %v2828
    %v2830 = vsel %vm1680, %v2826, %v2829
    %v2831 = vsel %vm1674, %v2805, %v2805
    %v2832 = vsel %vm1678, %v2805, %v2831
    %v2833 = vrot.slane %v2806, 7
    %v2834 = vsel %vm1668, %v2833, %v2832
    %v2835 = vsel %vm1672, %v2833, %v2834
    %v2836 = vsel %vm1676, %v2833, %v2835
    %v2837 = vsel %vm1680, %v2833, %v2836
    %v2838 = vsel %vm1674, %v2807, %v2807
    %v2839 = vsel %vm1678, %v2807, %v2838
    %v2840 = vrot.slane %v2808, 7
    %v2841 = vsel %vm1668, %v2840, %v2839
    %v2842 = vsel %vm1672, %v2840, %v2841
    %v2843 = vsel %vm1676, %v2840, %v2842
    %v2844 = vsel %vm1680, %v2840, %v2843
    %v2849 = vcombine.low %v2823, %v2837
    %v2851 = vunpack.c.l.s4 1934713408
    %v2852 = vunpack.c.0.s8 %v2851
    %v2853 = vlaneseq
    %v2854 = vshrl.u32 %v2853, 7
    %v2855 = vsub.s32 %v2852, %v2854
    %v2856 = vrot.slane %v2849, %v2855
    %v2857 = vcombine.high %v2856, 0.0
    %v2858 = vcombine.low %v2830, %v2844
    %v2860 = vunpack.c.l.s4 1934713408
    %v2861 = vunpack.c.0.s8 %v2860
    %v2862 = vlaneseq
    %v2863 = vshrl.u32 %v2862, 7
    %v2864 = vsub.s32 %v2861, %v2863
    %v2865 = vrot.slane %v2858, %v2864
    %v2866 = vcombine.high %v2865, 0.0
    %v2869 = vunpack.c.l.s4 1983009808
    %v2870 = vunpack.c.0.s8 %v2869
    %v2871 = vlaneseq
    %v2872 = vshrl.u32 %v2871, 7
    %v2873 = vsub.s32 %v2870, %v2872
    %v2874 = vrot.slane %v2857, %v2873
    %2875 = vrot.lane.b32.xlu0 %v2874, 80
    %v2876 = vpop.permute.xlu0 %2875
    %v2880 = vunpack.c.l.s4 1983009808
    %v2881 = vunpack.c.0.s8 %v2880
    %v2882 = vlaneseq
    %v2883 = vshrl.u32 %v2882, 7
    %v2884 = vsub.s32 %v2881, %v2883
    %v2885 = vrot.slane %v2865, %v2884
    %2886 = vrot.lane.b32.xlu0 %v2885, 32
    %v2887 = vpop.permute.xlu0 %2886
    %v2891 = vunpack.c.l.s4 1983009808
    %v2892 = vunpack.c.0.s8 %v2891
    %v2893 = vlaneseq
    %v2894 = vshrl.u32 %v2893, 7
    %v2895 = vsub.s32 %v2892, %v2894
    %v2896 = vrot.slane %v2866, %v2895
    %2897 = vrot.lane.b32.xlu0 %v2896, 112
    %v2898 = vpop.permute.xlu0 %2897
    %vm2900 = vcmask 654336
    %v2901 = vsel %vm2900, %v2856, %v2876
    %vm2902 = vcmask 261120
    %v2903 = vsel %vm2902, %v2876, %v2887
    %vm2904 = vcmask 916480
    %v2905 = vsel %vm2904, %v2903, %v2898
    %v2906 = vld [vmem:[%s7] sm:$0xff]
    %v2907 = vld [vmem:[%s7 + $0x8] sm:$0xff]
    %v2908 = vld [vmem:[%s7 + $0x10] sm:$0xff]
    %v2909 = vld [vmem:[%s7 + $0x18] sm:$0xff]
    %v2910 = vld [vmem:[%s7 + $0x20] sm:$0xff]
    %v2911 = vld [vmem:[%s7 + $0x28] sm:$0xff]
    %v2912 = vld [vmem:[%s7 + $0x30] sm:$0xff]
    %v2913 = vld [vmem:[%s7 + $0x38] sm:$0xff]
    %v2914 = vld [vmem:[%s7 + $0x40] sm:$0xff]
    %v2915 = vld [vmem:[%s7 + $0x48] sm:$0xff]
    %v2916 = vld [vmem:[%s7 + $0x50] sm:$0xff]
    %v2917 = vld [vmem:[%s7 + $0x58] sm:$0xff]
    %v2918 = vld [vmem:[%s7 + $0x60] sm:$0xff]
    %v2919 = vld [vmem:[%s7 + $0x68] sm:$0xff]
    %v2920 = vld [vmem:[%s7 + $0x70] sm:$0xff]
    %v2921 = vld [vmem:[%s7 + $0x78] sm:$0xff]
    %v2922 = vld [vmem:[%s7 + $0x80] sm:$0xff]
    %v2923 = vld [vmem:[%s7 + $0x88] sm:$0xff]
    %v2924 = vld [vmem:[%s7 + $0x90] sm:$0xff]
    %v2925 = vld [vmem:[%s7 + $0x98] sm:$0xff]
    %v2926 = vld [vmem:[%s7 + $0xa0] sm:$0xff]
    %v2927 = vld [vmem:[%s7 + $0xa8] sm:$0xff]
    %v2928 = vld [vmem:[%s7 + $0xb0] sm:$0xff]
    %v2929 = vld [vmem:[%s7 + $0xb8] sm:$0xff]
    %v2930 = vld [vmem:[%s7 + $0xc0] sm:$0xff]
    %v2931 = vld [vmem:[%s7 + $0xc8] sm:$0xff]
    %v2932 = vld [vmem:[%s7 + $0xd0] sm:$0xff]
    %v2933 = vld [vmem:[%s7 + $0xd8] sm:$0xff]
    %v2934 = vld [vmem:[%s7 + $0xe0] sm:$0xff]
    %v2935 = vld [vmem:[%s7 + $0xe8] sm:$0xff]
    %v2936 = vld [vmem:[%s7 + $0xf0] sm:$0xff]
    %v2937 = vld [vmem:[%s7 + $0xf8] sm:$0xff]
    %v2938 = vld [vmem:[%s7 + $0x100] sm:$0xff]
    %v2939 = vld [vmem:[%s7 + $0x108] sm:$0xff]
    %v2940 = vld [vmem:[%s7 + $0x110] sm:$0xff]
    %v2941 = vld [vmem:[%s7 + $0x118] sm:$0xff]
    %v2942 = vld [vmem:[%s7 + $0x120] sm:$0xff]
    %v2943 = vld [vmem:[%s7 + $0x128] sm:$0xff]
    %v2944 = vld [vmem:[%s7 + $0x130] sm:$0xff]
    %v2945 = vld [vmem:[%s7 + $0x138] sm:$0xff]
    %v2946 = vld [vmem:[%s8] sm:$0x1]
    %v2948 = vlaneseq
    %v2949 = vshrl.u32 %v2948, 7
    %v2950 = vsub.s32 0, %v2949
    %v2951 = vrot.slane %v2946, %v2950
    %vm2953 = vcmask 523264
    %v2954 = vsel %vm2953, %v2898, 0
    %2956 = vmatprep.subr.mxu0 0.0
    %2957 = vmatpush1.msra.mxu0 %v2921
    %2958 = vmatprep.subr.mxu0 0.0
    %2959 = vmatpush1.msra.mxu0 %v2920
    %2960 = vmatprep.subr.mxu0 0.0
    %2961 = vmatpush1.msra.mxu0 %v2919
    %2962 = vmatprep.subr.mxu0 0.0
    %2963 = vmatpush1.msra.mxu0 %v2918
    %2964 = vmatprep.subr.mxu0 0.0
    %2965 = vmatpush1.msra.mxu0 %v2917
    %2966 = vmatprep.subr.mxu0 0.0
    %2967 = vmatpush1.msra.mxu0 %v2916
    %2968 = vmatprep.subr.mxu0 0.0
    %2969 = vmatpush1.msra.mxu0 %v2915
    %2970 = vmatprep.subr.mxu0 0.0
    %2971 = vmatpush1.msra.mxu0 %v2914
    %2972 = vmatprep.subr.mxu0 0.0
    %2973 = vmatpush1.msra.mxu0 %v2913
    %2974 = vmatprep.subr.mxu0 0.0
    %2975 = vmatpush1.msra.mxu0 %v2912
    %2976 = vmatprep.subr.mxu0 0.0
    %2977 = vmatpush1.msra.mxu0 %v2911
    %2978 = vmatprep.subr.mxu0 0.0
    %2979 = vmatpush1.msra.mxu0 %v2910
    %2980 = vmatprep.subr.mxu0 0.0
    %2981 = vmatpush1.msra.mxu0 %v2909
    %2982 = vmatprep.subr.mxu0 0.0
    %2983 = vmatpush1.msra.mxu0 %v2908
    %2984 = vmatprep.subr.mxu0 0.0
    %2985 = vmatpush1.msra.mxu0 %v2907
    %2986 = vmatprep.subr.mxu0 0.0
    %2987 = vmatpush1.msra.mxu0 %v2906
    %2988 = vmatprep.subr.mxu0 0.0
    %2989 = vmatpush2.msra.mxu0 %v2937
    %2990 = vmatprep.subr.mxu0 0.0
    %2991 = vmatpush2.msra.mxu0 %v2936
    %2992 = vmatprep.subr.mxu0 0.0
    %2993 = vmatpush2.msra.mxu0 %v2935
    %2994 = vmatprep.subr.mxu0 0.0
    %2995 = vmatpush2.msra.mxu0 %v2934
    %2996 = vmatprep.subr.mxu0 0.0
    %2997 = vmatpush2.msra.mxu0 %v2933
    %2998 = vmatprep.subr.mxu0 0.0
    %2999 = vmatpush2.msra.mxu0 %v2932
    %3000 = vmatprep.subr.mxu0 0.0
    %3001 = vmatpush2.msra.mxu0 %v2931
    %3002 = vmatprep.subr.mxu0 0.0
    %3003 = vmatpush2.msra.mxu0 %v2930
    %3004 = vmatprep.subr.mxu0 0.0
    %3005 = vmatpush2.msra.mxu0 %v2929
    %3006 = vmatprep.subr.mxu0 0.0
    %3007 = vmatpush2.msra.mxu0 %v2928
    %3008 = vmatprep.subr.mxu0 0.0
    %3009 = vmatpush2.msra.mxu0 %v2927
    %3010 = vmatprep.subr.mxu0 0.0
    %3011 = vmatpush2.msra.mxu0 %v2926
    %3012 = vmatprep.subr.mxu0 0.0
    %3013 = vmatpush2.msra.mxu0 %v2925
    %3014 = vmatprep.subr.mxu0 0.0
    %3015 = vmatpush2.msra.mxu0 %v2924
    %3016 = vmatprep.subr.mxu0 0.0
    %3017 = vmatpush2.msra.mxu0 %v2923
    %3018 = vmatprep.subr.mxu0 0.0
    %3019 = vmatpush2.msra.mxu0 %v2922
    %3020 = vmatprep.mubr.f32.mxu0 %v2905
    %3021 = vmatmul.mubr.f32.gmra.mxu0 %v2901
    %v3022 = vpop.f32.mrf.mxu0
    %v3023 = vadd.f32 %v2951, %v3022
    %v3024 = vpop.f32.mrf.mxu0
    %3025 = vdwg.mxu0
    %3026 = vmatprep.subr.mxu0 0.0
    %3027 = vmatpush1.msra.mxu0 0.0
    %3028 = vmatprep.subr.mxu0 0.0
    %3029 = vmatpush1.msra.mxu0 0.0
    %3030 = vmatprep.subr.mxu0 0.0
    %3031 = vmatpush1.msra.mxu0 0.0
    %3032 = vmatprep.subr.mxu0 0.0
    %3033 = vmatpush1.msra.mxu0 0.0
    %3034 = vmatprep.subr.mxu0 0.0
    %3035 = vmatpush1.msra.mxu0 0.0
    %3036 = vmatprep.subr.mxu0 0.0
    %3037 = vmatpush1.msra.mxu0 0.0
    %3038 = vmatprep.subr.mxu0 0.0
    %3039 = vmatpush1.msra.mxu0 0.0
    %3040 = vmatprep.subr.mxu0 0.0
    %3041 = vmatpush1.msra.mxu0 0.0
    %3042 = vmatprep.subr.mxu0 0.0
    %3043 = vmatpush1.msra.mxu0 %v2945
    %3044 = vmatprep.subr.mxu0 0.0
    %3045 = vmatpush1.msra.mxu0 %v2944
    %3046 = vmatprep.subr.mxu0 0.0
    %3047 = vmatpush1.msra.mxu0 %v2943
    %3048 = vmatprep.subr.mxu0 0.0
    %3049 = vmatpush1.msra.mxu0 %v2942
    %3050 = vmatprep.subr.mxu0 0.0
    %3051 = vmatpush1.msra.mxu0 %v2941
    %3052 = vmatprep.subr.mxu0 0.0
    %3053 = vmatpush1.msra.mxu0 %v2940
    %3054 = vmatprep.subr.mxu0 0.0
    %3055 = vmatpush1.msra.mxu0 %v2939
    %3056 = vmatprep.subr.mxu0 0.0
    %3057 = vmatpush1.msra.mxu0 %v2938
    %3058 = vmatprep.subr.mxu0 0.0
    %3059 = vmatpush2.msra.mxu0 0.0
    %3060 = vmatprep.subr.mxu0 0.0
    %3061 = vmatpush2.msra.mxu0 0.0
    %3062 = vmatprep.subr.mxu0 0.0
    %3063 = vmatpush2.msra.mxu0 0.0
    %3064 = vmatprep.subr.mxu0 0.0
    %3065 = vmatpush2.msra.mxu0 0.0
    %3066 = vmatprep.subr.mxu0 0.0
    %3067 = vmatpush2.msra.mxu0 0.0
    %3068 = vmatprep.subr.mxu0 0.0
    %3069 = vmatpush2.msra.mxu0 0.0
    %3070 = vmatprep.subr.mxu0 0.0
    %3071 = vmatpush2.msra.mxu0 0.0
    %3072 = vmatprep.subr.mxu0 0.0
    %3073 = vmatpush2.msra.mxu0 0.0
    %3074 = vmatprep.subr.mxu0 0.0
    %3075 = vmatpush2.msra.mxu0 0.0
    %3076 = vmatprep.subr.mxu0 0.0
    %3077 = vmatpush2.msra.mxu0 0.0
    %3078 = vmatprep.subr.mxu0 0.0
    %3079 = vmatpush2.msra.mxu0 0.0
    %3080 = vmatprep.subr.mxu0 0.0
    %3081 = vmatpush2.msra.mxu0 0.0
    %3082 = vmatprep.subr.mxu0 0.0
    %3083 = vmatpush2.msra.mxu0 0.0
    %3084 = vmatprep.subr.mxu0 0.0
    %3085 = vmatpush2.msra.mxu0 0.0
    %3086 = vmatprep.subr.mxu0 0.0
    %3087 = vmatpush2.msra.mxu0 0.0
    %3088 = vmatprep.subr.mxu0 0.0
    %3089 = vmatpush2.msra.mxu0 0.0
    %3090 = vmatprep.mubr.f32.mxu0 0.0
    %3091 = vmatmul.mubr.f32.gmra.mxu0 %v2954
    %v3092 = vpop.f32.mrf.mxu0
    %v3093 = vadd.f32 %v3023, %v3092
    %v3094 = vpop.f32.mrf.mxu0
    %3095 = vdwg.mxu0
    %v3096 = vmax.f32 %v3093, 0.0
    %v3097 = vld [vmem:[%s9] sm:$0xff]
    %v3098 = vld [vmem:[%s9 + $0x8] sm:$0xff]
    %v3099 = vld [vmem:[%s9 + $0x10] sm:$0xff]
    %v3100 = vld [vmem:[%s9 + $0x18] sm:$0xff]
    %v3101 = vld [vmem:[%s9 + $0x20] sm:$0xff]
    %v3102 = vld [vmem:[%s9 + $0x28] sm:$0xff]
    %v3103 = vld [vmem:[%s9 + $0x30] sm:$0x3]
    %v3104 = vld [vmem:[%s10] sm:$0x1]
    %v3106 = vlaneseq
    %v3107 = vshrl.u32 %v3106, 7
    %v3108 = vsub.s32 0, %v3107
    %v3109 = vrot.slane %v3104, %v3108
    %vm3111 = vcmask 408576
    %v3113 = vsel %vm3111, %v3096, 0
    %vm3115 = vcmask 1041408
    %v3117 = vsel %vm3115, %v3103, 0
    %3119 = vmatprep.subr.mxu0 0.0
    %3120 = vmatpush1.msra.mxu0 0.0
    %3121 = vmatprep.subr.mxu0 0.0
    %3122 = vmatpush1.msra.mxu0 0.0
    %3123 = vmatprep.subr.mxu0 0.0
    %3124 = vmatpush1.msra.mxu0 0.0
    %3125 = vmatprep.subr.mxu0 0.0
    %3126 = vmatpush1.msra.mxu0 0.0
    %3127 = vmatprep.subr.mxu0 0.0
    %3128 = vmatpush1.msra.mxu0 0.0
    %3129 = vmatprep.subr.mxu0 0.0
    %3130 = vmatpush1.msra.mxu0 0.0
    %3131 = vmatprep.subr.mxu0 0.0
    %3132 = vmatpush1.msra.mxu0 0.0
    %3133 = vmatprep.subr.mxu0 0.0
    %3134 = vmatpush1.msra.mxu0 0.0
    %3135 = vmatprep.subr.mxu0 0.0
    %3136 = vmatpush1.msra.mxu0 0.0
    %3137 = vmatprep.subr.mxu0 0.0
    %3138 = vmatpush1.msra.mxu0 %v3117
    %3139 = vmatprep.subr.mxu0 0.0
    %3140 = vmatpush1.msra.mxu0 %v3102
    %3141 = vmatprep.subr.mxu0 0.0
    %3142 = vmatpush1.msra.mxu0 %v3101
    %3143 = vmatprep.subr.mxu0 0.0
    %3144 = vmatpush1.msra.mxu0 %v3100
    %3145 = vmatprep.subr.mxu0 0.0
    %3146 = vmatpush1.msra.mxu0 %v3099
    %3147 = vmatprep.subr.mxu0 0.0
    %3148 = vmatpush1.msra.mxu0 %v3098
    %3149 = vmatprep.subr.mxu0 0.0
    %3150 = vmatpush1.msra.mxu0 %v3097
    %3151 = vmatprep.subr.mxu0 0.0
    %3152 = vmatpush2.msra.mxu0 0.0
    %3153 = vmatprep.subr.mxu0 0.0
    %3154 = vmatpush2.msra.mxu0 0.0
    %3155 = vmatprep.subr.mxu0 0.0
    %3156 = vmatpush2.msra.mxu0 0.0
    %3157 = vmatprep.subr.mxu0 0.0
    %3158 = vmatpush2.msra.mxu0 0.0
    %3159 = vmatprep.subr.mxu0 0.0
    %3160 = vmatpush2.msra.mxu0 0.0
    %3161 = vmatprep.subr.mxu0 0.0
    %3162 = vmatpush2.msra.mxu0 0.0
    %3163 = vmatprep.subr.mxu0 0.0
    %3164 = vmatpush2.msra.mxu0 0.0
    %3165 = vmatprep.subr.mxu0 0.0
    %3166 = vmatpush2.msra.mxu0 0.0
    %3167 = vmatprep.subr.mxu0 0.0
    %3168 = vmatpush2.msra.mxu0 0.0
    %3169 = vmatprep.subr.mxu0 0.0
    %3170 = vmatpush2.msra.mxu0 0.0
    %3171 = vmatprep.subr.mxu0 0.0
    %3172 = vmatpush2.msra.mxu0 0.0
    %3173 = vmatprep.subr.mxu0 0.0
    %3174 = vmatpush2.msra.mxu0 0.0
    %3175 = vmatprep.subr.mxu0 0.0
    %3176 = vmatpush2.msra.mxu0 0.0
    %3177 = vmatprep.subr.mxu0 0.0
    %3178 = vmatpush2.msra.mxu0 0.0
    %3179 = vmatprep.subr.mxu0 0.0
    %3180 = vmatpush2.msra.mxu0 0.0
    %3181 = vmatprep.subr.mxu0 0.0
    %3182 = vmatpush2.msra.mxu0 0.0
    %3183 = vmatprep.mubr.f32.mxu0 0.0
    %3184 = vmatmul.mubr.f32.gmra.mxu0 %v3113
    %v3185 = vpop.f32.mrf.mxu0
    %v3186 = vadd.f32 %v3109, %v3185
    %v3187 = vpop.f32.mrf.mxu0
    %3188 = vdwg.mxu0
    %v3189 = vsel %vm3115, %v3186, -inf
    %3190 = vmax.xlane.f32.xlu0 %v3189
    %v3191 = vpop.xlane.xlu0 %3190
    %v3192 = vsub.f32 %v3186, %v3191
    %v3193 = vmul.f32 %v3192, 1.442695
    %v3194 = vpow.pop %v3193
    %v3195 = vsel %vm3115, %v3194, 0.0
    %3196 = vadd.xlane.f32.xlu0 %v3195
    %v3197 = vpop.xlane.xlu0 %3196
    %v3198 = vlog2.pop %v3197
    %v3199 = vmul.f32 %v3198, 0.6931472
    %v3200 = vsub.f32 %v3192, %v3199
    %3201 = vst [vmem:[#allocation2] sm:$0x3] %v3200
    // Predicated region
    $region46: #{tpu_custom_call.1} parent=1 // pred_check
      _
    $region47: #{tpu_custom_call.1} parent=1 // pred_check_branch
      %3203 = sbr.rel (0) target = $region49
    $region48: #{tpu_custom_call.1} parent=1 // pred_region
      %s3205 = ssub.s32 32, 32
      %3206 = vsyncadd [#allocation3], %s3205
      %s3208 = sshll.u32 [#allocation2], 4
      %s3209 = int_to_ptr.vmem [resolvable:$true] %s3208
      %3211 = dma.vmem_to_hbm [thread:$0]  %s3209, 32, %s11, [#allocation3]
    $region49: #{tpu_custom_call.1} parent=1 // pred_fallthru
      _
    // Predicated region
    $region50: #{tpu_custom_call.1} parent=1 // pred_check
      _
    $region51: #{tpu_custom_call.1} parent=1 // pred_check_branch
      %3213 = sbr.rel (0) target = $region53
    $region52: #{tpu_custom_call.1} parent=1 // pred_region
      %3214 = dma.done [#allocation3], 32
    $region53: #{tpu_custom_call.1} parent=1 // pred_fallthru
      _
    %3215 = vsyncpa [#allocation3], 1

</llo_original>
